<compile_context>
chip_gen: v6e
topology: v6e:2x2x1
jax: 0.10.0
libtpu: 0.0.40
codegen_flags: <defaults>
</compile_context>

<pallas_src>
import jax
import jax.numpy as jnp
from jax.experimental import pallas as pl
from jax.experimental.pallas import tpu as pltpu

# Below this many elements per plane, pallas_call launch overhead dominates and
# a single fused XLA elementwise (also 1 read + 1 write) is strictly faster.
_MIN_PALLAS_ELEMS_PER_PLANE = 128 * 1024
# Lane-dense last-dim candidates (multiples of the 128-lane vreg width).
_LANE_CANDIDATES = (1024, 512, 256, 128)


def _planar_relu_kernel(re_ref, im_ref, ore_ref, oim_ref):
    # Pure VPU elementwise max(x, 0) on both float32 planes of one block.
    ore_ref[...] = jnp.maximum(re_ref[...], 0.0)
    oim_ref[...] = jnp.maximum(im_ref[...], 0.0)


def _tune_for_generation():
    """Return (block_rows, vmem_limit_bytes) tuned per TPU generation.

    The pipeline holds 2 inputs + 2 outputs, each double-buffered, so peak
    VMEM is ~8x the per-array block bytes.
      * v5e / v6e (128 MiB physical VMEM): 4 MiB blocks -> ~32 MiB pipeline.
      * v7x (64 MiB VMEM, ~3.2 TB/s HBM): 2 MiB blocks -> ~16 MiB pipeline,
        well under a 40 MiB scoped limit.
    """
    try:
        vmem_cap = pltpu.get_tpu_info().vmem_capacity_bytes
    except Exception:
        vmem_cap = None
    if vmem_cap is not None and vmem_cap >= 96 * 1024 * 1024:
        return 1024, 64 * 1024 * 1024          # v5e / v6e
    return 512, 40 * 1024 * 1024               # v7x or unknown -> conservative


def complex_relu_planar(x_re: jax.Array, x_im: jax.Array):
    """Pallas-backed complex_relu on planar (re, im) float32 activations.

    Returns (relu(x_re), relu(x_im)).  Keeping DeStripe activations planar
    across layers lets this call read and write each plane exactly once.
    """
    assert x_re.shape == x_im.shape, "real/imag planes must have matching shapes"
    x_re = x_re.astype(jnp.float32)
    x_im = x_im.astype(jnp.float32)
    n = x_re.size
    if n == 0:
        return x_re, x_im

    # Largest lane-dense last dim that divides the element count (no padding).
    lane = next((c for c in _LANE_CANDIDATES if n % c == 0), None)

    # Tiny or ragged (not a multiple of 128) tensors: fused XLA already does
    # 1 read + 1 write per plane, with no launch overhead and no pad copy.
    if lane is None or n < _MIN_PALLAS_ELEMS_PER_PLANE:
        return jnp.maximum(x_re, 0.0), jnp.maximum(x_im, 0.0)

    rows = n // lane
    block_rows_max, vmem_limit = _tune_for_generation()
    block_rows = min(block_rows_max, (rows // 8) * 8)
    if pl.cdiv(rows, block_rows) < 2:
        # Keep >= 2 grid steps so v7x's two TensorCores both stream
        # (negligible cost on single-TC v5e/v6e).
        block_rows = max(8, (((rows + 1) // 2) + 7) // 8 * 8)
    grid = (pl.cdiv(rows, block_rows),)

    # Reshape of a contiguous plane is a bitcast -> no extra HBM pass.
    re2d = x_re.reshape(rows, lane)
    im2d = x_im.reshape(rows, lane)

    spec = pl.BlockSpec((block_rows, lane), lambda i: (i, 0))
    out_re, out_im = pl.pallas_call(
        _planar_relu_kernel,
        out_shape=(
            jax.ShapeDtypeStruct((rows, lane), jnp.float32),
            jax.ShapeDtypeStruct((rows, lane), jnp.float32),
        ),
        grid=grid,
        in_specs=[spec, spec],
        out_specs=(spec, spec),
        compiler_params=pltpu.CompilerParams(
            dimension_semantics=("parallel",),
            vmem_limit_bytes=vmem_limit,
        ),
        cost_estimate=pl.CostEstimate(
            flops=2 * n, transcendentals=0, bytes_accessed=16 * n),
    )(re2d, im2d)

    return out_re.reshape(x_re.shape), out_im.reshape(x_im.shape)


def complex_relu(x: jax.Array) -> jax.Array:
    """complex_relu.forward for complex-dtype inputs.

    Mosaic cannot operate on complex dtypes, and converting complex <-> planar
    around a kernel adds two full HBM passes on a bandwidth-bound op, so this
    path uses the fused XLA expression (1 read + 1 write).  Callers that keep
    activations planar should use `complex_relu_planar` (Pallas).
    Note: inputs are cast to complex64, matching the torch cfloat convention.
    """
    assert jnp.issubdtype(x.dtype, jnp.complexfloating), "expects a complex input"
    x = x.astype(jnp.complex64)
    return jax.lax.complex(jnp.maximum(x.real, 0.0), jnp.maximum(x.imag, 0.0))


if __name__ == "__main__":
    key = jax.random.PRNGKey(0)
    k1, k2, k3, k4, k5, k6 = jax.random.split(key, 6)

    # Case 1: planar planes at the module-like small shape (fused fallback path).
    B, C, H, W = 2, 4, 16, 16
    re_s = jax.random.normal(k1, (B, C, H, W), dtype=jnp.float32)
    im_s = jax.random.normal(k2, (B, C, H, W), dtype=jnp.float32)
    yr, yi = complex_relu_planar(re_s, im_s)
    jax.block_until_ready((yr, yi))
    assert yr.shape == re_s.shape and yi.shape == im_s.shape
    assert jnp.allclose(yr, jnp.maximum(re_s, 0.0), atol=1e-6)
    assert jnp.allclose(yi, jnp.maximum(im_s, 0.0), atol=1e-6)

    # Case 2: complex-dtype path (matches the torch module call convention).
    x = jax.lax.complex(re_s, im_s)
    y = jax.block_until_ready(complex_relu(x))
    assert y.shape == x.shape and y.dtype == jnp.complex64
    assert jnp.allclose(y.real, jnp.maximum(re_s, 0.0), atol=1e-6)
    assert jnp.allclose(y.imag, jnp.maximum(im_s, 0.0), atol=1e-6)

    # Case 3: medium planar planes -> exercises the Pallas kernel
    # (lane-dense (rows, 1024) slab, multi-step "parallel" grid).
    re_m = jax.random.normal(k3, (1, 16, 256, 256), dtype=jnp.float32)
    im_m = jax.random.normal(k4, (1, 16, 256, 256), dtype=jnp.float32)
    yr, yi = complex_relu_planar(re_m, im_m)
    jax.block_until_ready((yr, yi))
    assert jnp.allclose(yr, jnp.maximum(re_m, 0.0), atol=1e-6)
    assert jnp.allclose(yi, jnp.maximum(im_m, 0.0), atol=1e-6)

    # Case 4: ragged element count (not a multiple of 128) -> safe fused fallback.
    re_r = jax.random.normal(k5, (3, 5, 7, 11), dtype=jnp.float32)
    im_r = jax.random.normal(k6, (3, 5, 7, 11), dtype=jnp.float32)
    yr, yi = complex_relu_planar(re_r, im_r)
    jax.block_until_ready((yr, yi))
    assert jnp.allclose(yr, jnp.maximum(re_r, 0.0), atol=1e-6)
    assert jnp.allclose(yi, jnp.maximum(im_r, 0.0), atol=1e-6)

    print("KERNEL_OK")
</pallas_src>

<mosaic_0001>
module attributes {stable_mosaic.version = 11 : i64} {
  func.func @_planar_relu_kernel(%arg0: i32, %arg1: memref<512x1024xf32, #tpu.memory_space<vmem>>, %arg2: memref<512x1024xf32, #tpu.memory_space<vmem>>, %arg3: memref<512x1024xf32, #tpu.memory_space<vmem>>, %arg4: memref<512x1024xf32, #tpu.memory_space<vmem>>) attributes {dimension_semantics = [#tpu.dimension_semantics<parallel>], iteration_bounds = array<i64: 2>, scalar_prefetch = 0 : i64, scratch_operands = 0 : i64, tpu.core_type = #tpu.core_type<tc>, window_params = [{transform_indices = @transform_0, window_bounds = array<i64: 512, 1024>}, {transform_indices = @transform_1, window_bounds = array<i64: 512, 1024>}, {transform_indices = @transform_2, window_bounds = array<i64: 512, 1024>}, {transform_indices = @transform_3, window_bounds = array<i64: 512, 1024>}]} {
    %c0 = arith.constant 0 : index
    %c0_0 = arith.constant 0 : index
    %0 = vector.load %arg1[%c0, %c0_0] : memref<512x1024xf32, #tpu.memory_space<vmem>>, vector<512x1024xf32>
    %cst = arith.constant 0.000000e+00 : f32
    %1 = vector.broadcast %cst : f32 to vector<512x1024xf32>
    %2 = arith.maximumf %0, %1 : vector<512x1024xf32>
    %c0_1 = arith.constant 0 : index
    %c0_2 = arith.constant 0 : index
    %3 = vector.load %arg3[%c0_1, %c0_2] : memref<512x1024xf32, #tpu.memory_space<vmem>>, vector<512x1024xf32>
    tpu.vector_store %arg3[%c0_1, %c0_2], %2 {strides = array<i32>} : memref<512x1024xf32, #tpu.memory_space<vmem>>, vector<512x1024xf32>,
    %c0_3 = arith.constant 0 : index
    %c0_4 = arith.constant 0 : index
    %4 = vector.load %arg2[%c0_3, %c0_4] : memref<512x1024xf32, #tpu.memory_space<vmem>>, vector<512x1024xf32>
    %cst_5 = arith.constant 0.000000e+00 : f32
    %5 = vector.broadcast %cst_5 : f32 to vector<512x1024xf32>
    %6 = arith.maximumf %4, %5 : vector<512x1024xf32>
    %c0_6 = arith.constant 0 : index
    %c0_7 = arith.constant 0 : index
    %7 = vector.load %arg4[%c0_6, %c0_7] : memref<512x1024xf32, #tpu.memory_space<vmem>>, vector<512x1024xf32>
    tpu.vector_store %arg4[%c0_6, %c0_7], %6 {strides = array<i32>} : memref<512x1024xf32, #tpu.memory_space<vmem>>, vector<512x1024xf32>,
    return
  }
  func.func @transform_0(%arg0: i32) -> (i32, i32) {
    %c0_i32 = arith.constant 0 : i32
    %c0_i32_0 = arith.constant 0 : i32
    return %arg0, %c0_i32 : i32, i32
  }
  func.func @transform_1(%arg0: i32) -> (i32, i32) {
    %c0_i32 = arith.constant 0 : i32
    %c0_i32_0 = arith.constant 0 : i32
    return %arg0, %c0_i32 : i32, i32
  }
  func.func @transform_2(%arg0: i32) -> (i32, i32) {
    %c0_i32 = arith.constant 0 : i32
    %c0_i32_0 = arith.constant 0 : i32
    return %arg0, %c0_i32 : i32, i32
  }
  func.func @transform_3(%arg0: i32) -> (i32, i32) {
    %c0_i32 = arith.constant 0 : i32
    %c0_i32_0 = arith.constant 0 : i32
    return %arg0, %c0_i32 : i32, i32
  }
}

</mosaic_0001>

<llo_original>
// kernel: tpu_custom_call.1
$region0: #{tpu_custom_call.1}
  #allocation0 [shape = 'u32[]', space=smem, size = 0x4, offset = 0x4, fixed_abs, tag = 'smem constant byte address 0x4 - core index']
  #allocation1 [shape = 'u32[144,128]{1,0:T(1,128)}', space=vmem, size = 0x12000, scoped, tag = 'internal scratch']
  %s0 = inlined_call_operand.hbm [shape: f32[1024,1024], index: 0, kind: input, shape index: {}]
  %s1 = inlined_call_operand.hbm [shape: f32[1024,1024], index: 1, kind: input, shape index: {}]
  %s2 = inlined_call_operand.hbm [shape: f32[1024,1024], index: 2, kind: output, shape index: {0}]
  %s3 = inlined_call_operand.hbm [shape: f32[1024,1024], index: 3, kind: output, shape index: {1}]
  %4 = xla_tuple %s2, %s3
  %s5 = sld [smem:[#allocation0]]
  $region57: #{tpu_custom_call.1} parent=0
    _
  %s7 = ssub.s32 1, %s5
  %s8 = scalar_select 0, %s7, %s5
  $region1: #{tpu_custom_call.1} parent=0
    #allocation2 [shape = 'u8[4194304]{0}', space=vmem, size = 0x400000, scoped, tag = 'input window, operand 0']
    #allocation3 [shape = 's32[2]{0}', space=sflag, size = 0x8, scoped, tag = 'scoped memory for tpu_custom_call.1']
    #allocation4 [shape = 's32[2]{0}', space=sflag, size = 0x8, scoped, tag = 'scoped memory for tpu_custom_call.1']
    #allocation5 [shape = 'u8[4194304]{0}', space=vmem, size = 0x400000, scoped, tag = 'input window, operand 1']
    #allocation6 [shape = 's32[2]{0}', space=sflag, size = 0x8, scoped, tag = 'scoped memory for tpu_custom_call.1']
    #allocation7 [shape = 'u8[4194304]{0}', space=vmem, size = 0x400000, scoped, tag = 'output window, operand 0']
    #allocation8 [shape = 'u8[4194304]{0}', space=vmem, size = 0x400000, scoped, tag = 'output window, operand 1']
    #allocation9 [shape = 's32[2]{0}', space=sflag, size = 0x8, scoped, tag = 'scoped memory for tpu_custom_call.1']
    %9 = vsyncpa [#allocation3], 0
    %s10 = scalar_lea.sflag [#allocation3], 1
    %11 = vsyncpa %s10, 0
    %12 = vsyncpa [#allocation6], 0
    %s13 = scalar_lea.sflag [#allocation6], 1
    %14 = vsyncpa %s13, 0
    %15 = vsyncpa [#allocation4], 0
    %s16 = scalar_lea.sflag [#allocation4], 1
    %17 = vsyncpa %s16, 0
    %18 = vsyncpa [#allocation9], 0
    %s19 = scalar_lea.sflag [#allocation9], 1
    %20 = vsyncpa %s19, 0
    loop: start=0, step=1, limit=4
    $region2: #{tpu_custom_call.1} parent=1 // loop_pre_header
      _
    $region3: #{tpu_custom_call.1} parent=1 // loop_header
      %s22 = sphi 0, %s26
      %p23 = scmp.ge.s32.totalorder %s22, 4
      %s32 = sphi 0, %s34
      %s35 = sphi 0, %s32
      %s36 = sphi 0, %s35
      %s52 = sphi 0, %s36
      %s58 = sphi 0, %s60
      %s61 = sphi 0, %s58
      %s62 = sphi 0, %s61
      %s78 = sphi 0, %s62
      %s84 = sphi 0, %s86
      %s87 = sphi 0, %s84
      %s88 = sphi 0, %s87
      %s104 = sphi 0, %s88
      %s110 = sphi 0, %s112
      %s113 = sphi 0, %s110
      %s114 = sphi 0, %s113
      %s130 = sphi 0, %s114
    $region4: #{tpu_custom_call.1} parent=1 // loop_header_branch
      %25 = sbr.rel (%p23) target = $region8
    $region5: #{tpu_custom_call.1} parent=1 // loop_body
      %s27 = ssub.s32 %s22, 1
      %s28 = ssub.s32 %s22, 2
      %s29 = sadd.s32 %s22, 1
      %s30 = ssub.s32 %s22, %s29
      %p31 = scmp.eq.s32.totalorder %s30, 0
      %s33 = sadd.s32 %s32, 1
      %s34 = scalar_select %p31, %s32, %s33
      %p37 = pneg %p31
      %p38 = scmp.eq.s32.totalorder %s22, 1
      %p39 = por %p37, %p38
      %p40 = scmp.ne.s32.totalorder %s32, %s35
      %p41 = scmp.eq.s32.totalorder %s22, 0
      %p42 = por %p40, %p41
      %p43 = scmp.ne.s32.totalorder %s32, %s35
      %p44 = scmp.eq.s32.totalorder %s27, 1
      %p45 = por %p43, %p44
      %p46 = scmp.ne.s32.totalorder %s35, %s36
      %p47 = scmp.eq.s32.totalorder %s27, 0
      %p48 = por %p46, %p47
      %p49 = scmp.ne.s32.totalorder %s35, %s36
      %p50 = scmp.eq.s32.totalorder %s28, 1
      %p51 = por %p49, %p50
      %p53 = scmp.ne.s32.totalorder %s36, %s52
      %p54 = scmp.eq.s32.totalorder %s28, 0
      %p55 = por %p53, %p54
      %s56 = ssub.s32 %s22, %s29
      %p57 = scmp.eq.s32.totalorder %s56, 0
      %s59 = sadd.s32 %s58, 1
      %s60 = scalar_select %p57, %s58, %s59
      %p63 = pneg %p57
      %p64 = scmp.eq.s32.totalorder %s22, 1
      %p65 = por %p63, %p64
      %p66 = scmp.ne.s32.totalorder %s58, %s61
      %p67 = scmp.eq.s32.totalorder %s22, 0
      %p68 = por %p66, %p67
      %p69 = scmp.ne.s32.totalorder %s58, %s61
      %p70 = scmp.eq.s32.totalorder %s27, 1
      %p71 = por %p69, %p70
      %p72 = scmp.ne.s32.totalorder %s61, %s62
      %p73 = scmp.eq.s32.totalorder %s27, 0
      %p74 = por %p72, %p73
      %p75 = scmp.ne.s32.totalorder %s61, %s62
      %p76 = scmp.eq.s32.totalorder %s28, 1
      %p77 = por %p75, %p76
      %p79 = scmp.ne.s32.totalorder %s62, %s78
      %p80 = scmp.eq.s32.totalorder %s28, 0
      %p81 = por %p79, %p80
      %s82 = ssub.s32 %s22, %s29
      %p83 = scmp.eq.s32.totalorder %s82, 0
      %s85 = sadd.s32 %s84, 1
      %s86 = scalar_select %p83, %s84, %s85
      %p89 = pneg %p83
      %p90 = scmp.eq.s32.totalorder %s22, 1
      %p91 = por %p89, %p90
      %p92 = scmp.ne.s32.totalorder %s84, %s87
      %p93 = scmp.eq.s32.totalorder %s22, 0
      %p94 = por %p92, %p93
      %p95 = scmp.ne.s32.totalorder %s84, %s87
      %p96 = scmp.eq.s32.totalorder %s27, 1
      %p97 = por %p95, %p96
      %p98 = scmp.ne.s32.totalorder %s87, %s88
      %p99 = scmp.eq.s32.totalorder %s27, 0
      %p100 = por %p98, %p99
      %p101 = scmp.ne.s32.totalorder %s87, %s88
      %p102 = scmp.eq.s32.totalorder %s28, 1
      %p103 = por %p101, %p102
      %p105 = scmp.ne.s32.totalorder %s88, %s104
      %p106 = scmp.eq.s32.totalorder %s28, 0
      %p107 = por %p105, %p106
      %s108 = ssub.s32 %s22, %s29
      %p109 = scmp.eq.s32.totalorder %s108, 0
      %s111 = sadd.s32 %s110, 1
      %s112 = scalar_select %p109, %s110, %s111
      %p115 = pneg %p109
      %p116 = scmp.eq.s32.totalorder %s22, 1
      %p117 = por %p115, %p116
      %p118 = scmp.ne.s32.totalorder %s110, %s113
      %p119 = scmp.eq.s32.totalorder %s22, 0
      %p120 = por %p118, %p119
      %p121 = scmp.ne.s32.totalorder %s110, %s113
      %p122 = scmp.eq.s32.totalorder %s27, 1
      %p123 = por %p121, %p122
      %p124 = scmp.ne.s32.totalorder %s113, %s114
      %p125 = scmp.eq.s32.totalorder %s27, 0
      %p126 = por %p124, %p125
      %p127 = scmp.ne.s32.totalorder %s113, %s114
      %p128 = scmp.eq.s32.totalorder %s28, 1
      %p129 = por %p127, %p128
      %p131 = scmp.ne.s32.totalorder %s114, %s130
      %p132 = scmp.eq.s32.totalorder %s28, 0
      %p133 = por %p131, %p132
      %p134 = scmp.le.s32.totalorder 1, %s22
      %p135 = scmp.lt.s32.totalorder %s22, 3
      %p136 = pnand %p134, %p135
      %p137 = pneg %p136
      // Predicated region
      $region9: #{tpu_custom_call.1} parent=5 // pred_check
        _
      $region10: #{tpu_custom_call.1} parent=5 // pred_check_branch
        %139 = sbr.rel (%p136) target = $region12
      $region11: #{tpu_custom_call.1} parent=5 // pred_region
        %s140 = ssub.s32 %s22, 1
      $region12: #{tpu_custom_call.1} parent=5 // pred_fallthru
        _
      %p141 = scmp.lt.s32.totalorder %s22, 2
      // Predicated region
      $region13: #{tpu_custom_call.1} parent=5 // pred_check
        %p142 = pneg %p141
      $region14: #{tpu_custom_call.1} parent=5 // pred_check_branch
        %144 = sbr.rel (%p142) target = $region16
      $region15: #{tpu_custom_call.1} parent=5 // pred_region
        // Predicated region
        $region17: #{tpu_custom_call.1} parent=15 // pred_check
          %p145 = pneg %p42
        $region18: #{tpu_custom_call.1} parent=15 // pred_check_branch
          %147 = sbr.rel (%p145) target = $region20
        $region19: #{tpu_custom_call.1} parent=15 // pred_region
          %s148 = sand.u32 %s32, 1
          %s149 = scalar_lea.sflag [#allocation3], %s148
          %s150 = sand.u32 %s32, 1
          %s151 = smul.addr %s150, 4096
          %s152 = scalar_lea.vmem [#allocation2], %s151
          %s153 = smul.u32 64, %s22
          %s155 = ssub.s32 65536, 65536
          %156 = vsyncadd %s149, %s155
          %s157 = smul.addr %s153, 8
          %s158 = smul.addr %s157, 128
          %s159 = scalar_lea.hbm %s0, %s158
          %s160 = sshll.u32 %s152, 4
          %s161 = int_to_ptr.vmem [resolvable:$true] %s160
          %166 = dma.hbm_to_vmem [thread:$0]  %s159, 65536, %s161, %s149, 1024, 1024, 64
        $region20: #{tpu_custom_call.1} parent=15 // pred_fallthru
          _
        // Predicated region
        $region21: #{tpu_custom_call.1} parent=15 // pred_check
          %p167 = pneg %p68
        $region22: #{tpu_custom_call.1} parent=15 // pred_check_branch
          %169 = sbr.rel (%p167) target = $region24
        $region23: #{tpu_custom_call.1} parent=15 // pred_region
          %s170 = sand.u32 %s58, 1
          %s171 = scalar_lea.sflag [#allocation6], %s170
          %s172 = sand.u32 %s58, 1
          %s173 = smul.addr %s172, 4096
          %s174 = scalar_lea.vmem [#allocation5], %s173
          %s175 = smul.u32 64, %s22
          %s177 = ssub.s32 65536, 65536
          %178 = vsyncadd %s171, %s177
          %s179 = smul.addr %s175, 8
          %s180 = smul.addr %s179, 128
          %s181 = scalar_lea.hbm %s1, %s180
          %s182 = sshll.u32 %s174, 4
          %s183 = int_to_ptr.vmem [resolvable:$true] %s182
          %188 = dma.hbm_to_vmem [thread:$0]  %s181, 65536, %s183, %s171, 1024, 1024, 64
        $region24: #{tpu_custom_call.1} parent=15 // pred_fallthru
          _
      $region16: #{tpu_custom_call.1} parent=5 // pred_fallthru
        _
      %p189 = scmp.le.s32.totalorder 1, %s22
      %p190 = scmp.lt.s32.totalorder %s22, 3
      %p191 = pnand %p189, %p190
      %p192 = pneg %p191
      // Predicated region
      $region25: #{tpu_custom_call.1} parent=5 // pred_check
        _
      $region26: #{tpu_custom_call.1} parent=5 // pred_check_branch
        %194 = sbr.rel (%p191) target = $region28
      $region27: #{tpu_custom_call.1} parent=5 // pred_region
        %s195 = ssub.s32 %s22, 1
        %s196 = sand.u32 %s35, 1
        %s197 = scalar_lea.sflag [#allocation3], %s196
        %s198 = sand.u32 %s35, 1
        %s199 = smul.addr %s198, 4096
        %s200 = scalar_lea.vmem [#allocation2], %s199
        // Predicated region
        $region29: #{tpu_custom_call.1} parent=27 // pred_check
          %p201 = pneg %p48
        $region30: #{tpu_custom_call.1} parent=27 // pred_check_branch
          %203 = sbr.rel (%p201) target = $region32
        $region31: #{tpu_custom_call.1} parent=27 // pred_region
          %204 = dma.done %s197, 65536
        $region32: #{tpu_custom_call.1} parent=27 // pred_fallthru
          _
        %s205 = sand.u32 %s61, 1
        %s206 = scalar_lea.sflag [#allocation6], %s205
        %s207 = sand.u32 %s61, 1
        %s208 = smul.addr %s207, 4096
        %s209 = scalar_lea.vmem [#allocation5], %s208
        // Predicated region
        $region33: #{tpu_custom_call.1} parent=27 // pred_check
          %p210 = pneg %p74
        $region34: #{tpu_custom_call.1} parent=27 // pred_check_branch
          %212 = sbr.rel (%p210) target = $region36
        $region35: #{tpu_custom_call.1} parent=27 // pred_region
          %213 = dma.done %s206, 65536
        $region36: #{tpu_custom_call.1} parent=27 // pred_fallthru
          _
        %s214 = sand.u32 %s35, 1
        %s215 = scalar_lea.sflag [#allocation3], %s214
        %s216 = sand.u32 %s35, 1
        %s217 = smul.addr %s216, 4096
        %s218 = scalar_lea.vmem [#allocation2], %s217
        %p219 = pneg %p48
        %p220 = pneg %p45
        %s221 = sand.u32 %s61, 1
        %s222 = scalar_lea.sflag [#allocation6], %s221
        %s223 = sand.u32 %s61, 1
        %s224 = smul.addr %s223, 4096
        %s225 = scalar_lea.vmem [#allocation5], %s224
        %p226 = pneg %p74
        %p227 = pneg %p71
        %p228 = pneg %p100
        %p229 = pneg %p97
        %s230 = sand.u32 %s87, 1
        %s231 = scalar_lea.sflag [#allocation4], %s230
        %s232 = sand.u32 %s87, 1
        %s233 = smul.addr %s232, 4096
        %s234 = scalar_lea.vmem [#allocation7], %s233
        %p235 = pneg %p126
        %p236 = pneg %p123
        %s237 = sand.u32 %s113, 1
        %s238 = scalar_lea.sflag [#allocation9], %s237
        %s239 = sand.u32 %s113, 1
        %s240 = smul.addr %s239, 4096
        %s241 = scalar_lea.vmem [#allocation8], %s240
        %s242 = smul.u32 64, %s27
        %s243 = smul.u32 64, %s27
        %s244 = smul.u32 64, %s27
        %s245 = smul.u32 64, %s27
        %v246 = vld [vmem:[%s200] sm:$0xff]
        %v247 = vld [vmem:[%s200 + $0x8] sm:$0xff]
        %v248 = vld [vmem:[%s200 + $0x10] sm:$0xff]
        %v249 = vld [vmem:[%s200 + $0x18] sm:$0xff]
        %v250 = vld [vmem:[%s200 + $0x20] sm:$0xff]
        %v251 = vld [vmem:[%s200 + $0x28] sm:$0xff]
        %v252 = vld [vmem:[%s200 + $0x30] sm:$0xff]
        %v253 = vld [vmem:[%s200 + $0x38] sm:$0xff]
        %v254 = vld [vmem:[%s200 + $0x40] sm:$0xff]
        %v255 = vld [vmem:[%s200 + $0x48] sm:$0xff]
        %v256 = vld [vmem:[%s200 + $0x50] sm:$0xff]
        %v257 = vld [vmem:[%s200 + $0x58] sm:$0xff]
        %v258 = vld [vmem:[%s200 + $0x60] sm:$0xff]
        %v259 = vld [vmem:[%s200 + $0x68] sm:$0xff]
        %v260 = vld [vmem:[%s200 + $0x70] sm:$0xff]
        %v261 = vld [vmem:[%s200 + $0x78] sm:$0xff]
        %v262 = vld [vmem:[%s200 + $0x80] sm:$0xff]
        %v263 = vld [vmem:[%s200 + $0x88] sm:$0xff]
        %v264 = vld [vmem:[%s200 + $0x90] sm:$0xff]
        %v265 = vld [vmem:[%s200 + $0x98] sm:$0xff]
        %v266 = vld [vmem:[%s200 + $0xa0] sm:$0xff]
        %v267 = vld [vmem:[%s200 + $0xa8] sm:$0xff]
        %v268 = vld [vmem:[%s200 + $0xb0] sm:$0xff]
        %v269 = vld [vmem:[%s200 + $0xb8] sm:$0xff]
        %v270 = vld [vmem:[%s200 + $0xc0] sm:$0xff]
        %v271 = vld [vmem:[%s200 + $0xc8] sm:$0xff]
        %v272 = vld [vmem:[%s200 + $0xd0] sm:$0xff]
        %v273 = vld [vmem:[%s200 + $0xd8] sm:$0xff]
        %v274 = vld [vmem:[%s200 + $0xe0] sm:$0xff]
        %v275 = vld [vmem:[%s200 + $0xe8] sm:$0xff]
        %v276 = vld [vmem:[%s200 + $0xf0] sm:$0xff]
        %v277 = vld [vmem:[%s200 + $0xf8] sm:$0xff]
        %v278 = vld [vmem:[%s200 + $0x100] sm:$0xff]
        %v279 = vld [vmem:[%s200 + $0x108] sm:$0xff]
        %v280 = vld [vmem:[%s200 + $0x110] sm:$0xff]
        %v281 = vld [vmem:[%s200 + $0x118] sm:$0xff]
        %v282 = vld [vmem:[%s200 + $0x120] sm:$0xff]
        %v283 = vld [vmem:[%s200 + $0x128] sm:$0xff]
        %v284 = vld [vmem:[%s200 + $0x130] sm:$0xff]
        %v285 = vld [vmem:[%s200 + $0x138] sm:$0xff]
        %v286 = vld [vmem:[%s200 + $0x140] sm:$0xff]
        %v287 = vld [vmem:[%s200 + $0x148] sm:$0xff]
        %v288 = vld [vmem:[%s200 + $0x150] sm:$0xff]
        %v289 = vld [vmem:[%s200 + $0x158] sm:$0xff]
        %v290 = vld [vmem:[%s200 + $0x160] sm:$0xff]
        %v291 = vld [vmem:[%s200 + $0x168] sm:$0xff]
        %v292 = vld [vmem:[%s200 + $0x170] sm:$0xff]
        %v293 = vld [vmem:[%s200 + $0x178] sm:$0xff]
        %v294 = vld [vmem:[%s200 + $0x180] sm:$0xff]
        %v295 = vld [vmem:[%s200 + $0x188] sm:$0xff]
        %v296 = vld [vmem:[%s200 + $0x190] sm:$0xff]
        %v297 = vld [vmem:[%s200 + $0x198] sm:$0xff]
        %v298 = vld [vmem:[%s200 + $0x1a0] sm:$0xff]
        %v299 = vld [vmem:[%s200 + $0x1a8] sm:$0xff]
        %v300 = vld [vmem:[%s200 + $0x1b0] sm:$0xff]
        %v301 = vld [vmem:[%s200 + $0x1b8] sm:$0xff]
        %v302 = vld [vmem:[%s200 + $0x1c0] sm:$0xff]
        %v303 = vld [vmem:[%s200 + $0x1c8] sm:$0xff]
        %v304 = vld [vmem:[%s200 + $0x1d0] sm:$0xff]
        %v305 = vld [vmem:[%s200 + $0x1d8] sm:$0xff]
        %v306 = vld [vmem:[%s200 + $0x1e0] sm:$0xff]
        %v307 = vld [vmem:[%s200 + $0x1e8] sm:$0xff]
        %v308 = vld [vmem:[%s200 + $0x1f0] sm:$0xff]
        %v309 = vld [vmem:[%s200 + $0x1f8] sm:$0xff]
        %v310 = vld [vmem:[%s200 + $0x200] sm:$0xff]
        %v311 = vld [vmem:[%s200 + $0x208] sm:$0xff]
        %v312 = vld [vmem:[%s200 + $0x210] sm:$0xff]
        %v313 = vld [vmem:[%s200 + $0x218] sm:$0xff]
        %v314 = vld [vmem:[%s200 + $0x220] sm:$0xff]
        %v315 = vld [vmem:[%s200 + $0x228] sm:$0xff]
        %v316 = vld [vmem:[%s200 + $0x230] sm:$0xff]
        %v317 = vld [vmem:[%s200 + $0x238] sm:$0xff]
        %v318 = vld [vmem:[%s200 + $0x240] sm:$0xff]
        %v319 = vld [vmem:[%s200 + $0x248] sm:$0xff]
        %v320 = vld [vmem:[%s200 + $0x250] sm:$0xff]
        %v321 = vld [vmem:[%s200 + $0x258] sm:$0xff]
        %v322 = vld [vmem:[%s200 + $0x260] sm:$0xff]
        %v323 = vld [vmem:[%s200 + $0x268] sm:$0xff]
        %v324 = vld [vmem:[%s200 + $0x270] sm:$0xff]
        %v325 = vld [vmem:[%s200 + $0x278] sm:$0xff]
        %v326 = vld [vmem:[%s200 + $0x280] sm:$0xff]
        %v327 = vld [vmem:[%s200 + $0x288] sm:$0xff]
        %v328 = vld [vmem:[%s200 + $0x290] sm:$0xff]
        %v329 = vld [vmem:[%s200 + $0x298] sm:$0xff]
        %v330 = vld [vmem:[%s200 + $0x2a0] sm:$0xff]
        %v331 = vld [vmem:[%s200 + $0x2a8] sm:$0xff]
        %v332 = vld [vmem:[%s200 + $0x2b0] sm:$0xff]
        %v333 = vld [vmem:[%s200 + $0x2b8] sm:$0xff]
        %v334 = vld [vmem:[%s200 + $0x2c0] sm:$0xff]
        %v335 = vld [vmem:[%s200 + $0x2c8] sm:$0xff]
        %v336 = vld [vmem:[%s200 + $0x2d0] sm:$0xff]
        %v337 = vld [vmem:[%s200 + $0x2d8] sm:$0xff]
        %v338 = vld [vmem:[%s200 + $0x2e0] sm:$0xff]
        %v339 = vld [vmem:[%s200 + $0x2e8] sm:$0xff]
        %v340 = vld [vmem:[%s200 + $0x2f0] sm:$0xff]
        %v341 = vld [vmem:[%s200 + $0x2f8] sm:$0xff]
        %v342 = vld [vmem:[%s200 + $0x300] sm:$0xff]
        %v343 = vld [vmem:[%s200 + $0x308] sm:$0xff]
        %v344 = vld [vmem:[%s200 + $0x310] sm:$0xff]
        %v345 = vld [vmem:[%s200 + $0x318] sm:$0xff]
        %v346 = vld [vmem:[%s200 + $0x320] sm:$0xff]
        %v347 = vld [vmem:[%s200 + $0x328] sm:$0xff]
        %v348 = vld [vmem:[%s200 + $0x330] sm:$0xff]
        %v349 = vld [vmem:[%s200 + $0x338] sm:$0xff]
        %v350 = vld [vmem:[%s200 + $0x340] sm:$0xff]
        %v351 = vld [vmem:[%s200 + $0x348] sm:$0xff]
        %v352 = vld [vmem:[%s200 + $0x350] sm:$0xff]
        %v353 = vld [vmem:[%s200 + $0x358] sm:$0xff]
        %v354 = vld [vmem:[%s200 + $0x360] sm:$0xff]
        %v355 = vld [vmem:[%s200 + $0x368] sm:$0xff]
        %v356 = vld [vmem:[%s200 + $0x370] sm:$0xff]
        %v357 = vld [vmem:[%s200 + $0x378] sm:$0xff]
        %v358 = vld [vmem:[%s200 + $0x380] sm:$0xff]
        %v359 = vld [vmem:[%s200 + $0x388] sm:$0xff]
        %v360 = vld [vmem:[%s200 + $0x390] sm:$0xff]
        %v361 = vld [vmem:[%s200 + $0x398] sm:$0xff]
        %v362 = vld [vmem:[%s200 + $0x3a0] sm:$0xff]
        %v363 = vld [vmem:[%s200 + $0x3a8] sm:$0xff]
        %v364 = vld [vmem:[%s200 + $0x3b0] sm:$0xff]
        %v365 = vld [vmem:[%s200 + $0x3b8] sm:$0xff]
        %v366 = vld [vmem:[%s200 + $0x3c0] sm:$0xff]
        %v367 = vld [vmem:[%s200 + $0x3c8] sm:$0xff]
        %v368 = vld [vmem:[%s200 + $0x3d0] sm:$0xff]
        %v369 = vld [vmem:[%s200 + $0x3d8] sm:$0xff]
        %v370 = vld [vmem:[%s200 + $0x3e0] sm:$0xff]
        %v371 = vld [vmem:[%s200 + $0x3e8] sm:$0xff]
        %v372 = vld [vmem:[%s200 + $0x3f0] sm:$0xff]
        %v373 = vld [vmem:[%s200 + $0x3f8] sm:$0xff]
        %v374 = vld [vmem:[%s200 + $0x400] sm:$0xff]
        %v375 = vld [vmem:[%s200 + $0x408] sm:$0xff]
        %v376 = vld [vmem:[%s200 + $0x410] sm:$0xff]
        %v377 = vld [vmem:[%s200 + $0x418] sm:$0xff]
        %v378 = vld [vmem:[%s200 + $0x420] sm:$0xff]
        %v379 = vld [vmem:[%s200 + $0x428] sm:$0xff]
        %v380 = vld [vmem:[%s200 + $0x430] sm:$0xff]
        %v381 = vld [vmem:[%s200 + $0x438] sm:$0xff]
        %v382 = vld [vmem:[%s200 + $0x440] sm:$0xff]
        %v383 = vld [vmem:[%s200 + $0x448] sm:$0xff]
        %v384 = vld [vmem:[%s200 + $0x450] sm:$0xff]
        %v385 = vld [vmem:[%s200 + $0x458] sm:$0xff]
        %v386 = vld [vmem:[%s200 + $0x460] sm:$0xff]
        %v387 = vld [vmem:[%s200 + $0x468] sm:$0xff]
        %v388 = vld [vmem:[%s200 + $0x470] sm:$0xff]
        %v389 = vld [vmem:[%s200 + $0x478] sm:$0xff]
        %v390 = vld [vmem:[%s200 + $0x480] sm:$0xff]
        %v391 = vld [vmem:[%s200 + $0x488] sm:$0xff]
        %v392 = vld [vmem:[%s200 + $0x490] sm:$0xff]
        %v393 = vld [vmem:[%s200 + $0x498] sm:$0xff]
        %v394 = vld [vmem:[%s200 + $0x4a0] sm:$0xff]
        %v395 = vld [vmem:[%s200 + $0x4a8] sm:$0xff]
        %v396 = vld [vmem:[%s200 + $0x4b0] sm:$0xff]
        %v397 = vld [vmem:[%s200 + $0x4b8] sm:$0xff]
        %v398 = vld [vmem:[%s200 + $0x4c0] sm:$0xff]
        %v399 = vld [vmem:[%s200 + $0x4c8] sm:$0xff]
        %v400 = vld [vmem:[%s200 + $0x4d0] sm:$0xff]
        %v401 = vld [vmem:[%s200 + $0x4d8] sm:$0xff]
        %v402 = vld [vmem:[%s200 + $0x4e0] sm:$0xff]
        %v403 = vld [vmem:[%s200 + $0x4e8] sm:$0xff]
        %v404 = vld [vmem:[%s200 + $0x4f0] sm:$0xff]
        %v405 = vld [vmem:[%s200 + $0x4f8] sm:$0xff]
        %v406 = vld [vmem:[%s200 + $0x500] sm:$0xff]
        %v407 = vld [vmem:[%s200 + $0x508] sm:$0xff]
        %v408 = vld [vmem:[%s200 + $0x510] sm:$0xff]
        %v409 = vld [vmem:[%s200 + $0x518] sm:$0xff]
        %v410 = vld [vmem:[%s200 + $0x520] sm:$0xff]
        %v411 = vld [vmem:[%s200 + $0x528] sm:$0xff]
        %v412 = vld [vmem:[%s200 + $0x530] sm:$0xff]
        %v413 = vld [vmem:[%s200 + $0x538] sm:$0xff]
        %v414 = vld [vmem:[%s200 + $0x540] sm:$0xff]
        %v415 = vld [vmem:[%s200 + $0x548] sm:$0xff]
        %v416 = vld [vmem:[%s200 + $0x550] sm:$0xff]
        %v417 = vld [vmem:[%s200 + $0x558] sm:$0xff]
        %v418 = vld [vmem:[%s200 + $0x560] sm:$0xff]
        %v419 = vld [vmem:[%s200 + $0x568] sm:$0xff]
        %v420 = vld [vmem:[%s200 + $0x570] sm:$0xff]
        %v421 = vld [vmem:[%s200 + $0x578] sm:$0xff]
        %v422 = vld [vmem:[%s200 + $0x580] sm:$0xff]
        %v423 = vld [vmem:[%s200 + $0x588] sm:$0xff]
        %v424 = vld [vmem:[%s200 + $0x590] sm:$0xff]
        %v425 = vld [vmem:[%s200 + $0x598] sm:$0xff]
        %v426 = vld [vmem:[%s200 + $0x5a0] sm:$0xff]
        %v427 = vld [vmem:[%s200 + $0x5a8] sm:$0xff]
        %v428 = vld [vmem:[%s200 + $0x5b0] sm:$0xff]
        %v429 = vld [vmem:[%s200 + $0x5b8] sm:$0xff]
        %v430 = vld [vmem:[%s200 + $0x5c0] sm:$0xff]
        %v431 = vld [vmem:[%s200 + $0x5c8] sm:$0xff]
        %v432 = vld [vmem:[%s200 + $0x5d0] sm:$0xff]
        %v433 = vld [vmem:[%s200 + $0x5d8] sm:$0xff]
        %v434 = vld [vmem:[%s200 + $0x5e0] sm:$0xff]
        %v435 = vld [vmem:[%s200 + $0x5e8] sm:$0xff]
        %v436 = vld [vmem:[%s200 + $0x5f0] sm:$0xff]
        %v437 = vld [vmem:[%s200 + $0x5f8] sm:$0xff]
        %v438 = vld [vmem:[%s200 + $0x600] sm:$0xff]
        %v439 = vld [vmem:[%s200 + $0x608] sm:$0xff]
        %v440 = vld [vmem:[%s200 + $0x610] sm:$0xff]
        %v441 = vld [vmem:[%s200 + $0x618] sm:$0xff]
        %v442 = vld [vmem:[%s200 + $0x620] sm:$0xff]
        %v443 = vld [vmem:[%s200 + $0x628] sm:$0xff]
        %v444 = vld [vmem:[%s200 + $0x630] sm:$0xff]
        %v445 = vld [vmem:[%s200 + $0x638] sm:$0xff]
        %v446 = vld [vmem:[%s200 + $0x640] sm:$0xff]
        %v447 = vld [vmem:[%s200 + $0x648] sm:$0xff]
        %v448 = vld [vmem:[%s200 + $0x650] sm:$0xff]
        %v449 = vld [vmem:[%s200 + $0x658] sm:$0xff]
        %v450 = vld [vmem:[%s200 + $0x660] sm:$0xff]
        %v451 = vld [vmem:[%s200 + $0x668] sm:$0xff]
        %v452 = vld [vmem:[%s200 + $0x670] sm:$0xff]
        %v453 = vld [vmem:[%s200 + $0x678] sm:$0xff]
        %v454 = vld [vmem:[%s200 + $0x680] sm:$0xff]
        %v455 = vld [vmem:[%s200 + $0x688] sm:$0xff]
        %v456 = vld [vmem:[%s200 + $0x690] sm:$0xff]
        %v457 = vld [vmem:[%s200 + $0x698] sm:$0xff]
        %v458 = vld [vmem:[%s200 + $0x6a0] sm:$0xff]
        %v459 = vld [vmem:[%s200 + $0x6a8] sm:$0xff]
        %v460 = vld [vmem:[%s200 + $0x6b0] sm:$0xff]
        %v461 = vld [vmem:[%s200 + $0x6b8] sm:$0xff]
        %v462 = vld [vmem:[%s200 + $0x6c0] sm:$0xff]
        %v463 = vld [vmem:[%s200 + $0x6c8] sm:$0xff]
        %v464 = vld [vmem:[%s200 + $0x6d0] sm:$0xff]
        %v465 = vld [vmem:[%s200 + $0x6d8] sm:$0xff]
        %v466 = vld [vmem:[%s200 + $0x6e0] sm:$0xff]
        %v467 = vld [vmem:[%s200 + $0x6e8] sm:$0xff]
        %v468 = vld [vmem:[%s200 + $0x6f0] sm:$0xff]
        %v469 = vld [vmem:[%s200 + $0x6f8] sm:$0xff]
        %v470 = vld [vmem:[%s200 + $0x700] sm:$0xff]
        %v471 = vld [vmem:[%s200 + $0x708] sm:$0xff]
        %v472 = vld [vmem:[%s200 + $0x710] sm:$0xff]
        %v473 = vld [vmem:[%s200 + $0x718] sm:$0xff]
        %v474 = vld [vmem:[%s200 + $0x720] sm:$0xff]
        %v475 = vld [vmem:[%s200 + $0x728] sm:$0xff]
        %v476 = vld [vmem:[%s200 + $0x730] sm:$0xff]
        %v477 = vld [vmem:[%s200 + $0x738] sm:$0xff]
        %v478 = vld [vmem:[%s200 + $0x740] sm:$0xff]
        %v479 = vld [vmem:[%s200 + $0x748] sm:$0xff]
        %v480 = vld [vmem:[%s200 + $0x750] sm:$0xff]
        %v481 = vld [vmem:[%s200 + $0x758] sm:$0xff]
        %v482 = vld [vmem:[%s200 + $0x760] sm:$0xff]
        %v483 = vld [vmem:[%s200 + $0x768] sm:$0xff]
        %v484 = vld [vmem:[%s200 + $0x770] sm:$0xff]
        %v485 = vld [vmem:[%s200 + $0x778] sm:$0xff]
        %v486 = vld [vmem:[%s200 + $0x780] sm:$0xff]
        %v487 = vld [vmem:[%s200 + $0x788] sm:$0xff]
        %v488 = vld [vmem:[%s200 + $0x790] sm:$0xff]
        %v489 = vld [vmem:[%s200 + $0x798] sm:$0xff]
        %v490 = vld [vmem:[%s200 + $0x7a0] sm:$0xff]
        %v491 = vld [vmem:[%s200 + $0x7a8] sm:$0xff]
        %v492 = vld [vmem:[%s200 + $0x7b0] sm:$0xff]
        %v493 = vld [vmem:[%s200 + $0x7b8] sm:$0xff]
        %v494 = vld [vmem:[%s200 + $0x7c0] sm:$0xff]
        %v495 = vld [vmem:[%s200 + $0x7c8] sm:$0xff]
        %v496 = vld [vmem:[%s200 + $0x7d0] sm:$0xff]
        %v497 = vld [vmem:[%s200 + $0x7d8] sm:$0xff]
        %v498 = vld [vmem:[%s200 + $0x7e0] sm:$0xff]
        %v499 = vld [vmem:[%s200 + $0x7e8] sm:$0xff]
        %v500 = vld [vmem:[%s200 + $0x7f0] sm:$0xff]
        %v501 = vld [vmem:[%s200 + $0x7f8] sm:$0xff]
        %v502 = vld [vmem:[%s200 + $0x800] sm:$0xff]
        %v503 = vld [vmem:[%s200 + $0x808] sm:$0xff]
        %v504 = vld [vmem:[%s200 + $0x810] sm:$0xff]
        %v505 = vld [vmem:[%s200 + $0x818] sm:$0xff]
        %v506 = vld [vmem:[%s200 + $0x820] sm:$0xff]
        %v507 = vld [vmem:[%s200 + $0x828] sm:$0xff]
        %v508 = vld [vmem:[%s200 + $0x830] sm:$0xff]
        %v509 = vld [vmem:[%s200 + $0x838] sm:$0xff]
        %v510 = vld [vmem:[%s200 + $0x840] sm:$0xff]
        %v511 = vld [vmem:[%s200 + $0x848] sm:$0xff]
        %v512 = vld [vmem:[%s200 + $0x850] sm:$0xff]
        %v513 = vld [vmem:[%s200 + $0x858] sm:$0xff]
        %v514 = vld [vmem:[%s200 + $0x860] sm:$0xff]
        %v515 = vld [vmem:[%s200 + $0x868] sm:$0xff]
        %v516 = vld [vmem:[%s200 + $0x870] sm:$0xff]
        %v517 = vld [vmem:[%s200 + $0x878] sm:$0xff]
        %v518 = vld [vmem:[%s200 + $0x880] sm:$0xff]
        %v519 = vld [vmem:[%s200 + $0x888] sm:$0xff]
        %v520 = vld [vmem:[%s200 + $0x890] sm:$0xff]
        %v521 = vld [vmem:[%s200 + $0x898] sm:$0xff]
        %v522 = vld [vmem:[%s200 + $0x8a0] sm:$0xff]
        %v523 = vld [vmem:[%s200 + $0x8a8] sm:$0xff]
        %v524 = vld [vmem:[%s200 + $0x8b0] sm:$0xff]
        %v525 = vld [vmem:[%s200 + $0x8b8] sm:$0xff]
        %v526 = vld [vmem:[%s200 + $0x8c0] sm:$0xff]
        %v527 = vld [vmem:[%s200 + $0x8c8] sm:$0xff]
        %v528 = vld [vmem:[%s200 + $0x8d0] sm:$0xff]
        %v529 = vld [vmem:[%s200 + $0x8d8] sm:$0xff]
        %v530 = vld [vmem:[%s200 + $0x8e0] sm:$0xff]
        %v531 = vld [vmem:[%s200 + $0x8e8] sm:$0xff]
        %v532 = vld [vmem:[%s200 + $0x8f0] sm:$0xff]
        %v533 = vld [vmem:[%s200 + $0x8f8] sm:$0xff]
        %v534 = vld [vmem:[%s200 + $0x900] sm:$0xff]
        %v535 = vld [vmem:[%s200 + $0x908] sm:$0xff]
        %v536 = vld [vmem:[%s200 + $0x910] sm:$0xff]
        %v537 = vld [vmem:[%s200 + $0x918] sm:$0xff]
        %v538 = vld [vmem:[%s200 + $0x920] sm:$0xff]
        %v539 = vld [vmem:[%s200 + $0x928] sm:$0xff]
        %v540 = vld [vmem:[%s200 + $0x930] sm:$0xff]
        %v541 = vld [vmem:[%s200 + $0x938] sm:$0xff]
        %v542 = vld [vmem:[%s200 + $0x940] sm:$0xff]
        %v543 = vld [vmem:[%s200 + $0x948] sm:$0xff]
        %v544 = vld [vmem:[%s200 + $0x950] sm:$0xff]
        %v545 = vld [vmem:[%s200 + $0x958] sm:$0xff]
        %v546 = vld [vmem:[%s200 + $0x960] sm:$0xff]
        %v547 = vld [vmem:[%s200 + $0x968] sm:$0xff]
        %v548 = vld [vmem:[%s200 + $0x970] sm:$0xff]
        %v549 = vld [vmem:[%s200 + $0x978] sm:$0xff]
        %v550 = vld [vmem:[%s200 + $0x980] sm:$0xff]
        %v551 = vld [vmem:[%s200 + $0x988] sm:$0xff]
        %v552 = vld [vmem:[%s200 + $0x990] sm:$0xff]
        %v553 = vld [vmem:[%s200 + $0x998] sm:$0xff]
        %v554 = vld [vmem:[%s200 + $0x9a0] sm:$0xff]
        %v555 = vld [vmem:[%s200 + $0x9a8] sm:$0xff]
        %v556 = vld [vmem:[%s200 + $0x9b0] sm:$0xff]
        %v557 = vld [vmem:[%s200 + $0x9b8] sm:$0xff]
        %v558 = vld [vmem:[%s200 + $0x9c0] sm:$0xff]
        %v559 = vld [vmem:[%s200 + $0x9c8] sm:$0xff]
        %v560 = vld [vmem:[%s200 + $0x9d0] sm:$0xff]
        %v561 = vld [vmem:[%s200 + $0x9d8] sm:$0xff]
        %v562 = vld [vmem:[%s200 + $0x9e0] sm:$0xff]
        %v563 = vld [vmem:[%s200 + $0x9e8] sm:$0xff]
        %v564 = vld [vmem:[%s200 + $0x9f0] sm:$0xff]
        %v565 = vld [vmem:[%s200 + $0x9f8] sm:$0xff]
        %v566 = vld [vmem:[%s200 + $0xa00] sm:$0xff]
        %v567 = vld [vmem:[%s200 + $0xa08] sm:$0xff]
        %v568 = vld [vmem:[%s200 + $0xa10] sm:$0xff]
        %v569 = vld [vmem:[%s200 + $0xa18] sm:$0xff]
        %v570 = vld [vmem:[%s200 + $0xa20] sm:$0xff]
        %v571 = vld [vmem:[%s200 + $0xa28] sm:$0xff]
        %v572 = vld [vmem:[%s200 + $0xa30] sm:$0xff]
        %v573 = vld [vmem:[%s200 + $0xa38] sm:$0xff]
        %v574 = vld [vmem:[%s200 + $0xa40] sm:$0xff]
        %v575 = vld [vmem:[%s200 + $0xa48] sm:$0xff]
        %v576 = vld [vmem:[%s200 + $0xa50] sm:$0xff]
        %v577 = vld [vmem:[%s200 + $0xa58] sm:$0xff]
        %v578 = vld [vmem:[%s200 + $0xa60] sm:$0xff]
        %v579 = vld [vmem:[%s200 + $0xa68] sm:$0xff]
        %v580 = vld [vmem:[%s200 + $0xa70] sm:$0xff]
        %v581 = vld [vmem:[%s200 + $0xa78] sm:$0xff]
        %v582 = vld [vmem:[%s200 + $0xa80] sm:$0xff]
        %v583 = vld [vmem:[%s200 + $0xa88] sm:$0xff]
        %v584 = vld [vmem:[%s200 + $0xa90] sm:$0xff]
        %v585 = vld [vmem:[%s200 + $0xa98] sm:$0xff]
        %v586 = vld [vmem:[%s200 + $0xaa0] sm:$0xff]
        %v587 = vld [vmem:[%s200 + $0xaa8] sm:$0xff]
        %v588 = vld [vmem:[%s200 + $0xab0] sm:$0xff]
        %v589 = vld [vmem:[%s200 + $0xab8] sm:$0xff]
        %v590 = vld [vmem:[%s200 + $0xac0] sm:$0xff]
        %v591 = vld [vmem:[%s200 + $0xac8] sm:$0xff]
        %v592 = vld [vmem:[%s200 + $0xad0] sm:$0xff]
        %v593 = vld [vmem:[%s200 + $0xad8] sm:$0xff]
        %v594 = vld [vmem:[%s200 + $0xae0] sm:$0xff]
        %v595 = vld [vmem:[%s200 + $0xae8] sm:$0xff]
        %v596 = vld [vmem:[%s200 + $0xaf0] sm:$0xff]
        %v597 = vld [vmem:[%s200 + $0xaf8] sm:$0xff]
        %v598 = vld [vmem:[%s200 + $0xb00] sm:$0xff]
        %v599 = vld [vmem:[%s200 + $0xb08] sm:$0xff]
        %v600 = vld [vmem:[%s200 + $0xb10] sm:$0xff]
        %v601 = vld [vmem:[%s200 + $0xb18] sm:$0xff]
        %v602 = vld [vmem:[%s200 + $0xb20] sm:$0xff]
        %v603 = vld [vmem:[%s200 + $0xb28] sm:$0xff]
        %v604 = vld [vmem:[%s200 + $0xb30] sm:$0xff]
        %v605 = vld [vmem:[%s200 + $0xb38] sm:$0xff]
        %v606 = vld [vmem:[%s200 + $0xb40] sm:$0xff]
        %v607 = vld [vmem:[%s200 + $0xb48] sm:$0xff]
        %v608 = vld [vmem:[%s200 + $0xb50] sm:$0xff]
        %v609 = vld [vmem:[%s200 + $0xb58] sm:$0xff]
        %v610 = vld [vmem:[%s200 + $0xb60] sm:$0xff]
        %v611 = vld [vmem:[%s200 + $0xb68] sm:$0xff]
        %v612 = vld [vmem:[%s200 + $0xb70] sm:$0xff]
        %v613 = vld [vmem:[%s200 + $0xb78] sm:$0xff]
        %v614 = vld [vmem:[%s200 + $0xb80] sm:$0xff]
        %v615 = vld [vmem:[%s200 + $0xb88] sm:$0xff]
        %v616 = vld [vmem:[%s200 + $0xb90] sm:$0xff]
        %v617 = vld [vmem:[%s200 + $0xb98] sm:$0xff]
        %v618 = vld [vmem:[%s200 + $0xba0] sm:$0xff]
        %v619 = vld [vmem:[%s200 + $0xba8] sm:$0xff]
        %v620 = vld [vmem:[%s200 + $0xbb0] sm:$0xff]
        %v621 = vld [vmem:[%s200 + $0xbb8] sm:$0xff]
        %v622 = vld [vmem:[%s200 + $0xbc0] sm:$0xff]
        %v623 = vld [vmem:[%s200 + $0xbc8] sm:$0xff]
        %v624 = vld [vmem:[%s200 + $0xbd0] sm:$0xff]
        %v625 = vld [vmem:[%s200 + $0xbd8] sm:$0xff]
        %v626 = vld [vmem:[%s200 + $0xbe0] sm:$0xff]
        %v627 = vld [vmem:[%s200 + $0xbe8] sm:$0xff]
        %v628 = vld [vmem:[%s200 + $0xbf0] sm:$0xff]
        %v629 = vld [vmem:[%s200 + $0xbf8] sm:$0xff]
        %v630 = vld [vmem:[%s200 + $0xc00] sm:$0xff]
        %v631 = vld [vmem:[%s200 + $0xc08] sm:$0xff]
        %v632 = vld [vmem:[%s200 + $0xc10] sm:$0xff]
        %v633 = vld [vmem:[%s200 + $0xc18] sm:$0xff]
        %v634 = vld [vmem:[%s200 + $0xc20] sm:$0xff]
        %v635 = vld [vmem:[%s200 + $0xc28] sm:$0xff]
        %v636 = vld [vmem:[%s200 + $0xc30] sm:$0xff]
        %v637 = vld [vmem:[%s200 + $0xc38] sm:$0xff]
        %v638 = vld [vmem:[%s200 + $0xc40] sm:$0xff]
        %v639 = vld [vmem:[%s200 + $0xc48] sm:$0xff]
        %v640 = vld [vmem:[%s200 + $0xc50] sm:$0xff]
        %v641 = vld [vmem:[%s200 + $0xc58] sm:$0xff]
        %v642 = vld [vmem:[%s200 + $0xc60] sm:$0xff]
        %v643 = vld [vmem:[%s200 + $0xc68] sm:$0xff]
        %v644 = vld [vmem:[%s200 + $0xc70] sm:$0xff]
        %v645 = vld [vmem:[%s200 + $0xc78] sm:$0xff]
        %v646 = vld [vmem:[%s200 + $0xc80] sm:$0xff]
        %v647 = vld [vmem:[%s200 + $0xc88] sm:$0xff]
        %v648 = vld [vmem:[%s200 + $0xc90] sm:$0xff]
        %v649 = vld [vmem:[%s200 + $0xc98] sm:$0xff]
        %v650 = vld [vmem:[%s200 + $0xca0] sm:$0xff]
        %v651 = vld [vmem:[%s200 + $0xca8] sm:$0xff]
        %v652 = vld [vmem:[%s200 + $0xcb0] sm:$0xff]
        %v653 = vld [vmem:[%s200 + $0xcb8] sm:$0xff]
        %v654 = vld [vmem:[%s200 + $0xcc0] sm:$0xff]
        %v655 = vld [vmem:[%s200 + $0xcc8] sm:$0xff]
        %v656 = vld [vmem:[%s200 + $0xcd0] sm:$0xff]
        %v657 = vld [vmem:[%s200 + $0xcd8] sm:$0xff]
        %v658 = vld [vmem:[%s200 + $0xce0] sm:$0xff]
        %v659 = vld [vmem:[%s200 + $0xce8] sm:$0xff]
        %v660 = vld [vmem:[%s200 + $0xcf0] sm:$0xff]
        %v661 = vld [vmem:[%s200 + $0xcf8] sm:$0xff]
        %v662 = vld [vmem:[%s200 + $0xd00] sm:$0xff]
        %v663 = vld [vmem:[%s200 + $0xd08] sm:$0xff]
        %v664 = vld [vmem:[%s200 + $0xd10] sm:$0xff]
        %v665 = vld [vmem:[%s200 + $0xd18] sm:$0xff]
        %v666 = vld [vmem:[%s200 + $0xd20] sm:$0xff]
        %v667 = vld [vmem:[%s200 + $0xd28] sm:$0xff]
        %v668 = vld [vmem:[%s200 + $0xd30] sm:$0xff]
        %v669 = vld [vmem:[%s200 + $0xd38] sm:$0xff]
        %v670 = vld [vmem:[%s200 + $0xd40] sm:$0xff]
        %v671 = vld [vmem:[%s200 + $0xd48] sm:$0xff]
        %v672 = vld [vmem:[%s200 + $0xd50] sm:$0xff]
        %v673 = vld [vmem:[%s200 + $0xd58] sm:$0xff]
        %v674 = vld [vmem:[%s200 + $0xd60] sm:$0xff]
        %v675 = vld [vmem:[%s200 + $0xd68] sm:$0xff]
        %v676 = vld [vmem:[%s200 + $0xd70] sm:$0xff]
        %v677 = vld [vmem:[%s200 + $0xd78] sm:$0xff]
        %v678 = vld [vmem:[%s200 + $0xd80] sm:$0xff]
        %v679 = vld [vmem:[%s200 + $0xd88] sm:$0xff]
        %v680 = vld [vmem:[%s200 + $0xd90] sm:$0xff]
        %v681 = vld [vmem:[%s200 + $0xd98] sm:$0xff]
        %v682 = vld [vmem:[%s200 + $0xda0] sm:$0xff]
        %v683 = vld [vmem:[%s200 + $0xda8] sm:$0xff]
        %v684 = vld [vmem:[%s200 + $0xdb0] sm:$0xff]
        %v685 = vld [vmem:[%s200 + $0xdb8] sm:$0xff]
        %v686 = vld [vmem:[%s200 + $0xdc0] sm:$0xff]
        %v687 = vld [vmem:[%s200 + $0xdc8] sm:$0xff]
        %v688 = vld [vmem:[%s200 + $0xdd0] sm:$0xff]
        %v689 = vld [vmem:[%s200 + $0xdd8] sm:$0xff]
        %v690 = vld [vmem:[%s200 + $0xde0] sm:$0xff]
        %v691 = vld [vmem:[%s200 + $0xde8] sm:$0xff]
        %v692 = vld [vmem:[%s200 + $0xdf0] sm:$0xff]
        %v693 = vld [vmem:[%s200 + $0xdf8] sm:$0xff]
        %v694 = vld [vmem:[%s200 + $0xe00] sm:$0xff]
        %v695 = vld [vmem:[%s200 + $0xe08] sm:$0xff]
        %v696 = vld [vmem:[%s200 + $0xe10] sm:$0xff]
        %v697 = vld [vmem:[%s200 + $0xe18] sm:$0xff]
        %v698 = vld [vmem:[%s200 + $0xe20] sm:$0xff]
        %v699 = vld [vmem:[%s200 + $0xe28] sm:$0xff]
        %v700 = vld [vmem:[%s200 + $0xe30] sm:$0xff]
        %v701 = vld [vmem:[%s200 + $0xe38] sm:$0xff]
        %v702 = vld [vmem:[%s200 + $0xe40] sm:$0xff]
        %v703 = vld [vmem:[%s200 + $0xe48] sm:$0xff]
        %v704 = vld [vmem:[%s200 + $0xe50] sm:$0xff]
        %v705 = vld [vmem:[%s200 + $0xe58] sm:$0xff]
        %v706 = vld [vmem:[%s200 + $0xe60] sm:$0xff]
        %v707 = vld [vmem:[%s200 + $0xe68] sm:$0xff]
        %v708 = vld [vmem:[%s200 + $0xe70] sm:$0xff]
        %v709 = vld [vmem:[%s200 + $0xe78] sm:$0xff]
        %v710 = vld [vmem:[%s200 + $0xe80] sm:$0xff]
        %v711 = vld [vmem:[%s200 + $0xe88] sm:$0xff]
        %v712 = vld [vmem:[%s200 + $0xe90] sm:$0xff]
        %v713 = vld [vmem:[%s200 + $0xe98] sm:$0xff]
        %v714 = vld [vmem:[%s200 + $0xea0] sm:$0xff]
        %v715 = vld [vmem:[%s200 + $0xea8] sm:$0xff]
        %v716 = vld [vmem:[%s200 + $0xeb0] sm:$0xff]
        %v717 = vld [vmem:[%s200 + $0xeb8] sm:$0xff]
        %v718 = vld [vmem:[%s200 + $0xec0] sm:$0xff]
        %v719 = vld [vmem:[%s200 + $0xec8] sm:$0xff]
        %v720 = vld [vmem:[%s200 + $0xed0] sm:$0xff]
        %v721 = vld [vmem:[%s200 + $0xed8] sm:$0xff]
        %v722 = vld [vmem:[%s200 + $0xee0] sm:$0xff]
        %v723 = vld [vmem:[%s200 + $0xee8] sm:$0xff]
        %v724 = vld [vmem:[%s200 + $0xef0] sm:$0xff]
        %v725 = vld [vmem:[%s200 + $0xef8] sm:$0xff]
        %v726 = vld [vmem:[%s200 + $0xf00] sm:$0xff]
        %v727 = vld [vmem:[%s200 + $0xf08] sm:$0xff]
        %v728 = vld [vmem:[%s200 + $0xf10] sm:$0xff]
        %v729 = vld [vmem:[%s200 + $0xf18] sm:$0xff]
        %v730 = vld [vmem:[%s200 + $0xf20] sm:$0xff]
        %v731 = vld [vmem:[%s200 + $0xf28] sm:$0xff]
        %v732 = vld [vmem:[%s200 + $0xf30] sm:$0xff]
        %v733 = vld [vmem:[%s200 + $0xf38] sm:$0xff]
        %v734 = vld [vmem:[%s200 + $0xf40] sm:$0xff]
        %v735 = vld [vmem:[%s200 + $0xf48] sm:$0xff]
        %v736 = vld [vmem:[%s200 + $0xf50] sm:$0xff]
        %v737 = vld [vmem:[%s200 + $0xf58] sm:$0xff]
        %v738 = vld [vmem:[%s200 + $0xf60] sm:$0xff]
        %v739 = vld [vmem:[%s200 + $0xf68] sm:$0xff]
        %v740 = vld [vmem:[%s200 + $0xf70] sm:$0xff]
        %v741 = vld [vmem:[%s200 + $0xf78] sm:$0xff]
        %v742 = vld [vmem:[%s200 + $0xf80] sm:$0xff]
        %v743 = vld [vmem:[%s200 + $0xf88] sm:$0xff]
        %v744 = vld [vmem:[%s200 + $0xf90] sm:$0xff]
        %v745 = vld [vmem:[%s200 + $0xf98] sm:$0xff]
        %v746 = vld [vmem:[%s200 + $0xfa0] sm:$0xff]
        %v747 = vld [vmem:[%s200 + $0xfa8] sm:$0xff]
        %v748 = vld [vmem:[%s200 + $0xfb0] sm:$0xff]
        %v749 = vld [vmem:[%s200 + $0xfb8] sm:$0xff]
        %v750 = vld [vmem:[%s200 + $0xfc0] sm:$0xff]
        %v751 = vld [vmem:[%s200 + $0xfc8] sm:$0xff]
        %v752 = vld [vmem:[%s200 + $0xfd0] sm:$0xff]
        %v753 = vld [vmem:[%s200 + $0xfd8] sm:$0xff]
        %v754 = vld [vmem:[%s200 + $0xfe0] sm:$0xff]
        %v755 = vld [vmem:[%s200 + $0xfe8] sm:$0xff]
        %v756 = vld [vmem:[%s200 + $0xff0] sm:$0xff]
        %v757 = vld [vmem:[%s200 + $0xff8] sm:$0xff]
        %v758 = vmax.f32 %v246, 0.0
        %v759 = vmax.f32 %v247, 0.0
        %v760 = vmax.f32 %v248, 0.0
        %v761 = vmax.f32 %v249, 0.0
        %v762 = vmax.f32 %v250, 0.0
        %v763 = vmax.f32 %v251, 0.0
        %v764 = vmax.f32 %v252, 0.0
        %v765 = vmax.f32 %v253, 0.0
        %v766 = vmax.f32 %v254, 0.0
        %v767 = vmax.f32 %v255, 0.0
        %v768 = vmax.f32 %v256, 0.0
        %v769 = vmax.f32 %v257, 0.0
        %v770 = vmax.f32 %v258, 0.0
        %v771 = vmax.f32 %v259, 0.0
        %v772 = vmax.f32 %v260, 0.0
        %v773 = vmax.f32 %v261, 0.0
        %v774 = vmax.f32 %v262, 0.0
        %v775 = vmax.f32 %v263, 0.0
        %v776 = vmax.f32 %v264, 0.0
        %v777 = vmax.f32 %v265, 0.0
        %v778 = vmax.f32 %v266, 0.0
        %v779 = vmax.f32 %v267, 0.0
        %v780 = vmax.f32 %v268, 0.0
        %v781 = vmax.f32 %v269, 0.0
        %v782 = vmax.f32 %v270, 0.0
        %v783 = vmax.f32 %v271, 0.0
        %v784 = vmax.f32 %v272, 0.0
        %v785 = vmax.f32 %v273, 0.0
        %v786 = vmax.f32 %v274, 0.0
        %v787 = vmax.f32 %v275, 0.0
        %v788 = vmax.f32 %v276, 0.0
        %v789 = vmax.f32 %v277, 0.0
        %v790 = vmax.f32 %v278, 0.0
        %v791 = vmax.f32 %v279, 0.0
        %v792 = vmax.f32 %v280, 0.0
        %v793 = vmax.f32 %v281, 0.0
        %v794 = vmax.f32 %v282, 0.0
        %v795 = vmax.f32 %v283, 0.0
        %v796 = vmax.f32 %v284, 0.0
        %v797 = vmax.f32 %v285, 0.0
        %v798 = vmax.f32 %v286, 0.0
        %v799 = vmax.f32 %v287, 0.0
        %v800 = vmax.f32 %v288, 0.0
        %v801 = vmax.f32 %v289, 0.0
        %v802 = vmax.f32 %v290, 0.0
        %v803 = vmax.f32 %v291, 0.0
        %v804 = vmax.f32 %v292, 0.0
        %v805 = vmax.f32 %v293, 0.0
        %v806 = vmax.f32 %v294, 0.0
        %v807 = vmax.f32 %v295, 0.0
        %v808 = vmax.f32 %v296, 0.0
        %v809 = vmax.f32 %v297, 0.0
        %v810 = vmax.f32 %v298, 0.0
        %v811 = vmax.f32 %v299, 0.0
        %v812 = vmax.f32 %v300, 0.0
        %v813 = vmax.f32 %v301, 0.0
        %v814 = vmax.f32 %v302, 0.0
        %v815 = vmax.f32 %v303, 0.0
        %v816 = vmax.f32 %v304, 0.0
        %v817 = vmax.f32 %v305, 0.0
        %v818 = vmax.f32 %v306, 0.0
        %v819 = vmax.f32 %v307, 0.0
        %v820 = vmax.f32 %v308, 0.0
        %v821 = vmax.f32 %v309, 0.0
        %v822 = vmax.f32 %v310, 0.0
        %v823 = vmax.f32 %v311, 0.0
        %v824 = vmax.f32 %v312, 0.0
        %v825 = vmax.f32 %v313, 0.0
        %v826 = vmax.f32 %v314, 0.0
        %v827 = vmax.f32 %v315, 0.0
        %v828 = vmax.f32 %v316, 0.0
        %v829 = vmax.f32 %v317, 0.0
        %v830 = vmax.f32 %v318, 0.0
        %v831 = vmax.f32 %v319, 0.0
        %v832 = vmax.f32 %v320, 0.0
        %v833 = vmax.f32 %v321, 0.0
        %v834 = vmax.f32 %v322, 0.0
        %v835 = vmax.f32 %v323, 0.0
        %v836 = vmax.f32 %v324, 0.0
        %v837 = vmax.f32 %v325, 0.0
        %v838 = vmax.f32 %v326, 0.0
        %v839 = vmax.f32 %v327, 0.0
        %v840 = vmax.f32 %v328, 0.0
        %v841 = vmax.f32 %v329, 0.0
        %v842 = vmax.f32 %v330, 0.0
        %v843 = vmax.f32 %v331, 0.0
        %v844 = vmax.f32 %v332, 0.0
        %v845 = vmax.f32 %v333, 0.0
        %v846 = vmax.f32 %v334, 0.0
        %v847 = vmax.f32 %v335, 0.0
        %v848 = vmax.f32 %v336, 0.0
        %v849 = vmax.f32 %v337, 0.0
        %v850 = vmax.f32 %v338, 0.0
        %v851 = vmax.f32 %v339, 0.0
        %v852 = vmax.f32 %v340, 0.0
        %v853 = vmax.f32 %v341, 0.0
        %v854 = vmax.f32 %v342, 0.0
        %v855 = vmax.f32 %v343, 0.0
        %v856 = vmax.f32 %v344, 0.0
        %v857 = vmax.f32 %v345, 0.0
        %v858 = vmax.f32 %v346, 0.0
        %v859 = vmax.f32 %v347, 0.0
        %v860 = vmax.f32 %v348, 0.0
        %v861 = vmax.f32 %v349, 0.0
        %v862 = vmax.f32 %v350, 0.0
        %v863 = vmax.f32 %v351, 0.0
        %v864 = vmax.f32 %v352, 0.0
        %v865 = vmax.f32 %v353, 0.0
        %v866 = vmax.f32 %v354, 0.0
        %v867 = vmax.f32 %v355, 0.0
        %v868 = vmax.f32 %v356, 0.0
        %v869 = vmax.f32 %v357, 0.0
        %v870 = vmax.f32 %v358, 0.0
        %v871 = vmax.f32 %v359, 0.0
        %v872 = vmax.f32 %v360, 0.0
        %v873 = vmax.f32 %v361, 0.0
        %v874 = vmax.f32 %v362, 0.0
        %v875 = vmax.f32 %v363, 0.0
        %v876 = vmax.f32 %v364, 0.0
        %v877 = vmax.f32 %v365, 0.0
        %v878 = vmax.f32 %v366, 0.0
        %v879 = vmax.f32 %v367, 0.0
        %v880 = vmax.f32 %v368, 0.0
        %v881 = vmax.f32 %v369, 0.0
        %v882 = vmax.f32 %v370, 0.0
        %v883 = vmax.f32 %v371, 0.0
        %v884 = vmax.f32 %v372, 0.0
        %v885 = vmax.f32 %v373, 0.0
        %v886 = vmax.f32 %v374, 0.0
        %v887 = vmax.f32 %v375, 0.0
        %v888 = vmax.f32 %v376, 0.0
        %v889 = vmax.f32 %v377, 0.0
        %v890 = vmax.f32 %v378, 0.0
        %v891 = vmax.f32 %v379, 0.0
        %v892 = vmax.f32 %v380, 0.0
        %v893 = vmax.f32 %v381, 0.0
        %v894 = vmax.f32 %v382, 0.0
        %v895 = vmax.f32 %v383, 0.0
        %v896 = vmax.f32 %v384, 0.0
        %v897 = vmax.f32 %v385, 0.0
        %v898 = vmax.f32 %v386, 0.0
        %v899 = vmax.f32 %v387, 0.0
        %v900 = vmax.f32 %v388, 0.0
        %v901 = vmax.f32 %v389, 0.0
        %v902 = vmax.f32 %v390, 0.0
        %v903 = vmax.f32 %v391, 0.0
        %v904 = vmax.f32 %v392, 0.0
        %v905 = vmax.f32 %v393, 0.0
        %v906 = vmax.f32 %v394, 0.0
        %v907 = vmax.f32 %v395, 0.0
        %v908 = vmax.f32 %v396, 0.0
        %v909 = vmax.f32 %v397, 0.0
        %v910 = vmax.f32 %v398, 0.0
        %v911 = vmax.f32 %v399, 0.0
        %v912 = vmax.f32 %v400, 0.0
        %v913 = vmax.f32 %v401, 0.0
        %v914 = vmax.f32 %v402, 0.0
        %v915 = vmax.f32 %v403, 0.0
        %v916 = vmax.f32 %v404, 0.0
        %v917 = vmax.f32 %v405, 0.0
        %v918 = vmax.f32 %v406, 0.0
        %v919 = vmax.f32 %v407, 0.0
        %v920 = vmax.f32 %v408, 0.0
        %v921 = vmax.f32 %v409, 0.0
        %v922 = vmax.f32 %v410, 0.0
        %v923 = vmax.f32 %v411, 0.0
        %v924 = vmax.f32 %v412, 0.0
        %v925 = vmax.f32 %v413, 0.0
        %v926 = vmax.f32 %v414, 0.0
        %v927 = vmax.f32 %v415, 0.0
        %v928 = vmax.f32 %v416, 0.0
        %v929 = vmax.f32 %v417, 0.0
        %v930 = vmax.f32 %v418, 0.0
        %v931 = vmax.f32 %v419, 0.0
        %v932 = vmax.f32 %v420, 0.0
        %v933 = vmax.f32 %v421, 0.0
        %v934 = vmax.f32 %v422, 0.0
        %v935 = vmax.f32 %v423, 0.0
        %v936 = vmax.f32 %v424, 0.0
        %v937 = vmax.f32 %v425, 0.0
        %v938 = vmax.f32 %v426, 0.0
        %v939 = vmax.f32 %v427, 0.0
        %v940 = vmax.f32 %v428, 0.0
        %v941 = vmax.f32 %v429, 0.0
        %v942 = vmax.f32 %v430, 0.0
        %v943 = vmax.f32 %v431, 0.0
        %v944 = vmax.f32 %v432, 0.0
        %v945 = vmax.f32 %v433, 0.0
        %v946 = vmax.f32 %v434, 0.0
        %v947 = vmax.f32 %v435, 0.0
        %v948 = vmax.f32 %v436, 0.0
        %v949 = vmax.f32 %v437, 0.0
        %v950 = vmax.f32 %v438, 0.0
        %v951 = vmax.f32 %v439, 0.0
        %v952 = vmax.f32 %v440, 0.0
        %v953 = vmax.f32 %v441, 0.0
        %v954 = vmax.f32 %v442, 0.0
        %v955 = vmax.f32 %v443, 0.0
        %v956 = vmax.f32 %v444, 0.0
        %v957 = vmax.f32 %v445, 0.0
        %v958 = vmax.f32 %v446, 0.0
        %v959 = vmax.f32 %v447, 0.0
        %v960 = vmax.f32 %v448, 0.0
        %v961 = vmax.f32 %v449, 0.0
        %v962 = vmax.f32 %v450, 0.0
        %v963 = vmax.f32 %v451, 0.0
        %v964 = vmax.f32 %v452, 0.0
        %v965 = vmax.f32 %v453, 0.0
        %v966 = vmax.f32 %v454, 0.0
        %v967 = vmax.f32 %v455, 0.0
        %v968 = vmax.f32 %v456, 0.0
        %v969 = vmax.f32 %v457, 0.0
        %v970 = vmax.f32 %v458, 0.0
        %v971 = vmax.f32 %v459, 0.0
        %v972 = vmax.f32 %v460, 0.0
        %v973 = vmax.f32 %v461, 0.0
        %v974 = vmax.f32 %v462, 0.0
        %v975 = vmax.f32 %v463, 0.0
        %v976 = vmax.f32 %v464, 0.0
        %v977 = vmax.f32 %v465, 0.0
        %v978 = vmax.f32 %v466, 0.0
        %v979 = vmax.f32 %v467, 0.0
        %v980 = vmax.f32 %v468, 0.0
        %v981 = vmax.f32 %v469, 0.0
        %v982 = vmax.f32 %v470, 0.0
        %v983 = vmax.f32 %v471, 0.0
        %v984 = vmax.f32 %v472, 0.0
        %v985 = vmax.f32 %v473, 0.0
        %v986 = vmax.f32 %v474, 0.0
        %v987 = vmax.f32 %v475, 0.0
        %v988 = vmax.f32 %v476, 0.0
        %v989 = vmax.f32 %v477, 0.0
        %v990 = vmax.f32 %v478, 0.0
        %v991 = vmax.f32 %v479, 0.0
        %v992 = vmax.f32 %v480, 0.0
        %v993 = vmax.f32 %v481, 0.0
        %v994 = vmax.f32 %v482, 0.0
        %v995 = vmax.f32 %v483, 0.0
        %v996 = vmax.f32 %v484, 0.0
        %v997 = vmax.f32 %v485, 0.0
        %v998 = vmax.f32 %v486, 0.0
        %v999 = vmax.f32 %v487, 0.0
        %v1000 = vmax.f32 %v488, 0.0
        %v1001 = vmax.f32 %v489, 0.0
        %v1002 = vmax.f32 %v490, 0.0
        %v1003 = vmax.f32 %v491, 0.0
        %v1004 = vmax.f32 %v492, 0.0
        %v1005 = vmax.f32 %v493, 0.0
        %v1006 = vmax.f32 %v494, 0.0
        %v1007 = vmax.f32 %v495, 0.0
        %v1008 = vmax.f32 %v496, 0.0
        %v1009 = vmax.f32 %v497, 0.0
        %v1010 = vmax.f32 %v498, 0.0
        %v1011 = vmax.f32 %v499, 0.0
        %v1012 = vmax.f32 %v500, 0.0
        %v1013 = vmax.f32 %v501, 0.0
        %v1014 = vmax.f32 %v502, 0.0
        %v1015 = vmax.f32 %v503, 0.0
        %v1016 = vmax.f32 %v504, 0.0
        %v1017 = vmax.f32 %v505, 0.0
        %v1018 = vmax.f32 %v506, 0.0
        %v1019 = vmax.f32 %v507, 0.0
        %v1020 = vmax.f32 %v508, 0.0
        %v1021 = vmax.f32 %v509, 0.0
        %v1022 = vmax.f32 %v510, 0.0
        %v1023 = vmax.f32 %v511, 0.0
        %v1024 = vmax.f32 %v512, 0.0
        %v1025 = vmax.f32 %v513, 0.0
        %v1026 = vmax.f32 %v514, 0.0
        %v1027 = vmax.f32 %v515, 0.0
        %v1028 = vmax.f32 %v516, 0.0
        %v1029 = vmax.f32 %v517, 0.0
        %v1030 = vmax.f32 %v518, 0.0
        %v1031 = vmax.f32 %v519, 0.0
        %v1032 = vmax.f32 %v520, 0.0
        %v1033 = vmax.f32 %v521, 0.0
        %v1034 = vmax.f32 %v522, 0.0
        %v1035 = vmax.f32 %v523, 0.0
        %v1036 = vmax.f32 %v524, 0.0
        %v1037 = vmax.f32 %v525, 0.0
        %v1038 = vmax.f32 %v526, 0.0
        %v1039 = vmax.f32 %v527, 0.0
        %v1040 = vmax.f32 %v528, 0.0
        %v1041 = vmax.f32 %v529, 0.0
        %v1042 = vmax.f32 %v530, 0.0
        %v1043 = vmax.f32 %v531, 0.0
        %v1044 = vmax.f32 %v532, 0.0
        %v1045 = vmax.f32 %v533, 0.0
        %v1046 = vmax.f32 %v534, 0.0
        %v1047 = vmax.f32 %v535, 0.0
        %v1048 = vmax.f32 %v536, 0.0
        %v1049 = vmax.f32 %v537, 0.0
        %v1050 = vmax.f32 %v538, 0.0
        %v1051 = vmax.f32 %v539, 0.0
        %v1052 = vmax.f32 %v540, 0.0
        %v1053 = vmax.f32 %v541, 0.0
        %v1054 = vmax.f32 %v542, 0.0
        %v1055 = vmax.f32 %v543, 0.0
        %v1056 = vmax.f32 %v544, 0.0
        %v1057 = vmax.f32 %v545, 0.0
        %v1058 = vmax.f32 %v546, 0.0
        %v1059 = vmax.f32 %v547, 0.0
        %v1060 = vmax.f32 %v548, 0.0
        %v1061 = vmax.f32 %v549, 0.0
        %v1062 = vmax.f32 %v550, 0.0
        %v1063 = vmax.f32 %v551, 0.0
        %v1064 = vmax.f32 %v552, 0.0
        %v1065 = vmax.f32 %v553, 0.0
        %v1066 = vmax.f32 %v554, 0.0
        %v1067 = vmax.f32 %v555, 0.0
        %v1068 = vmax.f32 %v556, 0.0
        %v1069 = vmax.f32 %v557, 0.0
        %v1070 = vmax.f32 %v558, 0.0
        %v1071 = vmax.f32 %v559, 0.0
        %v1072 = vmax.f32 %v560, 0.0
        %v1073 = vmax.f32 %v561, 0.0
        %v1074 = vmax.f32 %v562, 0.0
        %v1075 = vmax.f32 %v563, 0.0
        %v1076 = vmax.f32 %v564, 0.0
        %v1077 = vmax.f32 %v565, 0.0
        %v1078 = vmax.f32 %v566, 0.0
        %v1079 = vmax.f32 %v567, 0.0
        %v1080 = vmax.f32 %v568, 0.0
        %v1081 = vmax.f32 %v569, 0.0
        %v1082 = vmax.f32 %v570, 0.0
        %v1083 = vmax.f32 %v571, 0.0
        %v1084 = vmax.f32 %v572, 0.0
        %v1085 = vmax.f32 %v573, 0.0
        %v1086 = vmax.f32 %v574, 0.0
        %v1087 = vmax.f32 %v575, 0.0
        %v1088 = vmax.f32 %v576, 0.0
        %v1089 = vmax.f32 %v577, 0.0
        %v1090 = vmax.f32 %v578, 0.0
        %v1091 = vmax.f32 %v579, 0.0
        %v1092 = vmax.f32 %v580, 0.0
        %v1093 = vmax.f32 %v581, 0.0
        %v1094 = vmax.f32 %v582, 0.0
        %v1095 = vmax.f32 %v583, 0.0
        %v1096 = vmax.f32 %v584, 0.0
        %v1097 = vmax.f32 %v585, 0.0
        %v1098 = vmax.f32 %v586, 0.0
        %v1099 = vmax.f32 %v587, 0.0
        %v1100 = vmax.f32 %v588, 0.0
        %v1101 = vmax.f32 %v589, 0.0
        %v1102 = vmax.f32 %v590, 0.0
        %v1103 = vmax.f32 %v591, 0.0
        %v1104 = vmax.f32 %v592, 0.0
        %v1105 = vmax.f32 %v593, 0.0
        %v1106 = vmax.f32 %v594, 0.0
        %v1107 = vmax.f32 %v595, 0.0
        %v1108 = vmax.f32 %v596, 0.0
        %v1109 = vmax.f32 %v597, 0.0
        %v1110 = vmax.f32 %v598, 0.0
        %v1111 = vmax.f32 %v599, 0.0
        %v1112 = vmax.f32 %v600, 0.0
        %v1113 = vmax.f32 %v601, 0.0
        %v1114 = vmax.f32 %v602, 0.0
        %v1115 = vmax.f32 %v603, 0.0
        %v1116 = vmax.f32 %v604, 0.0
        %v1117 = vmax.f32 %v605, 0.0
        %v1118 = vmax.f32 %v606, 0.0
        %v1119 = vmax.f32 %v607, 0.0
        %v1120 = vmax.f32 %v608, 0.0
        %v1121 = vmax.f32 %v609, 0.0
        %v1122 = vmax.f32 %v610, 0.0
        %v1123 = vmax.f32 %v611, 0.0
        %v1124 = vmax.f32 %v612, 0.0
        %v1125 = vmax.f32 %v613, 0.0
        %v1126 = vmax.f32 %v614, 0.0
        %v1127 = vmax.f32 %v615, 0.0
        %v1128 = vmax.f32 %v616, 0.0
        %v1129 = vmax.f32 %v617, 0.0
        %v1130 = vmax.f32 %v618, 0.0
        %v1131 = vmax.f32 %v619, 0.0
        %v1132 = vmax.f32 %v620, 0.0
        %v1133 = vmax.f32 %v621, 0.0
        %v1134 = vmax.f32 %v622, 0.0
        %v1135 = vmax.f32 %v623, 0.0
        %v1136 = vmax.f32 %v624, 0.0
        %v1137 = vmax.f32 %v625, 0.0
        %v1138 = vmax.f32 %v626, 0.0
        %v1139 = vmax.f32 %v627, 0.0
        %v1140 = vmax.f32 %v628, 0.0
        %v1141 = vmax.f32 %v629, 0.0
        %v1142 = vmax.f32 %v630, 0.0
        %v1143 = vmax.f32 %v631, 0.0
        %v1144 = vmax.f32 %v632, 0.0
        %v1145 = vmax.f32 %v633, 0.0
        %v1146 = vmax.f32 %v634, 0.0
        %v1147 = vmax.f32 %v635, 0.0
        %v1148 = vmax.f32 %v636, 0.0
        %v1149 = vmax.f32 %v637, 0.0
        %v1150 = vmax.f32 %v638, 0.0
        %v1151 = vmax.f32 %v639, 0.0
        %v1152 = vmax.f32 %v640, 0.0
        %v1153 = vmax.f32 %v641, 0.0
        %v1154 = vmax.f32 %v642, 0.0
        %v1155 = vmax.f32 %v643, 0.0
        %v1156 = vmax.f32 %v644, 0.0
        %v1157 = vmax.f32 %v645, 0.0
        %v1158 = vmax.f32 %v646, 0.0
        %v1159 = vmax.f32 %v647, 0.0
        %v1160 = vmax.f32 %v648, 0.0
        %v1161 = vmax.f32 %v649, 0.0
        %v1162 = vmax.f32 %v650, 0.0
        %v1163 = vmax.f32 %v651, 0.0
        %v1164 = vmax.f32 %v652, 0.0
        %v1165 = vmax.f32 %v653, 0.0
        %v1166 = vmax.f32 %v654, 0.0
        %v1167 = vmax.f32 %v655, 0.0
        %v1168 = vmax.f32 %v656, 0.0
        %v1169 = vmax.f32 %v657, 0.0
        %v1170 = vmax.f32 %v658, 0.0
        %v1171 = vmax.f32 %v659, 0.0
        %v1172 = vmax.f32 %v660, 0.0
        %v1173 = vmax.f32 %v661, 0.0
        %v1174 = vmax.f32 %v662, 0.0
        %v1175 = vmax.f32 %v663, 0.0
        %v1176 = vmax.f32 %v664, 0.0
        %v1177 = vmax.f32 %v665, 0.0
        %v1178 = vmax.f32 %v666, 0.0
        %v1179 = vmax.f32 %v667, 0.0
        %v1180 = vmax.f32 %v668, 0.0
        %v1181 = vmax.f32 %v669, 0.0
        %v1182 = vmax.f32 %v670, 0.0
        %v1183 = vmax.f32 %v671, 0.0
        %v1184 = vmax.f32 %v672, 0.0
        %v1185 = vmax.f32 %v673, 0.0
        %v1186 = vmax.f32 %v674, 0.0
        %v1187 = vmax.f32 %v675, 0.0
        %v1188 = vmax.f32 %v676, 0.0
        %v1189 = vmax.f32 %v677, 0.0
        %v1190 = vmax.f32 %v678, 0.0
        %v1191 = vmax.f32 %v679, 0.0
        %v1192 = vmax.f32 %v680, 0.0
        %v1193 = vmax.f32 %v681, 0.0
        %v1194 = vmax.f32 %v682, 0.0
        %v1195 = vmax.f32 %v683, 0.0
        %v1196 = vmax.f32 %v684, 0.0
        %v1197 = vmax.f32 %v685, 0.0
        %v1198 = vmax.f32 %v686, 0.0
        %v1199 = vmax.f32 %v687, 0.0
        %v1200 = vmax.f32 %v688, 0.0
        %v1201 = vmax.f32 %v689, 0.0
        %v1202 = vmax.f32 %v690, 0.0
        %v1203 = vmax.f32 %v691, 0.0
        %v1204 = vmax.f32 %v692, 0.0
        %v1205 = vmax.f32 %v693, 0.0
        %v1206 = vmax.f32 %v694, 0.0
        %v1207 = vmax.f32 %v695, 0.0
        %v1208 = vmax.f32 %v696, 0.0
        %v1209 = vmax.f32 %v697, 0.0
        %v1210 = vmax.f32 %v698, 0.0
        %v1211 = vmax.f32 %v699, 0.0
        %v1212 = vmax.f32 %v700, 0.0
        %v1213 = vmax.f32 %v701, 0.0
        %v1214 = vmax.f32 %v702, 0.0
        %v1215 = vmax.f32 %v703, 0.0
        %v1216 = vmax.f32 %v704, 0.0
        %v1217 = vmax.f32 %v705, 0.0
        %v1218 = vmax.f32 %v706, 0.0
        %v1219 = vmax.f32 %v707, 0.0
        %v1220 = vmax.f32 %v708, 0.0
        %v1221 = vmax.f32 %v709, 0.0
        %v1222 = vmax.f32 %v710, 0.0
        %v1223 = vmax.f32 %v711, 0.0
        %v1224 = vmax.f32 %v712, 0.0
        %v1225 = vmax.f32 %v713, 0.0
        %v1226 = vmax.f32 %v714, 0.0
        %v1227 = vmax.f32 %v715, 0.0
        %v1228 = vmax.f32 %v716, 0.0
        %v1229 = vmax.f32 %v717, 0.0
        %v1230 = vmax.f32 %v718, 0.0
        %v1231 = vmax.f32 %v719, 0.0
        %v1232 = vmax.f32 %v720, 0.0
        %v1233 = vmax.f32 %v721, 0.0
        %v1234 = vmax.f32 %v722, 0.0
        %v1235 = vmax.f32 %v723, 0.0
        %v1236 = vmax.f32 %v724, 0.0
        %v1237 = vmax.f32 %v725, 0.0
        %v1238 = vmax.f32 %v726, 0.0
        %v1239 = vmax.f32 %v727, 0.0
        %v1240 = vmax.f32 %v728, 0.0
        %v1241 = vmax.f32 %v729, 0.0
        %v1242 = vmax.f32 %v730, 0.0
        %v1243 = vmax.f32 %v731, 0.0
        %v1244 = vmax.f32 %v732, 0.0
        %v1245 = vmax.f32 %v733, 0.0
        %v1246 = vmax.f32 %v734, 0.0
        %v1247 = vmax.f32 %v735, 0.0
        %v1248 = vmax.f32 %v736, 0.0
        %v1249 = vmax.f32 %v737, 0.0
        %v1250 = vmax.f32 %v738, 0.0
        %v1251 = vmax.f32 %v739, 0.0
        %v1252 = vmax.f32 %v740, 0.0
        %v1253 = vmax.f32 %v741, 0.0
        %v1254 = vmax.f32 %v742, 0.0
        %v1255 = vmax.f32 %v743, 0.0
        %v1256 = vmax.f32 %v744, 0.0
        %v1257 = vmax.f32 %v745, 0.0
        %v1258 = vmax.f32 %v746, 0.0
        %v1259 = vmax.f32 %v747, 0.0
        %v1260 = vmax.f32 %v748, 0.0
        %v1261 = vmax.f32 %v749, 0.0
        %v1262 = vmax.f32 %v750, 0.0
        %v1263 = vmax.f32 %v751, 0.0
        %v1264 = vmax.f32 %v752, 0.0
        %v1265 = vmax.f32 %v753, 0.0
        %v1266 = vmax.f32 %v754, 0.0
        %v1267 = vmax.f32 %v755, 0.0
        %v1268 = vmax.f32 %v756, 0.0
        %v1269 = vmax.f32 %v757, 0.0
        %1270 = vst [vmem:[%s234] sm:$0xff] %v758
        %1271 = vst [vmem:[%s234 + $0x8] sm:$0xff] %v759
        %1272 = vst [vmem:[%s234 + $0x10] sm:$0xff] %v760
        %1273 = vst [vmem:[%s234 + $0x18] sm:$0xff] %v761
        %1274 = vst [vmem:[%s234 + $0x20] sm:$0xff] %v762
        %1275 = vst [vmem:[%s234 + $0x28] sm:$0xff] %v763
        %1276 = vst [vmem:[%s234 + $0x30] sm:$0xff] %v764
        %1277 = vst [vmem:[%s234 + $0x38] sm:$0xff] %v765
        %1278 = vst [vmem:[%s234 + $0x40] sm:$0xff] %v766
        %1279 = vst [vmem:[%s234 + $0x48] sm:$0xff] %v767
        %1280 = vst [vmem:[%s234 + $0x50] sm:$0xff] %v768
        %1281 = vst [vmem:[%s234 + $0x58] sm:$0xff] %v769
        %1282 = vst [vmem:[%s234 + $0x60] sm:$0xff] %v770
        %1283 = vst [vmem:[%s234 + $0x68] sm:$0xff] %v771
        %1284 = vst [vmem:[%s234 + $0x70] sm:$0xff] %v772
        %1285 = vst [vmem:[%s234 + $0x78] sm:$0xff] %v773
        %1286 = vst [vmem:[%s234 + $0x80] sm:$0xff] %v774
        %1287 = vst [vmem:[%s234 + $0x88] sm:$0xff] %v775
        %1288 = vst [vmem:[%s234 + $0x90] sm:$0xff] %v776
        %1289 = vst [vmem:[%s234 + $0x98] sm:$0xff] %v777
        %1290 = vst [vmem:[%s234 + $0xa0] sm:$0xff] %v778
        %1291 = vst [vmem:[%s234 + $0xa8] sm:$0xff] %v779
        %1292 = vst [vmem:[%s234 + $0xb0] sm:$0xff] %v780
        %1293 = vst [vmem:[%s234 + $0xb8] sm:$0xff] %v781
        %1294 = vst [vmem:[%s234 + $0xc0] sm:$0xff] %v782
        %1295 = vst [vmem:[%s234 + $0xc8] sm:$0xff] %v783
        %1296 = vst [vmem:[%s234 + $0xd0] sm:$0xff] %v784
        %1297 = vst [vmem:[%s234 + $0xd8] sm:$0xff] %v785
        %1298 = vst [vmem:[%s234 + $0xe0] sm:$0xff] %v786
        %1299 = vst [vmem:[%s234 + $0xe8] sm:$0xff] %v787
        %1300 = vst [vmem:[%s234 + $0xf0] sm:$0xff] %v788
        %1301 = vst [vmem:[%s234 + $0xf8] sm:$0xff] %v789
        %1302 = vst [vmem:[%s234 + $0x100] sm:$0xff] %v790
        %1303 = vst [vmem:[%s234 + $0x108] sm:$0xff] %v791
        %1304 = vst [vmem:[%s234 + $0x110] sm:$0xff] %v792
        %1305 = vst [vmem:[%s234 + $0x118] sm:$0xff] %v793
        %1306 = vst [vmem:[%s234 + $0x120] sm:$0xff] %v794
        %1307 = vst [vmem:[%s234 + $0x128] sm:$0xff] %v795
        %1308 = vst [vmem:[%s234 + $0x130] sm:$0xff] %v796
        %1309 = vst [vmem:[%s234 + $0x138] sm:$0xff] %v797
        %1310 = vst [vmem:[%s234 + $0x140] sm:$0xff] %v798
        %1311 = vst [vmem:[%s234 + $0x148] sm:$0xff] %v799
        %1312 = vst [vmem:[%s234 + $0x150] sm:$0xff] %v800
        %1313 = vst [vmem:[%s234 + $0x158] sm:$0xff] %v801
        %1314 = vst [vmem:[%s234 + $0x160] sm:$0xff] %v802
        %1315 = vst [vmem:[%s234 + $0x168] sm:$0xff] %v803
        %1316 = vst [vmem:[%s234 + $0x170] sm:$0xff] %v804
        %1317 = vst [vmem:[%s234 + $0x178] sm:$0xff] %v805
        %1318 = vst [vmem:[%s234 + $0x180] sm:$0xff] %v806
        %1319 = vst [vmem:[%s234 + $0x188] sm:$0xff] %v807
        %1320 = vst [vmem:[%s234 + $0x190] sm:$0xff] %v808
        %1321 = vst [vmem:[%s234 + $0x198] sm:$0xff] %v809
        %1322 = vst [vmem:[%s234 + $0x1a0] sm:$0xff] %v810
        %1323 = vst [vmem:[%s234 + $0x1a8] sm:$0xff] %v811
        %1324 = vst [vmem:[%s234 + $0x1b0] sm:$0xff] %v812
        %1325 = vst [vmem:[%s234 + $0x1b8] sm:$0xff] %v813
        %1326 = vst [vmem:[%s234 + $0x1c0] sm:$0xff] %v814
        %1327 = vst [vmem:[%s234 + $0x1c8] sm:$0xff] %v815
        %1328 = vst [vmem:[%s234 + $0x1d0] sm:$0xff] %v816
        %1329 = vst [vmem:[%s234 + $0x1d8] sm:$0xff] %v817
        %1330 = vst [vmem:[%s234 + $0x1e0] sm:$0xff] %v818
        %1331 = vst [vmem:[%s234 + $0x1e8] sm:$0xff] %v819
        %1332 = vst [vmem:[%s234 + $0x1f0] sm:$0xff] %v820
        %1333 = vst [vmem:[%s234 + $0x1f8] sm:$0xff] %v821
        %1334 = vst [vmem:[%s234 + $0x200] sm:$0xff] %v822
        %1335 = vst [vmem:[%s234 + $0x208] sm:$0xff] %v823
        %1336 = vst [vmem:[%s234 + $0x210] sm:$0xff] %v824
        %1337 = vst [vmem:[%s234 + $0x218] sm:$0xff] %v825
        %1338 = vst [vmem:[%s234 + $0x220] sm:$0xff] %v826
        %1339 = vst [vmem:[%s234 + $0x228] sm:$0xff] %v827
        %1340 = vst [vmem:[%s234 + $0x230] sm:$0xff] %v828
        %1341 = vst [vmem:[%s234 + $0x238] sm:$0xff] %v829
        %1342 = vst [vmem:[%s234 + $0x240] sm:$0xff] %v830
        %1343 = vst [vmem:[%s234 + $0x248] sm:$0xff] %v831
        %1344 = vst [vmem:[%s234 + $0x250] sm:$0xff] %v832
        %1345 = vst [vmem:[%s234 + $0x258] sm:$0xff] %v833
        %1346 = vst [vmem:[%s234 + $0x260] sm:$0xff] %v834
        %1347 = vst [vmem:[%s234 + $0x268] sm:$0xff] %v835
        %1348 = vst [vmem:[%s234 + $0x270] sm:$0xff] %v836
        %1349 = vst [vmem:[%s234 + $0x278] sm:$0xff] %v837
        %1350 = vst [vmem:[%s234 + $0x280] sm:$0xff] %v838
        %1351 = vst [vmem:[%s234 + $0x288] sm:$0xff] %v839
        %1352 = vst [vmem:[%s234 + $0x290] sm:$0xff] %v840
        %1353 = vst [vmem:[%s234 + $0x298] sm:$0xff] %v841
        %1354 = vst [vmem:[%s234 + $0x2a0] sm:$0xff] %v842
        %1355 = vst [vmem:[%s234 + $0x2a8] sm:$0xff] %v843
        %1356 = vst [vmem:[%s234 + $0x2b0] sm:$0xff] %v844
        %1357 = vst [vmem:[%s234 + $0x2b8] sm:$0xff] %v845
        %1358 = vst [vmem:[%s234 + $0x2c0] sm:$0xff] %v846
        %1359 = vst [vmem:[%s234 + $0x2c8] sm:$0xff] %v847
        %1360 = vst [vmem:[%s234 + $0x2d0] sm:$0xff] %v848
        %1361 = vst [vmem:[%s234 + $0x2d8] sm:$0xff] %v849
        %1362 = vst [vmem:[%s234 + $0x2e0] sm:$0xff] %v850
        %1363 = vst [vmem:[%s234 + $0x2e8] sm:$0xff] %v851
        %1364 = vst [vmem:[%s234 + $0x2f0] sm:$0xff] %v852
        %1365 = vst [vmem:[%s234 + $0x2f8] sm:$0xff] %v853
        %1366 = vst [vmem:[%s234 + $0x300] sm:$0xff] %v854
        %1367 = vst [vmem:[%s234 + $0x308] sm:$0xff] %v855
        %1368 = vst [vmem:[%s234 + $0x310] sm:$0xff] %v856
        %1369 = vst [vmem:[%s234 + $0x318] sm:$0xff] %v857
        %1370 = vst [vmem:[%s234 + $0x320] sm:$0xff] %v858
        %1371 = vst [vmem:[%s234 + $0x328] sm:$0xff] %v859
        %1372 = vst [vmem:[%s234 + $0x330] sm:$0xff] %v860
        %1373 = vst [vmem:[%s234 + $0x338] sm:$0xff] %v861
        %1374 = vst [vmem:[%s234 + $0x340] sm:$0xff] %v862
        %1375 = vst [vmem:[%s234 + $0x348] sm:$0xff] %v863
        %1376 = vst [vmem:[%s234 + $0x350] sm:$0xff] %v864
        %1377 = vst [vmem:[%s234 + $0x358] sm:$0xff] %v865
        %1378 = vst [vmem:[%s234 + $0x360] sm:$0xff] %v866
        %1379 = vst [vmem:[%s234 + $0x368] sm:$0xff] %v867
        %1380 = vst [vmem:[%s234 + $0x370] sm:$0xff] %v868
        %1381 = vst [vmem:[%s234 + $0x378] sm:$0xff] %v869
        %1382 = vst [vmem:[%s234 + $0x380] sm:$0xff] %v870
        %1383 = vst [vmem:[%s234 + $0x388] sm:$0xff] %v871
        %1384 = vst [vmem:[%s234 + $0x390] sm:$0xff] %v872
        %1385 = vst [vmem:[%s234 + $0x398] sm:$0xff] %v873
        %1386 = vst [vmem:[%s234 + $0x3a0] sm:$0xff] %v874
        %1387 = vst [vmem:[%s234 + $0x3a8] sm:$0xff] %v875
        %1388 = vst [vmem:[%s234 + $0x3b0] sm:$0xff] %v876
        %1389 = vst [vmem:[%s234 + $0x3b8] sm:$0xff] %v877
        %1390 = vst [vmem:[%s234 + $0x3c0] sm:$0xff] %v878
        %1391 = vst [vmem:[%s234 + $0x3c8] sm:$0xff] %v879
        %1392 = vst [vmem:[%s234 + $0x3d0] sm:$0xff] %v880
        %1393 = vst [vmem:[%s234 + $0x3d8] sm:$0xff] %v881
        %1394 = vst [vmem:[%s234 + $0x3e0] sm:$0xff] %v882
        %1395 = vst [vmem:[%s234 + $0x3e8] sm:$0xff] %v883
        %1396 = vst [vmem:[%s234 + $0x3f0] sm:$0xff] %v884
        %1397 = vst [vmem:[%s234 + $0x3f8] sm:$0xff] %v885
        %1398 = vst [vmem:[%s234 + $0x400] sm:$0xff] %v886
        %1399 = vst [vmem:[%s234 + $0x408] sm:$0xff] %v887
        %1400 = vst [vmem:[%s234 + $0x410] sm:$0xff] %v888
        %1401 = vst [vmem:[%s234 + $0x418] sm:$0xff] %v889
        %1402 = vst [vmem:[%s234 + $0x420] sm:$0xff] %v890
        %1403 = vst [vmem:[%s234 + $0x428] sm:$0xff] %v891
        %1404 = vst [vmem:[%s234 + $0x430] sm:$0xff] %v892
        %1405 = vst [vmem:[%s234 + $0x438] sm:$0xff] %v893
        %1406 = vst [vmem:[%s234 + $0x440] sm:$0xff] %v894
        %1407 = vst [vmem:[%s234 + $0x448] sm:$0xff] %v895
        %1408 = vst [vmem:[%s234 + $0x450] sm:$0xff] %v896
        %1409 = vst [vmem:[%s234 + $0x458] sm:$0xff] %v897
        %1410 = vst [vmem:[%s234 + $0x460] sm:$0xff] %v898
        %1411 = vst [vmem:[%s234 + $0x468] sm:$0xff] %v899
        %1412 = vst [vmem:[%s234 + $0x470] sm:$0xff] %v900
        %1413 = vst [vmem:[%s234 + $0x478] sm:$0xff] %v901
        %1414 = vst [vmem:[%s234 + $0x480] sm:$0xff] %v902
        %1415 = vst [vmem:[%s234 + $0x488] sm:$0xff] %v903
        %1416 = vst [vmem:[%s234 + $0x490] sm:$0xff] %v904
        %1417 = vst [vmem:[%s234 + $0x498] sm:$0xff] %v905
        %1418 = vst [vmem:[%s234 + $0x4a0] sm:$0xff] %v906
        %1419 = vst [vmem:[%s234 + $0x4a8] sm:$0xff] %v907
        %1420 = vst [vmem:[%s234 + $0x4b0] sm:$0xff] %v908
        %1421 = vst [vmem:[%s234 + $0x4b8] sm:$0xff] %v909
        %1422 = vst [vmem:[%s234 + $0x4c0] sm:$0xff] %v910
        %1423 = vst [vmem:[%s234 + $0x4c8] sm:$0xff] %v911
        %1424 = vst [vmem:[%s234 + $0x4d0] sm:$0xff] %v912
        %1425 = vst [vmem:[%s234 + $0x4d8] sm:$0xff] %v913
        %1426 = vst [vmem:[%s234 + $0x4e0] sm:$0xff] %v914
        %1427 = vst [vmem:[%s234 + $0x4e8] sm:$0xff] %v915
        %1428 = vst [vmem:[%s234 + $0x4f0] sm:$0xff] %v916
        %1429 = vst [vmem:[%s234 + $0x4f8] sm:$0xff] %v917
        %1430 = vst [vmem:[%s234 + $0x500] sm:$0xff] %v918
        %1431 = vst [vmem:[%s234 + $0x508] sm:$0xff] %v919
        %1432 = vst [vmem:[%s234 + $0x510] sm:$0xff] %v920
        %1433 = vst [vmem:[%s234 + $0x518] sm:$0xff] %v921
        %1434 = vst [vmem:[%s234 + $0x520] sm:$0xff] %v922
        %1435 = vst [vmem:[%s234 + $0x528] sm:$0xff] %v923
        %1436 = vst [vmem:[%s234 + $0x530] sm:$0xff] %v924
        %1437 = vst [vmem:[%s234 + $0x538] sm:$0xff] %v925
        %1438 = vst [vmem:[%s234 + $0x540] sm:$0xff] %v926
        %1439 = vst [vmem:[%s234 + $0x548] sm:$0xff] %v927
        %1440 = vst [vmem:[%s234 + $0x550] sm:$0xff] %v928
        %1441 = vst [vmem:[%s234 + $0x558] sm:$0xff] %v929
        %1442 = vst [vmem:[%s234 + $0x560] sm:$0xff] %v930
        %1443 = vst [vmem:[%s234 + $0x568] sm:$0xff] %v931
        %1444 = vst [vmem:[%s234 + $0x570] sm:$0xff] %v932
        %1445 = vst [vmem:[%s234 + $0x578] sm:$0xff] %v933
        %1446 = vst [vmem:[%s234 + $0x580] sm:$0xff] %v934
        %1447 = vst [vmem:[%s234 + $0x588] sm:$0xff] %v935
        %1448 = vst [vmem:[%s234 + $0x590] sm:$0xff] %v936
        %1449 = vst [vmem:[%s234 + $0x598] sm:$0xff] %v937
        %1450 = vst [vmem:[%s234 + $0x5a0] sm:$0xff] %v938
        %1451 = vst [vmem:[%s234 + $0x5a8] sm:$0xff] %v939
        %1452 = vst [vmem:[%s234 + $0x5b0] sm:$0xff] %v940
        %1453 = vst [vmem:[%s234 + $0x5b8] sm:$0xff] %v941
        %1454 = vst [vmem:[%s234 + $0x5c0] sm:$0xff] %v942
        %1455 = vst [vmem:[%s234 + $0x5c8] sm:$0xff] %v943
        %1456 = vst [vmem:[%s234 + $0x5d0] sm:$0xff] %v944
        %1457 = vst [vmem:[%s234 + $0x5d8] sm:$0xff] %v945
        %1458 = vst [vmem:[%s234 + $0x5e0] sm:$0xff] %v946
        %1459 = vst [vmem:[%s234 + $0x5e8] sm:$0xff] %v947
        %1460 = vst [vmem:[%s234 + $0x5f0] sm:$0xff] %v948
        %1461 = vst [vmem:[%s234 + $0x5f8] sm:$0xff] %v949
        %1462 = vst [vmem:[%s234 + $0x600] sm:$0xff] %v950
        %1463 = vst [vmem:[%s234 + $0x608] sm:$0xff] %v951
        %1464 = vst [vmem:[%s234 + $0x610] sm:$0xff] %v952
        %1465 = vst [vmem:[%s234 + $0x618] sm:$0xff] %v953
        %1466 = vst [vmem:[%s234 + $0x620] sm:$0xff] %v954
        %1467 = vst [vmem:[%s234 + $0x628] sm:$0xff] %v955
        %1468 = vst [vmem:[%s234 + $0x630] sm:$0xff] %v956
        %1469 = vst [vmem:[%s234 + $0x638] sm:$0xff] %v957
        %1470 = vst [vmem:[%s234 + $0x640] sm:$0xff] %v958
        %1471 = vst [vmem:[%s234 + $0x648] sm:$0xff] %v959
        %1472 = vst [vmem:[%s234 + $0x650] sm:$0xff] %v960
        %1473 = vst [vmem:[%s234 + $0x658] sm:$0xff] %v961
        %1474 = vst [vmem:[%s234 + $0x660] sm:$0xff] %v962
        %1475 = vst [vmem:[%s234 + $0x668] sm:$0xff] %v963
        %1476 = vst [vmem:[%s234 + $0x670] sm:$0xff] %v964
        %1477 = vst [vmem:[%s234 + $0x678] sm:$0xff] %v965
        %1478 = vst [vmem:[%s234 + $0x680] sm:$0xff] %v966
        %1479 = vst [vmem:[%s234 + $0x688] sm:$0xff] %v967
        %1480 = vst [vmem:[%s234 + $0x690] sm:$0xff] %v968
        %1481 = vst [vmem:[%s234 + $0x698] sm:$0xff] %v969
        %1482 = vst [vmem:[%s234 + $0x6a0] sm:$0xff] %v970
        %1483 = vst [vmem:[%s234 + $0x6a8] sm:$0xff] %v971
        %1484 = vst [vmem:[%s234 + $0x6b0] sm:$0xff] %v972
        %1485 = vst [vmem:[%s234 + $0x6b8] sm:$0xff] %v973
        %1486 = vst [vmem:[%s234 + $0x6c0] sm:$0xff] %v974
        %1487 = vst [vmem:[%s234 + $0x6c8] sm:$0xff] %v975
        %1488 = vst [vmem:[%s234 + $0x6d0] sm:$0xff] %v976
        %1489 = vst [vmem:[%s234 + $0x6d8] sm:$0xff] %v977
        %1490 = vst [vmem:[%s234 + $0x6e0] sm:$0xff] %v978
        %1491 = vst [vmem:[%s234 + $0x6e8] sm:$0xff] %v979
        %1492 = vst [vmem:[%s234 + $0x6f0] sm:$0xff] %v980
        %1493 = vst [vmem:[%s234 + $0x6f8] sm:$0xff] %v981
        %1494 = vst [vmem:[%s234 + $0x700] sm:$0xff] %v982
        %1495 = vst [vmem:[%s234 + $0x708] sm:$0xff] %v983
        %1496 = vst [vmem:[%s234 + $0x710] sm:$0xff] %v984
        %1497 = vst [vmem:[%s234 + $0x718] sm:$0xff] %v985
        %1498 = vst [vmem:[%s234 + $0x720] sm:$0xff] %v986
        %1499 = vst [vmem:[%s234 + $0x728] sm:$0xff] %v987
        %1500 = vst [vmem:[%s234 + $0x730] sm:$0xff] %v988
        %1501 = vst [vmem:[%s234 + $0x738] sm:$0xff] %v989
        %1502 = vst [vmem:[%s234 + $0x740] sm:$0xff] %v990
        %1503 = vst [vmem:[%s234 + $0x748] sm:$0xff] %v991
        %1504 = vst [vmem:[%s234 + $0x750] sm:$0xff] %v992
        %1505 = vst [vmem:[%s234 + $0x758] sm:$0xff] %v993
        %1506 = vst [vmem:[%s234 + $0x760] sm:$0xff] %v994
        %1507 = vst [vmem:[%s234 + $0x768] sm:$0xff] %v995
        %1508 = vst [vmem:[%s234 + $0x770] sm:$0xff] %v996
        %1509 = vst [vmem:[%s234 + $0x778] sm:$0xff] %v997
        %1510 = vst [vmem:[%s234 + $0x780] sm:$0xff] %v998
        %1511 = vst [vmem:[%s234 + $0x788] sm:$0xff] %v999
        %1512 = vst [vmem:[%s234 + $0x790] sm:$0xff] %v1000
        %1513 = vst [vmem:[%s234 + $0x798] sm:$0xff] %v1001
        %1514 = vst [vmem:[%s234 + $0x7a0] sm:$0xff] %v1002
        %1515 = vst [vmem:[%s234 + $0x7a8] sm:$0xff] %v1003
        %1516 = vst [vmem:[%s234 + $0x7b0] sm:$0xff] %v1004
        %1517 = vst [vmem:[%s234 + $0x7b8] sm:$0xff] %v1005
        %1518 = vst [vmem:[%s234 + $0x7c0] sm:$0xff] %v1006
        %1519 = vst [vmem:[%s234 + $0x7c8] sm:$0xff] %v1007
        %1520 = vst [vmem:[%s234 + $0x7d0] sm:$0xff] %v1008
        %1521 = vst [vmem:[%s234 + $0x7d8] sm:$0xff] %v1009
        %1522 = vst [vmem:[%s234 + $0x7e0] sm:$0xff] %v1010
        %1523 = vst [vmem:[%s234 + $0x7e8] sm:$0xff] %v1011
        %1524 = vst [vmem:[%s234 + $0x7f0] sm:$0xff] %v1012
        %1525 = vst [vmem:[%s234 + $0x7f8] sm:$0xff] %v1013
        %1526 = vst [vmem:[%s234 + $0x800] sm:$0xff] %v1014
        %1527 = vst [vmem:[%s234 + $0x808] sm:$0xff] %v1015
        %1528 = vst [vmem:[%s234 + $0x810] sm:$0xff] %v1016
        %1529 = vst [vmem:[%s234 + $0x818] sm:$0xff] %v1017
        %1530 = vst [vmem:[%s234 + $0x820] sm:$0xff] %v1018
        %1531 = vst [vmem:[%s234 + $0x828] sm:$0xff] %v1019
        %1532 = vst [vmem:[%s234 + $0x830] sm:$0xff] %v1020
        %1533 = vst [vmem:[%s234 + $0x838] sm:$0xff] %v1021
        %1534 = vst [vmem:[%s234 + $0x840] sm:$0xff] %v1022
        %1535 = vst [vmem:[%s234 + $0x848] sm:$0xff] %v1023
        %1536 = vst [vmem:[%s234 + $0x850] sm:$0xff] %v1024
        %1537 = vst [vmem:[%s234 + $0x858] sm:$0xff] %v1025
        %1538 = vst [vmem:[%s234 + $0x860] sm:$0xff] %v1026
        %1539 = vst [vmem:[%s234 + $0x868] sm:$0xff] %v1027
        %1540 = vst [vmem:[%s234 + $0x870] sm:$0xff] %v1028
        %1541 = vst [vmem:[%s234 + $0x878] sm:$0xff] %v1029
        %1542 = vst [vmem:[%s234 + $0x880] sm:$0xff] %v1030
        %1543 = vst [vmem:[%s234 + $0x888] sm:$0xff] %v1031
        %1544 = vst [vmem:[%s234 + $0x890] sm:$0xff] %v1032
        %1545 = vst [vmem:[%s234 + $0x898] sm:$0xff] %v1033
        %1546 = vst [vmem:[%s234 + $0x8a0] sm:$0xff] %v1034
        %1547 = vst [vmem:[%s234 + $0x8a8] sm:$0xff] %v1035
        %1548 = vst [vmem:[%s234 + $0x8b0] sm:$0xff] %v1036
        %1549 = vst [vmem:[%s234 + $0x8b8] sm:$0xff] %v1037
        %1550 = vst [vmem:[%s234 + $0x8c0] sm:$0xff] %v1038
        %1551 = vst [vmem:[%s234 + $0x8c8] sm:$0xff] %v1039
        %1552 = vst [vmem:[%s234 + $0x8d0] sm:$0xff] %v1040
        %1553 = vst [vmem:[%s234 + $0x8d8] sm:$0xff] %v1041
        %1554 = vst [vmem:[%s234 + $0x8e0] sm:$0xff] %v1042
        %1555 = vst [vmem:[%s234 + $0x8e8] sm:$0xff] %v1043
        %1556 = vst [vmem:[%s234 + $0x8f0] sm:$0xff] %v1044
        %1557 = vst [vmem:[%s234 + $0x8f8] sm:$0xff] %v1045
        %1558 = vst [vmem:[%s234 + $0x900] sm:$0xff] %v1046
        %1559 = vst [vmem:[%s234 + $0x908] sm:$0xff] %v1047
        %1560 = vst [vmem:[%s234 + $0x910] sm:$0xff] %v1048
        %1561 = vst [vmem:[%s234 + $0x918] sm:$0xff] %v1049
        %1562 = vst [vmem:[%s234 + $0x920] sm:$0xff] %v1050
        %1563 = vst [vmem:[%s234 + $0x928] sm:$0xff] %v1051
        %1564 = vst [vmem:[%s234 + $0x930] sm:$0xff] %v1052
        %1565 = vst [vmem:[%s234 + $0x938] sm:$0xff] %v1053
        %1566 = vst [vmem:[%s234 + $0x940] sm:$0xff] %v1054
        %1567 = vst [vmem:[%s234 + $0x948] sm:$0xff] %v1055
        %1568 = vst [vmem:[%s234 + $0x950] sm:$0xff] %v1056
        %1569 = vst [vmem:[%s234 + $0x958] sm:$0xff] %v1057
        %1570 = vst [vmem:[%s234 + $0x960] sm:$0xff] %v1058
        %1571 = vst [vmem:[%s234 + $0x968] sm:$0xff] %v1059
        %1572 = vst [vmem:[%s234 + $0x970] sm:$0xff] %v1060
        %1573 = vst [vmem:[%s234 + $0x978] sm:$0xff] %v1061
        %1574 = vst [vmem:[%s234 + $0x980] sm:$0xff] %v1062
        %1575 = vst [vmem:[%s234 + $0x988] sm:$0xff] %v1063
        %1576 = vst [vmem:[%s234 + $0x990] sm:$0xff] %v1064
        %1577 = vst [vmem:[%s234 + $0x998] sm:$0xff] %v1065
        %1578 = vst [vmem:[%s234 + $0x9a0] sm:$0xff] %v1066
        %1579 = vst [vmem:[%s234 + $0x9a8] sm:$0xff] %v1067
        %1580 = vst [vmem:[%s234 + $0x9b0] sm:$0xff] %v1068
        %1581 = vst [vmem:[%s234 + $0x9b8] sm:$0xff] %v1069
        %1582 = vst [vmem:[%s234 + $0x9c0] sm:$0xff] %v1070
        %1583 = vst [vmem:[%s234 + $0x9c8] sm:$0xff] %v1071
        %1584 = vst [vmem:[%s234 + $0x9d0] sm:$0xff] %v1072
        %1585 = vst [vmem:[%s234 + $0x9d8] sm:$0xff] %v1073
        %1586 = vst [vmem:[%s234 + $0x9e0] sm:$0xff] %v1074
        %1587 = vst [vmem:[%s234 + $0x9e8] sm:$0xff] %v1075
        %1588 = vst [vmem:[%s234 + $0x9f0] sm:$0xff] %v1076
        %1589 = vst [vmem:[%s234 + $0x9f8] sm:$0xff] %v1077
        %1590 = vst [vmem:[%s234 + $0xa00] sm:$0xff] %v1078
        %1591 = vst [vmem:[%s234 + $0xa08] sm:$0xff] %v1079
        %1592 = vst [vmem:[%s234 + $0xa10] sm:$0xff] %v1080
        %1593 = vst [vmem:[%s234 + $0xa18] sm:$0xff] %v1081
        %1594 = vst [vmem:[%s234 + $0xa20] sm:$0xff] %v1082
        %1595 = vst [vmem:[%s234 + $0xa28] sm:$0xff] %v1083
        %1596 = vst [vmem:[%s234 + $0xa30] sm:$0xff] %v1084
        %1597 = vst [vmem:[%s234 + $0xa38] sm:$0xff] %v1085
        %1598 = vst [vmem:[%s234 + $0xa40] sm:$0xff] %v1086
        %1599 = vst [vmem:[%s234 + $0xa48] sm:$0xff] %v1087
        %1600 = vst [vmem:[%s234 + $0xa50] sm:$0xff] %v1088
        %1601 = vst [vmem:[%s234 + $0xa58] sm:$0xff] %v1089
        %1602 = vst [vmem:[%s234 + $0xa60] sm:$0xff] %v1090
        %1603 = vst [vmem:[%s234 + $0xa68] sm:$0xff] %v1091
        %1604 = vst [vmem:[%s234 + $0xa70] sm:$0xff] %v1092
        %1605 = vst [vmem:[%s234 + $0xa78] sm:$0xff] %v1093
        %1606 = vst [vmem:[%s234 + $0xa80] sm:$0xff] %v1094
        %1607 = vst [vmem:[%s234 + $0xa88] sm:$0xff] %v1095
        %1608 = vst [vmem:[%s234 + $0xa90] sm:$0xff] %v1096
        %1609 = vst [vmem:[%s234 + $0xa98] sm:$0xff] %v1097
        %1610 = vst [vmem:[%s234 + $0xaa0] sm:$0xff] %v1098
        %1611 = vst [vmem:[%s234 + $0xaa8] sm:$0xff] %v1099
        %1612 = vst [vmem:[%s234 + $0xab0] sm:$0xff] %v1100
        %1613 = vst [vmem:[%s234 + $0xab8] sm:$0xff] %v1101
        %1614 = vst [vmem:[%s234 + $0xac0] sm:$0xff] %v1102
        %1615 = vst [vmem:[%s234 + $0xac8] sm:$0xff] %v1103
        %1616 = vst [vmem:[%s234 + $0xad0] sm:$0xff] %v1104
        %1617 = vst [vmem:[%s234 + $0xad8] sm:$0xff] %v1105
        %1618 = vst [vmem:[%s234 + $0xae0] sm:$0xff] %v1106
        %1619 = vst [vmem:[%s234 + $0xae8] sm:$0xff] %v1107
        %1620 = vst [vmem:[%s234 + $0xaf0] sm:$0xff] %v1108
        %1621 = vst [vmem:[%s234 + $0xaf8] sm:$0xff] %v1109
        %1622 = vst [vmem:[%s234 + $0xb00] sm:$0xff] %v1110
        %1623 = vst [vmem:[%s234 + $0xb08] sm:$0xff] %v1111
        %1624 = vst [vmem:[%s234 + $0xb10] sm:$0xff] %v1112
        %1625 = vst [vmem:[%s234 + $0xb18] sm:$0xff] %v1113
        %1626 = vst [vmem:[%s234 + $0xb20] sm:$0xff] %v1114
        %1627 = vst [vmem:[%s234 + $0xb28] sm:$0xff] %v1115
        %1628 = vst [vmem:[%s234 + $0xb30] sm:$0xff] %v1116
        %1629 = vst [vmem:[%s234 + $0xb38] sm:$0xff] %v1117
        %1630 = vst [vmem:[%s234 + $0xb40] sm:$0xff] %v1118
        %1631 = vst [vmem:[%s234 + $0xb48] sm:$0xff] %v1119
        %1632 = vst [vmem:[%s234 + $0xb50] sm:$0xff] %v1120
        %1633 = vst [vmem:[%s234 + $0xb58] sm:$0xff] %v1121
        %1634 = vst [vmem:[%s234 + $0xb60] sm:$0xff] %v1122
        %1635 = vst [vmem:[%s234 + $0xb68] sm:$0xff] %v1123
        %1636 = vst [vmem:[%s234 + $0xb70] sm:$0xff] %v1124
        %1637 = vst [vmem:[%s234 + $0xb78] sm:$0xff] %v1125
        %1638 = vst [vmem:[%s234 + $0xb80] sm:$0xff] %v1126
        %1639 = vst [vmem:[%s234 + $0xb88] sm:$0xff] %v1127
        %1640 = vst [vmem:[%s234 + $0xb90] sm:$0xff] %v1128
        %1641 = vst [vmem:[%s234 + $0xb98] sm:$0xff] %v1129
        %1642 = vst [vmem:[%s234 + $0xba0] sm:$0xff] %v1130
        %1643 = vst [vmem:[%s234 + $0xba8] sm:$0xff] %v1131
        %1644 = vst [vmem:[%s234 + $0xbb0] sm:$0xff] %v1132
        %1645 = vst [vmem:[%s234 + $0xbb8] sm:$0xff] %v1133
        %1646 = vst [vmem:[%s234 + $0xbc0] sm:$0xff] %v1134
        %1647 = vst [vmem:[%s234 + $0xbc8] sm:$0xff] %v1135
        %1648 = vst [vmem:[%s234 + $0xbd0] sm:$0xff] %v1136
        %1649 = vst [vmem:[%s234 + $0xbd8] sm:$0xff] %v1137
        %1650 = vst [vmem:[%s234 + $0xbe0] sm:$0xff] %v1138
        %1651 = vst [vmem:[%s234 + $0xbe8] sm:$0xff] %v1139
        %1652 = vst [vmem:[%s234 + $0xbf0] sm:$0xff] %v1140
        %1653 = vst [vmem:[%s234 + $0xbf8] sm:$0xff] %v1141
        %1654 = vst [vmem:[%s234 + $0xc00] sm:$0xff] %v1142
        %1655 = vst [vmem:[%s234 + $0xc08] sm:$0xff] %v1143
        %1656 = vst [vmem:[%s234 + $0xc10] sm:$0xff] %v1144
        %1657 = vst [vmem:[%s234 + $0xc18] sm:$0xff] %v1145
        %1658 = vst [vmem:[%s234 + $0xc20] sm:$0xff] %v1146
        %1659 = vst [vmem:[%s234 + $0xc28] sm:$0xff] %v1147
        %1660 = vst [vmem:[%s234 + $0xc30] sm:$0xff] %v1148
        %1661 = vst [vmem:[%s234 + $0xc38] sm:$0xff] %v1149
        %1662 = vst [vmem:[%s234 + $0xc40] sm:$0xff] %v1150
        %1663 = vst [vmem:[%s234 + $0xc48] sm:$0xff] %v1151
        %1664 = vst [vmem:[%s234 + $0xc50] sm:$0xff] %v1152
        %1665 = vst [vmem:[%s234 + $0xc58] sm:$0xff] %v1153
        %1666 = vst [vmem:[%s234 + $0xc60] sm:$0xff] %v1154
        %1667 = vst [vmem:[%s234 + $0xc68] sm:$0xff] %v1155
        %1668 = vst [vmem:[%s234 + $0xc70] sm:$0xff] %v1156
        %1669 = vst [vmem:[%s234 + $0xc78] sm:$0xff] %v1157
        %1670 = vst [vmem:[%s234 + $0xc80] sm:$0xff] %v1158
        %1671 = vst [vmem:[%s234 + $0xc88] sm:$0xff] %v1159
        %1672 = vst [vmem:[%s234 + $0xc90] sm:$0xff] %v1160
        %1673 = vst [vmem:[%s234 + $0xc98] sm:$0xff] %v1161
        %1674 = vst [vmem:[%s234 + $0xca0] sm:$0xff] %v1162
        %1675 = vst [vmem:[%s234 + $0xca8] sm:$0xff] %v1163
        %1676 = vst [vmem:[%s234 + $0xcb0] sm:$0xff] %v1164
        %1677 = vst [vmem:[%s234 + $0xcb8] sm:$0xff] %v1165
        %1678 = vst [vmem:[%s234 + $0xcc0] sm:$0xff] %v1166
        %1679 = vst [vmem:[%s234 + $0xcc8] sm:$0xff] %v1167
        %1680 = vst [vmem:[%s234 + $0xcd0] sm:$0xff] %v1168
        %1681 = vst [vmem:[%s234 + $0xcd8] sm:$0xff] %v1169
        %1682 = vst [vmem:[%s234 + $0xce0] sm:$0xff] %v1170
        %1683 = vst [vmem:[%s234 + $0xce8] sm:$0xff] %v1171
        %1684 = vst [vmem:[%s234 + $0xcf0] sm:$0xff] %v1172
        %1685 = vst [vmem:[%s234 + $0xcf8] sm:$0xff] %v1173
        %1686 = vst [vmem:[%s234 + $0xd00] sm:$0xff] %v1174
        %1687 = vst [vmem:[%s234 + $0xd08] sm:$0xff] %v1175
        %1688 = vst [vmem:[%s234 + $0xd10] sm:$0xff] %v1176
        %1689 = vst [vmem:[%s234 + $0xd18] sm:$0xff] %v1177
        %1690 = vst [vmem:[%s234 + $0xd20] sm:$0xff] %v1178
        %1691 = vst [vmem:[%s234 + $0xd28] sm:$0xff] %v1179
        %1692 = vst [vmem:[%s234 + $0xd30] sm:$0xff] %v1180
        %1693 = vst [vmem:[%s234 + $0xd38] sm:$0xff] %v1181
        %1694 = vst [vmem:[%s234 + $0xd40] sm:$0xff] %v1182
        %1695 = vst [vmem:[%s234 + $0xd48] sm:$0xff] %v1183
        %1696 = vst [vmem:[%s234 + $0xd50] sm:$0xff] %v1184
        %1697 = vst [vmem:[%s234 + $0xd58] sm:$0xff] %v1185
        %1698 = vst [vmem:[%s234 + $0xd60] sm:$0xff] %v1186
        %1699 = vst [vmem:[%s234 + $0xd68] sm:$0xff] %v1187
        %1700 = vst [vmem:[%s234 + $0xd70] sm:$0xff] %v1188
        %1701 = vst [vmem:[%s234 + $0xd78] sm:$0xff] %v1189
        %1702 = vst [vmem:[%s234 + $0xd80] sm:$0xff] %v1190
        %1703 = vst [vmem:[%s234 + $0xd88] sm:$0xff] %v1191
        %1704 = vst [vmem:[%s234 + $0xd90] sm:$0xff] %v1192
        %1705 = vst [vmem:[%s234 + $0xd98] sm:$0xff] %v1193
        %1706 = vst [vmem:[%s234 + $0xda0] sm:$0xff] %v1194
        %1707 = vst [vmem:[%s234 + $0xda8] sm:$0xff] %v1195
        %1708 = vst [vmem:[%s234 + $0xdb0] sm:$0xff] %v1196
        %1709 = vst [vmem:[%s234 + $0xdb8] sm:$0xff] %v1197
        %1710 = vst [vmem:[%s234 + $0xdc0] sm:$0xff] %v1198
        %1711 = vst [vmem:[%s234 + $0xdc8] sm:$0xff] %v1199
        %1712 = vst [vmem:[%s234 + $0xdd0] sm:$0xff] %v1200
        %1713 = vst [vmem:[%s234 + $0xdd8] sm:$0xff] %v1201
        %1714 = vst [vmem:[%s234 + $0xde0] sm:$0xff] %v1202
        %1715 = vst [vmem:[%s234 + $0xde8] sm:$0xff] %v1203
        %1716 = vst [vmem:[%s234 + $0xdf0] sm:$0xff] %v1204
        %1717 = vst [vmem:[%s234 + $0xdf8] sm:$0xff] %v1205
        %1718 = vst [vmem:[%s234 + $0xe00] sm:$0xff] %v1206
        %1719 = vst [vmem:[%s234 + $0xe08] sm:$0xff] %v1207
        %1720 = vst [vmem:[%s234 + $0xe10] sm:$0xff] %v1208
        %1721 = vst [vmem:[%s234 + $0xe18] sm:$0xff] %v1209
        %1722 = vst [vmem:[%s234 + $0xe20] sm:$0xff] %v1210
        %1723 = vst [vmem:[%s234 + $0xe28] sm:$0xff] %v1211
        %1724 = vst [vmem:[%s234 + $0xe30] sm:$0xff] %v1212
        %1725 = vst [vmem:[%s234 + $0xe38] sm:$0xff] %v1213
        %1726 = vst [vmem:[%s234 + $0xe40] sm:$0xff] %v1214
        %1727 = vst [vmem:[%s234 + $0xe48] sm:$0xff] %v1215
        %1728 = vst [vmem:[%s234 + $0xe50] sm:$0xff] %v1216
        %1729 = vst [vmem:[%s234 + $0xe58] sm:$0xff] %v1217
        %1730 = vst [vmem:[%s234 + $0xe60] sm:$0xff] %v1218
        %1731 = vst [vmem:[%s234 + $0xe68] sm:$0xff] %v1219
        %1732 = vst [vmem:[%s234 + $0xe70] sm:$0xff] %v1220
        %1733 = vst [vmem:[%s234 + $0xe78] sm:$0xff] %v1221
        %1734 = vst [vmem:[%s234 + $0xe80] sm:$0xff] %v1222
        %1735 = vst [vmem:[%s234 + $0xe88] sm:$0xff] %v1223
        %1736 = vst [vmem:[%s234 + $0xe90] sm:$0xff] %v1224
        %1737 = vst [vmem:[%s234 + $0xe98] sm:$0xff] %v1225
        %1738 = vst [vmem:[%s234 + $0xea0] sm:$0xff] %v1226
        %1739 = vst [vmem:[%s234 + $0xea8] sm:$0xff] %v1227
        %1740 = vst [vmem:[%s234 + $0xeb0] sm:$0xff] %v1228
        %1741 = vst [vmem:[%s234 + $0xeb8] sm:$0xff] %v1229
        %1742 = vst [vmem:[%s234 + $0xec0] sm:$0xff] %v1230
        %1743 = vst [vmem:[%s234 + $0xec8] sm:$0xff] %v1231
        %1744 = vst [vmem:[%s234 + $0xed0] sm:$0xff] %v1232
        %1745 = vst [vmem:[%s234 + $0xed8] sm:$0xff] %v1233
        %1746 = vst [vmem:[%s234 + $0xee0] sm:$0xff] %v1234
        %1747 = vst [vmem:[%s234 + $0xee8] sm:$0xff] %v1235
        %1748 = vst [vmem:[%s234 + $0xef0] sm:$0xff] %v1236
        %1749 = vst [vmem:[%s234 + $0xef8] sm:$0xff] %v1237
        %1750 = vst [vmem:[%s234 + $0xf00] sm:$0xff] %v1238
        %1751 = vst [vmem:[%s234 + $0xf08] sm:$0xff] %v1239
        %1752 = vst [vmem:[%s234 + $0xf10] sm:$0xff] %v1240
        %1753 = vst [vmem:[%s234 + $0xf18] sm:$0xff] %v1241
        %1754 = vst [vmem:[%s234 + $0xf20] sm:$0xff] %v1242
        %1755 = vst [vmem:[%s234 + $0xf28] sm:$0xff] %v1243
        %1756 = vst [vmem:[%s234 + $0xf30] sm:$0xff] %v1244
        %1757 = vst [vmem:[%s234 + $0xf38] sm:$0xff] %v1245
        %1758 = vst [vmem:[%s234 + $0xf40] sm:$0xff] %v1246
        %1759 = vst [vmem:[%s234 + $0xf48] sm:$0xff] %v1247
        %1760 = vst [vmem:[%s234 + $0xf50] sm:$0xff] %v1248
        %1761 = vst [vmem:[%s234 + $0xf58] sm:$0xff] %v1249
        %1762 = vst [vmem:[%s234 + $0xf60] sm:$0xff] %v1250
        %1763 = vst [vmem:[%s234 + $0xf68] sm:$0xff] %v1251
        %1764 = vst [vmem:[%s234 + $0xf70] sm:$0xff] %v1252
        %1765 = vst [vmem:[%s234 + $0xf78] sm:$0xff] %v1253
        %1766 = vst [vmem:[%s234 + $0xf80] sm:$0xff] %v1254
        %1767 = vst [vmem:[%s234 + $0xf88] sm:$0xff] %v1255
        %1768 = vst [vmem:[%s234 + $0xf90] sm:$0xff] %v1256
        %1769 = vst [vmem:[%s234 + $0xf98] sm:$0xff] %v1257
        %1770 = vst [vmem:[%s234 + $0xfa0] sm:$0xff] %v1258
        %1771 = vst [vmem:[%s234 + $0xfa8] sm:$0xff] %v1259
        %1772 = vst [vmem:[%s234 + $0xfb0] sm:$0xff] %v1260
        %1773 = vst [vmem:[%s234 + $0xfb8] sm:$0xff] %v1261
        %1774 = vst [vmem:[%s234 + $0xfc0] sm:$0xff] %v1262
        %1775 = vst [vmem:[%s234 + $0xfc8] sm:$0xff] %v1263
        %1776 = vst [vmem:[%s234 + $0xfd0] sm:$0xff] %v1264
        %1777 = vst [vmem:[%s234 + $0xfd8] sm:$0xff] %v1265
        %1778 = vst [vmem:[%s234 + $0xfe0] sm:$0xff] %v1266
        %1779 = vst [vmem:[%s234 + $0xfe8] sm:$0xff] %v1267
        %1780 = vst [vmem:[%s234 + $0xff0] sm:$0xff] %v1268
        %1781 = vst [vmem:[%s234 + $0xff8] sm:$0xff] %v1269
        %v1782 = vld [vmem:[%s209] sm:$0xff]
        %v1783 = vld [vmem:[%s209 + $0x8] sm:$0xff]
        %v1784 = vld [vmem:[%s209 + $0x10] sm:$0xff]
        %v1785 = vld [vmem:[%s209 + $0x18] sm:$0xff]
        %v1786 = vld [vmem:[%s209 + $0x20] sm:$0xff]
        %v1787 = vld [vmem:[%s209 + $0x28] sm:$0xff]
        %v1788 = vld [vmem:[%s209 + $0x30] sm:$0xff]
        %v1789 = vld [vmem:[%s209 + $0x38] sm:$0xff]
        %v1790 = vld [vmem:[%s209 + $0x40] sm:$0xff]
        %v1791 = vld [vmem:[%s209 + $0x48] sm:$0xff]
        %v1792 = vld [vmem:[%s209 + $0x50] sm:$0xff]
        %v1793 = vld [vmem:[%s209 + $0x58] sm:$0xff]
        %v1794 = vld [vmem:[%s209 + $0x60] sm:$0xff]
        %v1795 = vld [vmem:[%s209 + $0x68] sm:$0xff]
        %v1796 = vld [vmem:[%s209 + $0x70] sm:$0xff]
        %v1797 = vld [vmem:[%s209 + $0x78] sm:$0xff]
        %v1798 = vld [vmem:[%s209 + $0x80] sm:$0xff]
        %v1799 = vld [vmem:[%s209 + $0x88] sm:$0xff]
        %v1800 = vld [vmem:[%s209 + $0x90] sm:$0xff]
        %v1801 = vld [vmem:[%s209 + $0x98] sm:$0xff]
        %v1802 = vld [vmem:[%s209 + $0xa0] sm:$0xff]
        %v1803 = vld [vmem:[%s209 + $0xa8] sm:$0xff]
        %v1804 = vld [vmem:[%s209 + $0xb0] sm:$0xff]
        %v1805 = vld [vmem:[%s209 + $0xb8] sm:$0xff]
        %v1806 = vld [vmem:[%s209 + $0xc0] sm:$0xff]
        %v1807 = vld [vmem:[%s209 + $0xc8] sm:$0xff]
        %v1808 = vld [vmem:[%s209 + $0xd0] sm:$0xff]
        %v1809 = vld [vmem:[%s209 + $0xd8] sm:$0xff]
        %v1810 = vld [vmem:[%s209 + $0xe0] sm:$0xff]
        %v1811 = vld [vmem:[%s209 + $0xe8] sm:$0xff]
        %v1812 = vld [vmem:[%s209 + $0xf0] sm:$0xff]
        %v1813 = vld [vmem:[%s209 + $0xf8] sm:$0xff]
        %v1814 = vld [vmem:[%s209 + $0x100] sm:$0xff]
        %v1815 = vld [vmem:[%s209 + $0x108] sm:$0xff]
        %v1816 = vld [vmem:[%s209 + $0x110] sm:$0xff]
        %v1817 = vld [vmem:[%s209 + $0x118] sm:$0xff]
        %v1818 = vld [vmem:[%s209 + $0x120] sm:$0xff]
        %v1819 = vld [vmem:[%s209 + $0x128] sm:$0xff]
        %v1820 = vld [vmem:[%s209 + $0x130] sm:$0xff]
        %v1821 = vld [vmem:[%s209 + $0x138] sm:$0xff]
        %v1822 = vld [vmem:[%s209 + $0x140] sm:$0xff]
        %v1823 = vld [vmem:[%s209 + $0x148] sm:$0xff]
        %v1824 = vld [vmem:[%s209 + $0x150] sm:$0xff]
        %v1825 = vld [vmem:[%s209 + $0x158] sm:$0xff]
        %v1826 = vld [vmem:[%s209 + $0x160] sm:$0xff]
        %v1827 = vld [vmem:[%s209 + $0x168] sm:$0xff]
        %v1828 = vld [vmem:[%s209 + $0x170] sm:$0xff]
        %v1829 = vld [vmem:[%s209 + $0x178] sm:$0xff]
        %v1830 = vld [vmem:[%s209 + $0x180] sm:$0xff]
        %v1831 = vld [vmem:[%s209 + $0x188] sm:$0xff]
        %v1832 = vld [vmem:[%s209 + $0x190] sm:$0xff]
        %v1833 = vld [vmem:[%s209 + $0x198] sm:$0xff]
        %v1834 = vld [vmem:[%s209 + $0x1a0] sm:$0xff]
        %v1835 = vld [vmem:[%s209 + $0x1a8] sm:$0xff]
        %v1836 = vld [vmem:[%s209 + $0x1b0] sm:$0xff]
        %v1837 = vld [vmem:[%s209 + $0x1b8] sm:$0xff]
        %v1838 = vld [vmem:[%s209 + $0x1c0] sm:$0xff]
        %v1839 = vld [vmem:[%s209 + $0x1c8] sm:$0xff]
        %v1840 = vld [vmem:[%s209 + $0x1d0] sm:$0xff]
        %v1841 = vld [vmem:[%s209 + $0x1d8] sm:$0xff]
        %v1842 = vld [vmem:[%s209 + $0x1e0] sm:$0xff]
        %v1843 = vld [vmem:[%s209 + $0x1e8] sm:$0xff]
        %v1844 = vld [vmem:[%s209 + $0x1f0] sm:$0xff]
        %v1845 = vld [vmem:[%s209 + $0x1f8] sm:$0xff]
        %v1846 = vld [vmem:[%s209 + $0x200] sm:$0xff]
        %v1847 = vld [vmem:[%s209 + $0x208] sm:$0xff]
        %v1848 = vld [vmem:[%s209 + $0x210] sm:$0xff]
        %v1849 = vld [vmem:[%s209 + $0x218] sm:$0xff]
        %v1850 = vld [vmem:[%s209 + $0x220] sm:$0xff]
        %v1851 = vld [vmem:[%s209 + $0x228] sm:$0xff]
        %v1852 = vld [vmem:[%s209 + $0x230] sm:$0xff]
        %v1853 = vld [vmem:[%s209 + $0x238] sm:$0xff]
        %v1854 = vld [vmem:[%s209 + $0x240] sm:$0xff]
        %v1855 = vld [vmem:[%s209 + $0x248] sm:$0xff]
        %v1856 = vld [vmem:[%s209 + $0x250] sm:$0xff]
        %v1857 = vld [vmem:[%s209 + $0x258] sm:$0xff]
        %v1858 = vld [vmem:[%s209 + $0x260] sm:$0xff]
        %v1859 = vld [vmem:[%s209 + $0x268] sm:$0xff]
        %v1860 = vld [vmem:[%s209 + $0x270] sm:$0xff]
        %v1861 = vld [vmem:[%s209 + $0x278] sm:$0xff]
        %v1862 = vld [vmem:[%s209 + $0x280] sm:$0xff]
        %v1863 = vld [vmem:[%s209 + $0x288] sm:$0xff]
        %v1864 = vld [vmem:[%s209 + $0x290] sm:$0xff]
        %v1865 = vld [vmem:[%s209 + $0x298] sm:$0xff]
        %v1866 = vld [vmem:[%s209 + $0x2a0] sm:$0xff]
        %v1867 = vld [vmem:[%s209 + $0x2a8] sm:$0xff]
        %v1868 = vld [vmem:[%s209 + $0x2b0] sm:$0xff]
        %v1869 = vld [vmem:[%s209 + $0x2b8] sm:$0xff]
        %v1870 = vld [vmem:[%s209 + $0x2c0] sm:$0xff]
        %v1871 = vld [vmem:[%s209 + $0x2c8] sm:$0xff]
        %v1872 = vld [vmem:[%s209 + $0x2d0] sm:$0xff]
        %v1873 = vld [vmem:[%s209 + $0x2d8] sm:$0xff]
        %v1874 = vld [vmem:[%s209 + $0x2e0] sm:$0xff]
        %v1875 = vld [vmem:[%s209 + $0x2e8] sm:$0xff]
        %v1876 = vld [vmem:[%s209 + $0x2f0] sm:$0xff]
        %v1877 = vld [vmem:[%s209 + $0x2f8] sm:$0xff]
        %v1878 = vld [vmem:[%s209 + $0x300] sm:$0xff]
        %v1879 = vld [vmem:[%s209 + $0x308] sm:$0xff]
        %v1880 = vld [vmem:[%s209 + $0x310] sm:$0xff]
        %v1881 = vld [vmem:[%s209 + $0x318] sm:$0xff]
        %v1882 = vld [vmem:[%s209 + $0x320] sm:$0xff]
        %v1883 = vld [vmem:[%s209 + $0x328] sm:$0xff]
        %v1884 = vld [vmem:[%s209 + $0x330] sm:$0xff]
        %v1885 = vld [vmem:[%s209 + $0x338] sm:$0xff]
        %v1886 = vld [vmem:[%s209 + $0x340] sm:$0xff]
        %v1887 = vld [vmem:[%s209 + $0x348] sm:$0xff]
        %v1888 = vld [vmem:[%s209 + $0x350] sm:$0xff]
        %v1889 = vld [vmem:[%s209 + $0x358] sm:$0xff]
        %v1890 = vld [vmem:[%s209 + $0x360] sm:$0xff]
        %v1891 = vld [vmem:[%s209 + $0x368] sm:$0xff]
        %v1892 = vld [vmem:[%s209 + $0x370] sm:$0xff]
        %v1893 = vld [vmem:[%s209 + $0x378] sm:$0xff]
        %v1894 = vld [vmem:[%s209 + $0x380] sm:$0xff]
        %v1895 = vld [vmem:[%s209 + $0x388] sm:$0xff]
        %v1896 = vld [vmem:[%s209 + $0x390] sm:$0xff]
        %v1897 = vld [vmem:[%s209 + $0x398] sm:$0xff]
        %v1898 = vld [vmem:[%s209 + $0x3a0] sm:$0xff]
        %v1899 = vld [vmem:[%s209 + $0x3a8] sm:$0xff]
        %v1900 = vld [vmem:[%s209 + $0x3b0] sm:$0xff]
        %v1901 = vld [vmem:[%s209 + $0x3b8] sm:$0xff]
        %v1902 = vld [vmem:[%s209 + $0x3c0] sm:$0xff]
        %v1903 = vld [vmem:[%s209 + $0x3c8] sm:$0xff]
        %v1904 = vld [vmem:[%s209 + $0x3d0] sm:$0xff]
        %v1905 = vld [vmem:[%s209 + $0x3d8] sm:$0xff]
        %v1906 = vld [vmem:[%s209 + $0x3e0] sm:$0xff]
        %v1907 = vld [vmem:[%s209 + $0x3e8] sm:$0xff]
        %v1908 = vld [vmem:[%s209 + $0x3f0] sm:$0xff]
        %v1909 = vld [vmem:[%s209 + $0x3f8] sm:$0xff]
        %v1910 = vld [vmem:[%s209 + $0x400] sm:$0xff]
        %v1911 = vld [vmem:[%s209 + $0x408] sm:$0xff]
        %v1912 = vld [vmem:[%s209 + $0x410] sm:$0xff]
        %v1913 = vld [vmem:[%s209 + $0x418] sm:$0xff]
        %v1914 = vld [vmem:[%s209 + $0x420] sm:$0xff]
        %v1915 = vld [vmem:[%s209 + $0x428] sm:$0xff]
        %v1916 = vld [vmem:[%s209 + $0x430] sm:$0xff]
        %v1917 = vld [vmem:[%s209 + $0x438] sm:$0xff]
        %v1918 = vld [vmem:[%s209 + $0x440] sm:$0xff]
        %v1919 = vld [vmem:[%s209 + $0x448] sm:$0xff]
        %v1920 = vld [vmem:[%s209 + $0x450] sm:$0xff]
        %v1921 = vld [vmem:[%s209 + $0x458] sm:$0xff]
        %v1922 = vld [vmem:[%s209 + $0x460] sm:$0xff]
        %v1923 = vld [vmem:[%s209 + $0x468] sm:$0xff]
        %v1924 = vld [vmem:[%s209 + $0x470] sm:$0xff]
        %v1925 = vld [vmem:[%s209 + $0x478] sm:$0xff]
        %v1926 = vld [vmem:[%s209 + $0x480] sm:$0xff]
        %v1927 = vld [vmem:[%s209 + $0x488] sm:$0xff]
        %v1928 = vld [vmem:[%s209 + $0x490] sm:$0xff]
        %v1929 = vld [vmem:[%s209 + $0x498] sm:$0xff]
        %v1930 = vld [vmem:[%s209 + $0x4a0] sm:$0xff]
        %v1931 = vld [vmem:[%s209 + $0x4a8] sm:$0xff]
        %v1932 = vld [vmem:[%s209 + $0x4b0] sm:$0xff]
        %v1933 = vld [vmem:[%s209 + $0x4b8] sm:$0xff]
        %v1934 = vld [vmem:[%s209 + $0x4c0] sm:$0xff]
        %v1935 = vld [vmem:[%s209 + $0x4c8] sm:$0xff]
        %v1936 = vld [vmem:[%s209 + $0x4d0] sm:$0xff]
        %v1937 = vld [vmem:[%s209 + $0x4d8] sm:$0xff]
        %v1938 = vld [vmem:[%s209 + $0x4e0] sm:$0xff]
        %v1939 = vld [vmem:[%s209 + $0x4e8] sm:$0xff]
        %v1940 = vld [vmem:[%s209 + $0x4f0] sm:$0xff]
        %v1941 = vld [vmem:[%s209 + $0x4f8] sm:$0xff]
        %v1942 = vld [vmem:[%s209 + $0x500] sm:$0xff]
        %v1943 = vld [vmem:[%s209 + $0x508] sm:$0xff]
        %v1944 = vld [vmem:[%s209 + $0x510] sm:$0xff]
        %v1945 = vld [vmem:[%s209 + $0x518] sm:$0xff]
        %v1946 = vld [vmem:[%s209 + $0x520] sm:$0xff]
        %v1947 = vld [vmem:[%s209 + $0x528] sm:$0xff]
        %v1948 = vld [vmem:[%s209 + $0x530] sm:$0xff]
        %v1949 = vld [vmem:[%s209 + $0x538] sm:$0xff]
        %v1950 = vld [vmem:[%s209 + $0x540] sm:$0xff]
        %v1951 = vld [vmem:[%s209 + $0x548] sm:$0xff]
        %v1952 = vld [vmem:[%s209 + $0x550] sm:$0xff]
        %v1953 = vld [vmem:[%s209 + $0x558] sm:$0xff]
        %v1954 = vld [vmem:[%s209 + $0x560] sm:$0xff]
        %v1955 = vld [vmem:[%s209 + $0x568] sm:$0xff]
        %v1956 = vld [vmem:[%s209 + $0x570] sm:$0xff]
        %v1957 = vld [vmem:[%s209 + $0x578] sm:$0xff]
        %v1958 = vld [vmem:[%s209 + $0x580] sm:$0xff]
        %v1959 = vld [vmem:[%s209 + $0x588] sm:$0xff]
        %v1960 = vld [vmem:[%s209 + $0x590] sm:$0xff]
        %v1961 = vld [vmem:[%s209 + $0x598] sm:$0xff]
        %v1962 = vld [vmem:[%s209 + $0x5a0] sm:$0xff]
        %v1963 = vld [vmem:[%s209 + $0x5a8] sm:$0xff]
        %v1964 = vld [vmem:[%s209 + $0x5b0] sm:$0xff]
        %v1965 = vld [vmem:[%s209 + $0x5b8] sm:$0xff]
        %v1966 = vld [vmem:[%s209 + $0x5c0] sm:$0xff]
        %v1967 = vld [vmem:[%s209 + $0x5c8] sm:$0xff]
        %v1968 = vld [vmem:[%s209 + $0x5d0] sm:$0xff]
        %v1969 = vld [vmem:[%s209 + $0x5d8] sm:$0xff]
        %v1970 = vld [vmem:[%s209 + $0x5e0] sm:$0xff]
        %v1971 = vld [vmem:[%s209 + $0x5e8] sm:$0xff]
        %v1972 = vld [vmem:[%s209 + $0x5f0] sm:$0xff]
        %v1973 = vld [vmem:[%s209 + $0x5f8] sm:$0xff]
        %v1974 = vld [vmem:[%s209 + $0x600] sm:$0xff]
        %v1975 = vld [vmem:[%s209 + $0x608] sm:$0xff]
        %v1976 = vld [vmem:[%s209 + $0x610] sm:$0xff]
        %v1977 = vld [vmem:[%s209 + $0x618] sm:$0xff]
        %v1978 = vld [vmem:[%s209 + $0x620] sm:$0xff]
        %v1979 = vld [vmem:[%s209 + $0x628] sm:$0xff]
        %v1980 = vld [vmem:[%s209 + $0x630] sm:$0xff]
        %v1981 = vld [vmem:[%s209 + $0x638] sm:$0xff]
        %v1982 = vld [vmem:[%s209 + $0x640] sm:$0xff]
        %v1983 = vld [vmem:[%s209 + $0x648] sm:$0xff]
        %v1984 = vld [vmem:[%s209 + $0x650] sm:$0xff]
        %v1985 = vld [vmem:[%s209 + $0x658] sm:$0xff]
        %v1986 = vld [vmem:[%s209 + $0x660] sm:$0xff]
        %v1987 = vld [vmem:[%s209 + $0x668] sm:$0xff]
        %v1988 = vld [vmem:[%s209 + $0x670] sm:$0xff]
        %v1989 = vld [vmem:[%s209 + $0x678] sm:$0xff]
        %v1990 = vld [vmem:[%s209 + $0x680] sm:$0xff]
        %v1991 = vld [vmem:[%s209 + $0x688] sm:$0xff]
        %v1992 = vld [vmem:[%s209 + $0x690] sm:$0xff]
        %v1993 = vld [vmem:[%s209 + $0x698] sm:$0xff]
        %v1994 = vld [vmem:[%s209 + $0x6a0] sm:$0xff]
        %v1995 = vld [vmem:[%s209 + $0x6a8] sm:$0xff]
        %v1996 = vld [vmem:[%s209 + $0x6b0] sm:$0xff]
        %v1997 = vld [vmem:[%s209 + $0x6b8] sm:$0xff]
        %v1998 = vld [vmem:[%s209 + $0x6c0] sm:$0xff]
        %v1999 = vld [vmem:[%s209 + $0x6c8] sm:$0xff]
        %v2000 = vld [vmem:[%s209 + $0x6d0] sm:$0xff]
        %v2001 = vld [vmem:[%s209 + $0x6d8] sm:$0xff]
        %v2002 = vld [vmem:[%s209 + $0x6e0] sm:$0xff]
        %v2003 = vld [vmem:[%s209 + $0x6e8] sm:$0xff]
        %v2004 = vld [vmem:[%s209 + $0x6f0] sm:$0xff]
        %v2005 = vld [vmem:[%s209 + $0x6f8] sm:$0xff]
        %v2006 = vld [vmem:[%s209 + $0x700] sm:$0xff]
        %v2007 = vld [vmem:[%s209 + $0x708] sm:$0xff]
        %v2008 = vld [vmem:[%s209 + $0x710] sm:$0xff]
        %v2009 = vld [vmem:[%s209 + $0x718] sm:$0xff]
        %v2010 = vld [vmem:[%s209 + $0x720] sm:$0xff]
        %v2011 = vld [vmem:[%s209 + $0x728] sm:$0xff]
        %v2012 = vld [vmem:[%s209 + $0x730] sm:$0xff]
        %v2013 = vld [vmem:[%s209 + $0x738] sm:$0xff]
        %v2014 = vld [vmem:[%s209 + $0x740] sm:$0xff]
        %v2015 = vld [vmem:[%s209 + $0x748] sm:$0xff]
        %v2016 = vld [vmem:[%s209 + $0x750] sm:$0xff]
        %v2017 = vld [vmem:[%s209 + $0x758] sm:$0xff]
        %v2018 = vld [vmem:[%s209 + $0x760] sm:$0xff]
        %v2019 = vld [vmem:[%s209 + $0x768] sm:$0xff]
        %v2020 = vld [vmem:[%s209 + $0x770] sm:$0xff]
        %v2021 = vld [vmem:[%s209 + $0x778] sm:$0xff]
        %v2022 = vld [vmem:[%s209 + $0x780] sm:$0xff]
        %v2023 = vld [vmem:[%s209 + $0x788] sm:$0xff]
        %v2024 = vld [vmem:[%s209 + $0x790] sm:$0xff]
        %v2025 = vld [vmem:[%s209 + $0x798] sm:$0xff]
        %v2026 = vld [vmem:[%s209 + $0x7a0] sm:$0xff]
        %v2027 = vld [vmem:[%s209 + $0x7a8] sm:$0xff]
        %v2028 = vld [vmem:[%s209 + $0x7b0] sm:$0xff]
        %v2029 = vld [vmem:[%s209 + $0x7b8] sm:$0xff]
        %v2030 = vld [vmem:[%s209 + $0x7c0] sm:$0xff]
        %v2031 = vld [vmem:[%s209 + $0x7c8] sm:$0xff]
        %v2032 = vld [vmem:[%s209 + $0x7d0] sm:$0xff]
        %v2033 = vld [vmem:[%s209 + $0x7d8] sm:$0xff]
        %v2034 = vld [vmem:[%s209 + $0x7e0] sm:$0xff]
        %v2035 = vld [vmem:[%s209 + $0x7e8] sm:$0xff]
        %v2036 = vld [vmem:[%s209 + $0x7f0] sm:$0xff]
        %v2037 = vld [vmem:[%s209 + $0x7f8] sm:$0xff]
        %v2038 = vld [vmem:[%s209 + $0x800] sm:$0xff]
        %v2039 = vld [vmem:[%s209 + $0x808] sm:$0xff]
        %v2040 = vld [vmem:[%s209 + $0x810] sm:$0xff]
        %v2041 = vld [vmem:[%s209 + $0x818] sm:$0xff]
        %v2042 = vld [vmem:[%s209 + $0x820] sm:$0xff]
        %v2043 = vld [vmem:[%s209 + $0x828] sm:$0xff]
        %v2044 = vld [vmem:[%s209 + $0x830] sm:$0xff]
        %v2045 = vld [vmem:[%s209 + $0x838] sm:$0xff]
        %v2046 = vld [vmem:[%s209 + $0x840] sm:$0xff]
        %v2047 = vld [vmem:[%s209 + $0x848] sm:$0xff]
        %v2048 = vld [vmem:[%s209 + $0x850] sm:$0xff]
        %v2049 = vld [vmem:[%s209 + $0x858] sm:$0xff]
        %v2050 = vld [vmem:[%s209 + $0x860] sm:$0xff]
        %v2051 = vld [vmem:[%s209 + $0x868] sm:$0xff]
        %v2052 = vld [vmem:[%s209 + $0x870] sm:$0xff]
        %v2053 = vld [vmem:[%s209 + $0x878] sm:$0xff]
        %v2054 = vld [vmem:[%s209 + $0x880] sm:$0xff]
        %v2055 = vld [vmem:[%s209 + $0x888] sm:$0xff]
        %v2056 = vld [vmem:[%s209 + $0x890] sm:$0xff]
        %v2057 = vld [vmem:[%s209 + $0x898] sm:$0xff]
        %v2058 = vld [vmem:[%s209 + $0x8a0] sm:$0xff]
        %v2059 = vld [vmem:[%s209 + $0x8a8] sm:$0xff]
        %v2060 = vld [vmem:[%s209 + $0x8b0] sm:$0xff]
        %v2061 = vld [vmem:[%s209 + $0x8b8] sm:$0xff]
        %v2062 = vld [vmem:[%s209 + $0x8c0] sm:$0xff]
        %v2063 = vld [vmem:[%s209 + $0x8c8] sm:$0xff]
        %v2064 = vld [vmem:[%s209 + $0x8d0] sm:$0xff]
        %v2065 = vld [vmem:[%s209 + $0x8d8] sm:$0xff]
        %v2066 = vld [vmem:[%s209 + $0x8e0] sm:$0xff]
        %v2067 = vld [vmem:[%s209 + $0x8e8] sm:$0xff]
        %v2068 = vld [vmem:[%s209 + $0x8f0] sm:$0xff]
        %v2069 = vld [vmem:[%s209 + $0x8f8] sm:$0xff]
        %v2070 = vld [vmem:[%s209 + $0x900] sm:$0xff]
        %v2071 = vld [vmem:[%s209 + $0x908] sm:$0xff]
        %v2072 = vld [vmem:[%s209 + $0x910] sm:$0xff]
        %v2073 = vld [vmem:[%s209 + $0x918] sm:$0xff]
        %v2074 = vld [vmem:[%s209 + $0x920] sm:$0xff]
        %v2075 = vld [vmem:[%s209 + $0x928] sm:$0xff]
        %v2076 = vld [vmem:[%s209 + $0x930] sm:$0xff]
        %v2077 = vld [vmem:[%s209 + $0x938] sm:$0xff]
        %v2078 = vld [vmem:[%s209 + $0x940] sm:$0xff]
        %v2079 = vld [vmem:[%s209 + $0x948] sm:$0xff]
        %v2080 = vld [vmem:[%s209 + $0x950] sm:$0xff]
        %v2081 = vld [vmem:[%s209 + $0x958] sm:$0xff]
        %v2082 = vld [vmem:[%s209 + $0x960] sm:$0xff]
        %v2083 = vld [vmem:[%s209 + $0x968] sm:$0xff]
        %v2084 = vld [vmem:[%s209 + $0x970] sm:$0xff]
        %v2085 = vld [vmem:[%s209 + $0x978] sm:$0xff]
        %v2086 = vld [vmem:[%s209 + $0x980] sm:$0xff]
        %v2087 = vld [vmem:[%s209 + $0x988] sm:$0xff]
        %v2088 = vld [vmem:[%s209 + $0x990] sm:$0xff]
        %v2089 = vld [vmem:[%s209 + $0x998] sm:$0xff]
        %v2090 = vld [vmem:[%s209 + $0x9a0] sm:$0xff]
        %v2091 = vld [vmem:[%s209 + $0x9a8] sm:$0xff]
        %v2092 = vld [vmem:[%s209 + $0x9b0] sm:$0xff]
        %v2093 = vld [vmem:[%s209 + $0x9b8] sm:$0xff]
        %v2094 = vld [vmem:[%s209 + $0x9c0] sm:$0xff]
        %v2095 = vld [vmem:[%s209 + $0x9c8] sm:$0xff]
        %v2096 = vld [vmem:[%s209 + $0x9d0] sm:$0xff]
        %v2097 = vld [vmem:[%s209 + $0x9d8] sm:$0xff]
        %v2098 = vld [vmem:[%s209 + $0x9e0] sm:$0xff]
        %v2099 = vld [vmem:[%s209 + $0x9e8] sm:$0xff]
        %v2100 = vld [vmem:[%s209 + $0x9f0] sm:$0xff]
        %v2101 = vld [vmem:[%s209 + $0x9f8] sm:$0xff]
        %v2102 = vld [vmem:[%s209 + $0xa00] sm:$0xff]
        %v2103 = vld [vmem:[%s209 + $0xa08] sm:$0xff]
        %v2104 = vld [vmem:[%s209 + $0xa10] sm:$0xff]
        %v2105 = vld [vmem:[%s209 + $0xa18] sm:$0xff]
        %v2106 = vld [vmem:[%s209 + $0xa20] sm:$0xff]
        %v2107 = vld [vmem:[%s209 + $0xa28] sm:$0xff]
        %v2108 = vld [vmem:[%s209 + $0xa30] sm:$0xff]
        %v2109 = vld [vmem:[%s209 + $0xa38] sm:$0xff]
        %v2110 = vld [vmem:[%s209 + $0xa40] sm:$0xff]
        %v2111 = vld [vmem:[%s209 + $0xa48] sm:$0xff]
        %v2112 = vld [vmem:[%s209 + $0xa50] sm:$0xff]
        %v2113 = vld [vmem:[%s209 + $0xa58] sm:$0xff]
        %v2114 = vld [vmem:[%s209 + $0xa60] sm:$0xff]
        %v2115 = vld [vmem:[%s209 + $0xa68] sm:$0xff]
        %v2116 = vld [vmem:[%s209 + $0xa70] sm:$0xff]
        %v2117 = vld [vmem:[%s209 + $0xa78] sm:$0xff]
        %v2118 = vld [vmem:[%s209 + $0xa80] sm:$0xff]
        %v2119 = vld [vmem:[%s209 + $0xa88] sm:$0xff]
        %v2120 = vld [vmem:[%s209 + $0xa90] sm:$0xff]
        %v2121 = vld [vmem:[%s209 + $0xa98] sm:$0xff]
        %v2122 = vld [vmem:[%s209 + $0xaa0] sm:$0xff]
        %v2123 = vld [vmem:[%s209 + $0xaa8] sm:$0xff]
        %v2124 = vld [vmem:[%s209 + $0xab0] sm:$0xff]
        %v2125 = vld [vmem:[%s209 + $0xab8] sm:$0xff]
        %v2126 = vld [vmem:[%s209 + $0xac0] sm:$0xff]
        %v2127 = vld [vmem:[%s209 + $0xac8] sm:$0xff]
        %v2128 = vld [vmem:[%s209 + $0xad0] sm:$0xff]
        %v2129 = vld [vmem:[%s209 + $0xad8] sm:$0xff]
        %v2130 = vld [vmem:[%s209 + $0xae0] sm:$0xff]
        %v2131 = vld [vmem:[%s209 + $0xae8] sm:$0xff]
        %v2132 = vld [vmem:[%s209 + $0xaf0] sm:$0xff]
        %v2133 = vld [vmem:[%s209 + $0xaf8] sm:$0xff]
        %v2134 = vld [vmem:[%s209 + $0xb00] sm:$0xff]
        %v2135 = vld [vmem:[%s209 + $0xb08] sm:$0xff]
        %v2136 = vld [vmem:[%s209 + $0xb10] sm:$0xff]
        %v2137 = vld [vmem:[%s209 + $0xb18] sm:$0xff]
        %v2138 = vld [vmem:[%s209 + $0xb20] sm:$0xff]
        %v2139 = vld [vmem:[%s209 + $0xb28] sm:$0xff]
        %v2140 = vld [vmem:[%s209 + $0xb30] sm:$0xff]
        %v2141 = vld [vmem:[%s209 + $0xb38] sm:$0xff]
        %v2142 = vld [vmem:[%s209 + $0xb40] sm:$0xff]
        %v2143 = vld [vmem:[%s209 + $0xb48] sm:$0xff]
        %v2144 = vld [vmem:[%s209 + $0xb50] sm:$0xff]
        %v2145 = vld [vmem:[%s209 + $0xb58] sm:$0xff]
        %v2146 = vld [vmem:[%s209 + $0xb60] sm:$0xff]
        %v2147 = vld [vmem:[%s209 + $0xb68] sm:$0xff]
        %v2148 = vld [vmem:[%s209 + $0xb70] sm:$0xff]
        %v2149 = vld [vmem:[%s209 + $0xb78] sm:$0xff]
        %v2150 = vld [vmem:[%s209 + $0xb80] sm:$0xff]
        %v2151 = vld [vmem:[%s209 + $0xb88] sm:$0xff]
        %v2152 = vld [vmem:[%s209 + $0xb90] sm:$0xff]
        %v2153 = vld [vmem:[%s209 + $0xb98] sm:$0xff]
        %v2154 = vld [vmem:[%s209 + $0xba0] sm:$0xff]
        %v2155 = vld [vmem:[%s209 + $0xba8] sm:$0xff]
        %v2156 = vld [vmem:[%s209 + $0xbb0] sm:$0xff]
        %v2157 = vld [vmem:[%s209 + $0xbb8] sm:$0xff]
        %v2158 = vld [vmem:[%s209 + $0xbc0] sm:$0xff]
        %v2159 = vld [vmem:[%s209 + $0xbc8] sm:$0xff]
        %v2160 = vld [vmem:[%s209 + $0xbd0] sm:$0xff]
        %v2161 = vld [vmem:[%s209 + $0xbd8] sm:$0xff]
        %v2162 = vld [vmem:[%s209 + $0xbe0] sm:$0xff]
        %v2163 = vld [vmem:[%s209 + $0xbe8] sm:$0xff]
        %v2164 = vld [vmem:[%s209 + $0xbf0] sm:$0xff]
        %v2165 = vld [vmem:[%s209 + $0xbf8] sm:$0xff]
        %v2166 = vld [vmem:[%s209 + $0xc00] sm:$0xff]
        %v2167 = vld [vmem:[%s209 + $0xc08] sm:$0xff]
        %v2168 = vld [vmem:[%s209 + $0xc10] sm:$0xff]
        %v2169 = vld [vmem:[%s209 + $0xc18] sm:$0xff]
        %v2170 = vld [vmem:[%s209 + $0xc20] sm:$0xff]
        %v2171 = vld [vmem:[%s209 + $0xc28] sm:$0xff]
        %v2172 = vld [vmem:[%s209 + $0xc30] sm:$0xff]
        %v2173 = vld [vmem:[%s209 + $0xc38] sm:$0xff]
        %v2174 = vld [vmem:[%s209 + $0xc40] sm:$0xff]
        %v2175 = vld [vmem:[%s209 + $0xc48] sm:$0xff]
        %v2176 = vld [vmem:[%s209 + $0xc50] sm:$0xff]
        %v2177 = vld [vmem:[%s209 + $0xc58] sm:$0xff]
        %v2178 = vld [vmem:[%s209 + $0xc60] sm:$0xff]
        %v2179 = vld [vmem:[%s209 + $0xc68] sm:$0xff]
        %v2180 = vld [vmem:[%s209 + $0xc70] sm:$0xff]
        %v2181 = vld [vmem:[%s209 + $0xc78] sm:$0xff]
        %v2182 = vld [vmem:[%s209 + $0xc80] sm:$0xff]
        %v2183 = vld [vmem:[%s209 + $0xc88] sm:$0xff]
        %v2184 = vld [vmem:[%s209 + $0xc90] sm:$0xff]
        %v2185 = vld [vmem:[%s209 + $0xc98] sm:$0xff]
        %v2186 = vld [vmem:[%s209 + $0xca0] sm:$0xff]
        %v2187 = vld [vmem:[%s209 + $0xca8] sm:$0xff]
        %v2188 = vld [vmem:[%s209 + $0xcb0] sm:$0xff]
        %v2189 = vld [vmem:[%s209 + $0xcb8] sm:$0xff]
        %v2190 = vld [vmem:[%s209 + $0xcc0] sm:$0xff]
        %v2191 = vld [vmem:[%s209 + $0xcc8] sm:$0xff]
        %v2192 = vld [vmem:[%s209 + $0xcd0] sm:$0xff]
        %v2193 = vld [vmem:[%s209 + $0xcd8] sm:$0xff]
        %v2194 = vld [vmem:[%s209 + $0xce0] sm:$0xff]
        %v2195 = vld [vmem:[%s209 + $0xce8] sm:$0xff]
        %v2196 = vld [vmem:[%s209 + $0xcf0] sm:$0xff]
        %v2197 = vld [vmem:[%s209 + $0xcf8] sm:$0xff]
        %v2198 = vld [vmem:[%s209 + $0xd00] sm:$0xff]
        %v2199 = vld [vmem:[%s209 + $0xd08] sm:$0xff]
        %v2200 = vld [vmem:[%s209 + $0xd10] sm:$0xff]
        %v2201 = vld [vmem:[%s209 + $0xd18] sm:$0xff]
        %v2202 = vld [vmem:[%s209 + $0xd20] sm:$0xff]
        %v2203 = vld [vmem:[%s209 + $0xd28] sm:$0xff]
        %v2204 = vld [vmem:[%s209 + $0xd30] sm:$0xff]
        %v2205 = vld [vmem:[%s209 + $0xd38] sm:$0xff]
        %v2206 = vld [vmem:[%s209 + $0xd40] sm:$0xff]
        %v2207 = vld [vmem:[%s209 + $0xd48] sm:$0xff]
        %v2208 = vld [vmem:[%s209 + $0xd50] sm:$0xff]
        %v2209 = vld [vmem:[%s209 + $0xd58] sm:$0xff]
        %v2210 = vld [vmem:[%s209 + $0xd60] sm:$0xff]
        %v2211 = vld [vmem:[%s209 + $0xd68] sm:$0xff]
        %v2212 = vld [vmem:[%s209 + $0xd70] sm:$0xff]
        %v2213 = vld [vmem:[%s209 + $0xd78] sm:$0xff]
        %v2214 = vld [vmem:[%s209 + $0xd80] sm:$0xff]
        %v2215 = vld [vmem:[%s209 + $0xd88] sm:$0xff]
        %v2216 = vld [vmem:[%s209 + $0xd90] sm:$0xff]
        %v2217 = vld [vmem:[%s209 + $0xd98] sm:$0xff]
        %v2218 = vld [vmem:[%s209 + $0xda0] sm:$0xff]
        %v2219 = vld [vmem:[%s209 + $0xda8] sm:$0xff]
        %v2220 = vld [vmem:[%s209 + $0xdb0] sm:$0xff]
        %v2221 = vld [vmem:[%s209 + $0xdb8] sm:$0xff]
        %v2222 = vld [vmem:[%s209 + $0xdc0] sm:$0xff]
        %v2223 = vld [vmem:[%s209 + $0xdc8] sm:$0xff]
        %v2224 = vld [vmem:[%s209 + $0xdd0] sm:$0xff]
        %v2225 = vld [vmem:[%s209 + $0xdd8] sm:$0xff]
        %v2226 = vld [vmem:[%s209 + $0xde0] sm:$0xff]
        %v2227 = vld [vmem:[%s209 + $0xde8] sm:$0xff]
        %v2228 = vld [vmem:[%s209 + $0xdf0] sm:$0xff]
        %v2229 = vld [vmem:[%s209 + $0xdf8] sm:$0xff]
        %v2230 = vld [vmem:[%s209 + $0xe00] sm:$0xff]
        %v2231 = vld [vmem:[%s209 + $0xe08] sm:$0xff]
        %v2232 = vld [vmem:[%s209 + $0xe10] sm:$0xff]
        %v2233 = vld [vmem:[%s209 + $0xe18] sm:$0xff]
        %v2234 = vld [vmem:[%s209 + $0xe20] sm:$0xff]
        %v2235 = vld [vmem:[%s209 + $0xe28] sm:$0xff]
        %v2236 = vld [vmem:[%s209 + $0xe30] sm:$0xff]
        %v2237 = vld [vmem:[%s209 + $0xe38] sm:$0xff]
        %v2238 = vld [vmem:[%s209 + $0xe40] sm:$0xff]
        %v2239 = vld [vmem:[%s209 + $0xe48] sm:$0xff]
        %v2240 = vld [vmem:[%s209 + $0xe50] sm:$0xff]
        %v2241 = vld [vmem:[%s209 + $0xe58] sm:$0xff]
        %v2242 = vld [vmem:[%s209 + $0xe60] sm:$0xff]
        %v2243 = vld [vmem:[%s209 + $0xe68] sm:$0xff]
        %v2244 = vld [vmem:[%s209 + $0xe70] sm:$0xff]
        %v2245 = vld [vmem:[%s209 + $0xe78] sm:$0xff]
        %v2246 = vld [vmem:[%s209 + $0xe80] sm:$0xff]
        %v2247 = vld [vmem:[%s209 + $0xe88] sm:$0xff]
        %v2248 = vld [vmem:[%s209 + $0xe90] sm:$0xff]
        %v2249 = vld [vmem:[%s209 + $0xe98] sm:$0xff]
        %v2250 = vld [vmem:[%s209 + $0xea0] sm:$0xff]
        %v2251 = vld [vmem:[%s209 + $0xea8] sm:$0xff]
        %v2252 = vld [vmem:[%s209 + $0xeb0] sm:$0xff]
        %v2253 = vld [vmem:[%s209 + $0xeb8] sm:$0xff]
        %v2254 = vld [vmem:[%s209 + $0xec0] sm:$0xff]
        %v2255 = vld [vmem:[%s209 + $0xec8] sm:$0xff]
        %v2256 = vld [vmem:[%s209 + $0xed0] sm:$0xff]
        %v2257 = vld [vmem:[%s209 + $0xed8] sm:$0xff]
        %v2258 = vld [vmem:[%s209 + $0xee0] sm:$0xff]
        %v2259 = vld [vmem:[%s209 + $0xee8] sm:$0xff]
        %v2260 = vld [vmem:[%s209 + $0xef0] sm:$0xff]
        %v2261 = vld [vmem:[%s209 + $0xef8] sm:$0xff]
        %v2262 = vld [vmem:[%s209 + $0xf00] sm:$0xff]
        %v2263 = vld [vmem:[%s209 + $0xf08] sm:$0xff]
        %v2264 = vld [vmem:[%s209 + $0xf10] sm:$0xff]
        %v2265 = vld [vmem:[%s209 + $0xf18] sm:$0xff]
        %v2266 = vld [vmem:[%s209 + $0xf20] sm:$0xff]
        %v2267 = vld [vmem:[%s209 + $0xf28] sm:$0xff]
        %v2268 = vld [vmem:[%s209 + $0xf30] sm:$0xff]
        %v2269 = vld [vmem:[%s209 + $0xf38] sm:$0xff]
        %v2270 = vld [vmem:[%s209 + $0xf40] sm:$0xff]
        %v2271 = vld [vmem:[%s209 + $0xf48] sm:$0xff]
        %v2272 = vld [vmem:[%s209 + $0xf50] sm:$0xff]
        %v2273 = vld [vmem:[%s209 + $0xf58] sm:$0xff]
        %v2274 = vld [vmem:[%s209 + $0xf60] sm:$0xff]
        %v2275 = vld [vmem:[%s209 + $0xf68] sm:$0xff]
        %v2276 = vld [vmem:[%s209 + $0xf70] sm:$0xff]
        %v2277 = vld [vmem:[%s209 + $0xf78] sm:$0xff]
        %v2278 = vld [vmem:[%s209 + $0xf80] sm:$0xff]
        %v2279 = vld [vmem:[%s209 + $0xf88] sm:$0xff]
        %v2280 = vld [vmem:[%s209 + $0xf90] sm:$0xff]
        %v2281 = vld [vmem:[%s209 + $0xf98] sm:$0xff]
        %v2282 = vld [vmem:[%s209 + $0xfa0] sm:$0xff]
        %v2283 = vld [vmem:[%s209 + $0xfa8] sm:$0xff]
        %v2284 = vld [vmem:[%s209 + $0xfb0] sm:$0xff]
        %v2285 = vld [vmem:[%s209 + $0xfb8] sm:$0xff]
        %v2286 = vld [vmem:[%s209 + $0xfc0] sm:$0xff]
        %v2287 = vld [vmem:[%s209 + $0xfc8] sm:$0xff]
        %v2288 = vld [vmem:[%s209 + $0xfd0] sm:$0xff]
        %v2289 = vld [vmem:[%s209 + $0xfd8] sm:$0xff]
        %v2290 = vld [vmem:[%s209 + $0xfe0] sm:$0xff]
        %v2291 = vld [vmem:[%s209 + $0xfe8] sm:$0xff]
        %v2292 = vld [vmem:[%s209 + $0xff0] sm:$0xff]
        %v2293 = vld [vmem:[%s209 + $0xff8] sm:$0xff]
        %v2294 = vmax.f32 %v1782, 0.0
        %v2295 = vmax.f32 %v1783, 0.0
        %v2296 = vmax.f32 %v1784, 0.0
        %v2297 = vmax.f32 %v1785, 0.0
        %v2298 = vmax.f32 %v1786, 0.0
        %v2299 = vmax.f32 %v1787, 0.0
        %v2300 = vmax.f32 %v1788, 0.0
        %v2301 = vmax.f32 %v1789, 0.0
        %v2302 = vmax.f32 %v1790, 0.0
        %v2303 = vmax.f32 %v1791, 0.0
        %v2304 = vmax.f32 %v1792, 0.0
        %v2305 = vmax.f32 %v1793, 0.0
        %v2306 = vmax.f32 %v1794, 0.0
        %v2307 = vmax.f32 %v1795, 0.0
        %v2308 = vmax.f32 %v1796, 0.0
        %v2309 = vmax.f32 %v1797, 0.0
        %v2310 = vmax.f32 %v1798, 0.0
        %v2311 = vmax.f32 %v1799, 0.0
        %v2312 = vmax.f32 %v1800, 0.0
        %v2313 = vmax.f32 %v1801, 0.0
        %v2314 = vmax.f32 %v1802, 0.0
        %v2315 = vmax.f32 %v1803, 0.0
        %v2316 = vmax.f32 %v1804, 0.0
        %v2317 = vmax.f32 %v1805, 0.0
        %v2318 = vmax.f32 %v1806, 0.0
        %v2319 = vmax.f32 %v1807, 0.0
        %v2320 = vmax.f32 %v1808, 0.0
        %v2321 = vmax.f32 %v1809, 0.0
        %v2322 = vmax.f32 %v1810, 0.0
        %v2323 = vmax.f32 %v1811, 0.0
        %v2324 = vmax.f32 %v1812, 0.0
        %v2325 = vmax.f32 %v1813, 0.0
        %v2326 = vmax.f32 %v1814, 0.0
        %v2327 = vmax.f32 %v1815, 0.0
        %v2328 = vmax.f32 %v1816, 0.0
        %v2329 = vmax.f32 %v1817, 0.0
        %v2330 = vmax.f32 %v1818, 0.0
        %v2331 = vmax.f32 %v1819, 0.0
        %v2332 = vmax.f32 %v1820, 0.0
        %v2333 = vmax.f32 %v1821, 0.0
        %v2334 = vmax.f32 %v1822, 0.0
        %v2335 = vmax.f32 %v1823, 0.0
        %v2336 = vmax.f32 %v1824, 0.0
        %v2337 = vmax.f32 %v1825, 0.0
        %v2338 = vmax.f32 %v1826, 0.0
        %v2339 = vmax.f32 %v1827, 0.0
        %v2340 = vmax.f32 %v1828, 0.0
        %v2341 = vmax.f32 %v1829, 0.0
        %v2342 = vmax.f32 %v1830, 0.0
        %v2343 = vmax.f32 %v1831, 0.0
        %v2344 = vmax.f32 %v1832, 0.0
        %v2345 = vmax.f32 %v1833, 0.0
        %v2346 = vmax.f32 %v1834, 0.0
        %v2347 = vmax.f32 %v1835, 0.0
        %v2348 = vmax.f32 %v1836, 0.0
        %v2349 = vmax.f32 %v1837, 0.0
        %v2350 = vmax.f32 %v1838, 0.0
        %v2351 = vmax.f32 %v1839, 0.0
        %v2352 = vmax.f32 %v1840, 0.0
        %v2353 = vmax.f32 %v1841, 0.0
        %v2354 = vmax.f32 %v1842, 0.0
        %v2355 = vmax.f32 %v1843, 0.0
        %v2356 = vmax.f32 %v1844, 0.0
        %v2357 = vmax.f32 %v1845, 0.0
        %v2358 = vmax.f32 %v1846, 0.0
        %v2359 = vmax.f32 %v1847, 0.0
        %v2360 = vmax.f32 %v1848, 0.0
        %v2361 = vmax.f32 %v1849, 0.0
        %v2362 = vmax.f32 %v1850, 0.0
        %v2363 = vmax.f32 %v1851, 0.0
        %v2364 = vmax.f32 %v1852, 0.0
        %v2365 = vmax.f32 %v1853, 0.0
        %v2366 = vmax.f32 %v1854, 0.0
        %v2367 = vmax.f32 %v1855, 0.0
        %v2368 = vmax.f32 %v1856, 0.0
        %v2369 = vmax.f32 %v1857, 0.0
        %v2370 = vmax.f32 %v1858, 0.0
        %v2371 = vmax.f32 %v1859, 0.0
        %v2372 = vmax.f32 %v1860, 0.0
        %v2373 = vmax.f32 %v1861, 0.0
        %v2374 = vmax.f32 %v1862, 0.0
        %v2375 = vmax.f32 %v1863, 0.0
        %v2376 = vmax.f32 %v1864, 0.0
        %v2377 = vmax.f32 %v1865, 0.0
        %v2378 = vmax.f32 %v1866, 0.0
        %v2379 = vmax.f32 %v1867, 0.0
        %v2380 = vmax.f32 %v1868, 0.0
        %v2381 = vmax.f32 %v1869, 0.0
        %v2382 = vmax.f32 %v1870, 0.0
        %v2383 = vmax.f32 %v1871, 0.0
        %v2384 = vmax.f32 %v1872, 0.0
        %v2385 = vmax.f32 %v1873, 0.0
        %v2386 = vmax.f32 %v1874, 0.0
        %v2387 = vmax.f32 %v1875, 0.0
        %v2388 = vmax.f32 %v1876, 0.0
        %v2389 = vmax.f32 %v1877, 0.0
        %v2390 = vmax.f32 %v1878, 0.0
        %v2391 = vmax.f32 %v1879, 0.0
        %v2392 = vmax.f32 %v1880, 0.0
        %v2393 = vmax.f32 %v1881, 0.0
        %v2394 = vmax.f32 %v1882, 0.0
        %v2395 = vmax.f32 %v1883, 0.0
        %v2396 = vmax.f32 %v1884, 0.0
        %v2397 = vmax.f32 %v1885, 0.0
        %v2398 = vmax.f32 %v1886, 0.0
        %v2399 = vmax.f32 %v1887, 0.0
        %v2400 = vmax.f32 %v1888, 0.0
        %v2401 = vmax.f32 %v1889, 0.0
        %v2402 = vmax.f32 %v1890, 0.0
        %v2403 = vmax.f32 %v1891, 0.0
        %v2404 = vmax.f32 %v1892, 0.0
        %v2405 = vmax.f32 %v1893, 0.0
        %v2406 = vmax.f32 %v1894, 0.0
        %v2407 = vmax.f32 %v1895, 0.0
        %v2408 = vmax.f32 %v1896, 0.0
        %v2409 = vmax.f32 %v1897, 0.0
        %v2410 = vmax.f32 %v1898, 0.0
        %v2411 = vmax.f32 %v1899, 0.0
        %v2412 = vmax.f32 %v1900, 0.0
        %v2413 = vmax.f32 %v1901, 0.0
        %v2414 = vmax.f32 %v1902, 0.0
        %v2415 = vmax.f32 %v1903, 0.0
        %v2416 = vmax.f32 %v1904, 0.0
        %v2417 = vmax.f32 %v1905, 0.0
        %v2418 = vmax.f32 %v1906, 0.0
        %v2419 = vmax.f32 %v1907, 0.0
        %v2420 = vmax.f32 %v1908, 0.0
        %v2421 = vmax.f32 %v1909, 0.0
        %v2422 = vmax.f32 %v1910, 0.0
        %v2423 = vmax.f32 %v1911, 0.0
        %v2424 = vmax.f32 %v1912, 0.0
        %v2425 = vmax.f32 %v1913, 0.0
        %v2426 = vmax.f32 %v1914, 0.0
        %v2427 = vmax.f32 %v1915, 0.0
        %v2428 = vmax.f32 %v1916, 0.0
        %v2429 = vmax.f32 %v1917, 0.0
        %v2430 = vmax.f32 %v1918, 0.0
        %v2431 = vmax.f32 %v1919, 0.0
        %v2432 = vmax.f32 %v1920, 0.0
        %v2433 = vmax.f32 %v1921, 0.0
        %v2434 = vmax.f32 %v1922, 0.0
        %v2435 = vmax.f32 %v1923, 0.0
        %v2436 = vmax.f32 %v1924, 0.0
        %v2437 = vmax.f32 %v1925, 0.0
        %v2438 = vmax.f32 %v1926, 0.0
        %v2439 = vmax.f32 %v1927, 0.0
        %v2440 = vmax.f32 %v1928, 0.0
        %v2441 = vmax.f32 %v1929, 0.0
        %v2442 = vmax.f32 %v1930, 0.0
        %v2443 = vmax.f32 %v1931, 0.0
        %v2444 = vmax.f32 %v1932, 0.0
        %v2445 = vmax.f32 %v1933, 0.0
        %v2446 = vmax.f32 %v1934, 0.0
        %v2447 = vmax.f32 %v1935, 0.0
        %v2448 = vmax.f32 %v1936, 0.0
        %v2449 = vmax.f32 %v1937, 0.0
        %v2450 = vmax.f32 %v1938, 0.0
        %v2451 = vmax.f32 %v1939, 0.0
        %v2452 = vmax.f32 %v1940, 0.0
        %v2453 = vmax.f32 %v1941, 0.0
        %v2454 = vmax.f32 %v1942, 0.0
        %v2455 = vmax.f32 %v1943, 0.0
        %v2456 = vmax.f32 %v1944, 0.0
        %v2457 = vmax.f32 %v1945, 0.0
        %v2458 = vmax.f32 %v1946, 0.0
        %v2459 = vmax.f32 %v1947, 0.0
        %v2460 = vmax.f32 %v1948, 0.0
        %v2461 = vmax.f32 %v1949, 0.0
        %v2462 = vmax.f32 %v1950, 0.0
        %v2463 = vmax.f32 %v1951, 0.0
        %v2464 = vmax.f32 %v1952, 0.0
        %v2465 = vmax.f32 %v1953, 0.0
        %v2466 = vmax.f32 %v1954, 0.0
        %v2467 = vmax.f32 %v1955, 0.0
        %v2468 = vmax.f32 %v1956, 0.0
        %v2469 = vmax.f32 %v1957, 0.0
        %v2470 = vmax.f32 %v1958, 0.0
        %v2471 = vmax.f32 %v1959, 0.0
        %v2472 = vmax.f32 %v1960, 0.0
        %v2473 = vmax.f32 %v1961, 0.0
        %v2474 = vmax.f32 %v1962, 0.0
        %v2475 = vmax.f32 %v1963, 0.0
        %v2476 = vmax.f32 %v1964, 0.0
        %v2477 = vmax.f32 %v1965, 0.0
        %v2478 = vmax.f32 %v1966, 0.0
        %v2479 = vmax.f32 %v1967, 0.0
        %v2480 = vmax.f32 %v1968, 0.0
        %v2481 = vmax.f32 %v1969, 0.0
        %v2482 = vmax.f32 %v1970, 0.0
        %v2483 = vmax.f32 %v1971, 0.0
        %v2484 = vmax.f32 %v1972, 0.0
        %v2485 = vmax.f32 %v1973, 0.0
        %v2486 = vmax.f32 %v1974, 0.0
        %v2487 = vmax.f32 %v1975, 0.0
        %v2488 = vmax.f32 %v1976, 0.0
        %v2489 = vmax.f32 %v1977, 0.0
        %v2490 = vmax.f32 %v1978, 0.0
        %v2491 = vmax.f32 %v1979, 0.0
        %v2492 = vmax.f32 %v1980, 0.0
        %v2493 = vmax.f32 %v1981, 0.0
        %v2494 = vmax.f32 %v1982, 0.0
        %v2495 = vmax.f32 %v1983, 0.0
        %v2496 = vmax.f32 %v1984, 0.0
        %v2497 = vmax.f32 %v1985, 0.0
        %v2498 = vmax.f32 %v1986, 0.0
        %v2499 = vmax.f32 %v1987, 0.0
        %v2500 = vmax.f32 %v1988, 0.0
        %v2501 = vmax.f32 %v1989, 0.0
        %v2502 = vmax.f32 %v1990, 0.0
        %v2503 = vmax.f32 %v1991, 0.0
        %v2504 = vmax.f32 %v1992, 0.0
        %v2505 = vmax.f32 %v1993, 0.0
        %v2506 = vmax.f32 %v1994, 0.0
        %v2507 = vmax.f32 %v1995, 0.0
        %v2508 = vmax.f32 %v1996, 0.0
        %v2509 = vmax.f32 %v1997, 0.0
        %v2510 = vmax.f32 %v1998, 0.0
        %v2511 = vmax.f32 %v1999, 0.0
        %v2512 = vmax.f32 %v2000, 0.0
        %v2513 = vmax.f32 %v2001, 0.0
        %v2514 = vmax.f32 %v2002, 0.0
        %v2515 = vmax.f32 %v2003, 0.0
        %v2516 = vmax.f32 %v2004, 0.0
        %v2517 = vmax.f32 %v2005, 0.0
        %v2518 = vmax.f32 %v2006, 0.0
        %v2519 = vmax.f32 %v2007, 0.0
        %v2520 = vmax.f32 %v2008, 0.0
        %v2521 = vmax.f32 %v2009, 0.0
        %v2522 = vmax.f32 %v2010, 0.0
        %v2523 = vmax.f32 %v2011, 0.0
        %v2524 = vmax.f32 %v2012, 0.0
        %v2525 = vmax.f32 %v2013, 0.0
        %v2526 = vmax.f32 %v2014, 0.0
        %v2527 = vmax.f32 %v2015, 0.0
        %v2528 = vmax.f32 %v2016, 0.0
        %v2529 = vmax.f32 %v2017, 0.0
        %v2530 = vmax.f32 %v2018, 0.0
        %v2531 = vmax.f32 %v2019, 0.0
        %v2532 = vmax.f32 %v2020, 0.0
        %v2533 = vmax.f32 %v2021, 0.0
        %v2534 = vmax.f32 %v2022, 0.0
        %v2535 = vmax.f32 %v2023, 0.0
        %v2536 = vmax.f32 %v2024, 0.0
        %v2537 = vmax.f32 %v2025, 0.0
        %v2538 = vmax.f32 %v2026, 0.0
        %v2539 = vmax.f32 %v2027, 0.0
        %v2540 = vmax.f32 %v2028, 0.0
        %v2541 = vmax.f32 %v2029, 0.0
        %v2542 = vmax.f32 %v2030, 0.0
        %v2543 = vmax.f32 %v2031, 0.0
        %v2544 = vmax.f32 %v2032, 0.0
        %v2545 = vmax.f32 %v2033, 0.0
        %v2546 = vmax.f32 %v2034, 0.0
        %v2547 = vmax.f32 %v2035, 0.0
        %v2548 = vmax.f32 %v2036, 0.0
        %v2549 = vmax.f32 %v2037, 0.0
        %v2550 = vmax.f32 %v2038, 0.0
        %v2551 = vmax.f32 %v2039, 0.0
        %v2552 = vmax.f32 %v2040, 0.0
        %v2553 = vmax.f32 %v2041, 0.0
        %v2554 = vmax.f32 %v2042, 0.0
        %v2555 = vmax.f32 %v2043, 0.0
        %v2556 = vmax.f32 %v2044, 0.0
        %v2557 = vmax.f32 %v2045, 0.0
        %v2558 = vmax.f32 %v2046, 0.0
        %v2559 = vmax.f32 %v2047, 0.0
        %v2560 = vmax.f32 %v2048, 0.0
        %v2561 = vmax.f32 %v2049, 0.0
        %v2562 = vmax.f32 %v2050, 0.0
        %v2563 = vmax.f32 %v2051, 0.0
        %v2564 = vmax.f32 %v2052, 0.0
        %v2565 = vmax.f32 %v2053, 0.0
        %v2566 = vmax.f32 %v2054, 0.0
        %v2567 = vmax.f32 %v2055, 0.0
        %v2568 = vmax.f32 %v2056, 0.0
        %v2569 = vmax.f32 %v2057, 0.0
        %v2570 = vmax.f32 %v2058, 0.0
        %v2571 = vmax.f32 %v2059, 0.0
        %v2572 = vmax.f32 %v2060, 0.0
        %v2573 = vmax.f32 %v2061, 0.0
        %v2574 = vmax.f32 %v2062, 0.0
        %v2575 = vmax.f32 %v2063, 0.0
        %v2576 = vmax.f32 %v2064, 0.0
        %v2577 = vmax.f32 %v2065, 0.0
        %v2578 = vmax.f32 %v2066, 0.0
        %v2579 = vmax.f32 %v2067, 0.0
        %v2580 = vmax.f32 %v2068, 0.0
        %v2581 = vmax.f32 %v2069, 0.0
        %v2582 = vmax.f32 %v2070, 0.0
        %v2583 = vmax.f32 %v2071, 0.0
        %v2584 = vmax.f32 %v2072, 0.0
        %v2585 = vmax.f32 %v2073, 0.0
        %v2586 = vmax.f32 %v2074, 0.0
        %v2587 = vmax.f32 %v2075, 0.0
        %v2588 = vmax.f32 %v2076, 0.0
        %v2589 = vmax.f32 %v2077, 0.0
        %v2590 = vmax.f32 %v2078, 0.0
        %v2591 = vmax.f32 %v2079, 0.0
        %v2592 = vmax.f32 %v2080, 0.0
        %v2593 = vmax.f32 %v2081, 0.0
        %v2594 = vmax.f32 %v2082, 0.0
        %v2595 = vmax.f32 %v2083, 0.0
        %v2596 = vmax.f32 %v2084, 0.0
        %v2597 = vmax.f32 %v2085, 0.0
        %v2598 = vmax.f32 %v2086, 0.0
        %v2599 = vmax.f32 %v2087, 0.0
        %v2600 = vmax.f32 %v2088, 0.0
        %v2601 = vmax.f32 %v2089, 0.0
        %v2602 = vmax.f32 %v2090, 0.0
        %v2603 = vmax.f32 %v2091, 0.0
        %v2604 = vmax.f32 %v2092, 0.0
        %v2605 = vmax.f32 %v2093, 0.0
        %v2606 = vmax.f32 %v2094, 0.0
        %v2607 = vmax.f32 %v2095, 0.0
        %v2608 = vmax.f32 %v2096, 0.0
        %v2609 = vmax.f32 %v2097, 0.0
        %v2610 = vmax.f32 %v2098, 0.0
        %v2611 = vmax.f32 %v2099, 0.0
        %v2612 = vmax.f32 %v2100, 0.0
        %v2613 = vmax.f32 %v2101, 0.0
        %v2614 = vmax.f32 %v2102, 0.0
        %v2615 = vmax.f32 %v2103, 0.0
        %v2616 = vmax.f32 %v2104, 0.0
        %v2617 = vmax.f32 %v2105, 0.0
        %v2618 = vmax.f32 %v2106, 0.0
        %v2619 = vmax.f32 %v2107, 0.0
        %v2620 = vmax.f32 %v2108, 0.0
        %v2621 = vmax.f32 %v2109, 0.0
        %v2622 = vmax.f32 %v2110, 0.0
        %v2623 = vmax.f32 %v2111, 0.0
        %v2624 = vmax.f32 %v2112, 0.0
        %v2625 = vmax.f32 %v2113, 0.0
        %v2626 = vmax.f32 %v2114, 0.0
        %v2627 = vmax.f32 %v2115, 0.0
        %v2628 = vmax.f32 %v2116, 0.0
        %v2629 = vmax.f32 %v2117, 0.0
        %v2630 = vmax.f32 %v2118, 0.0
        %v2631 = vmax.f32 %v2119, 0.0
        %v2632 = vmax.f32 %v2120, 0.0
        %v2633 = vmax.f32 %v2121, 0.0
        %v2634 = vmax.f32 %v2122, 0.0
        %v2635 = vmax.f32 %v2123, 0.0
        %v2636 = vmax.f32 %v2124, 0.0
        %v2637 = vmax.f32 %v2125, 0.0
        %v2638 = vmax.f32 %v2126, 0.0
        %v2639 = vmax.f32 %v2127, 0.0
        %v2640 = vmax.f32 %v2128, 0.0
        %v2641 = vmax.f32 %v2129, 0.0
        %v2642 = vmax.f32 %v2130, 0.0
        %v2643 = vmax.f32 %v2131, 0.0
        %v2644 = vmax.f32 %v2132, 0.0
        %v2645 = vmax.f32 %v2133, 0.0
        %v2646 = vmax.f32 %v2134, 0.0
        %v2647 = vmax.f32 %v2135, 0.0
        %v2648 = vmax.f32 %v2136, 0.0
        %v2649 = vmax.f32 %v2137, 0.0
        %v2650 = vmax.f32 %v2138, 0.0
        %v2651 = vmax.f32 %v2139, 0.0
        %v2652 = vmax.f32 %v2140, 0.0
        %v2653 = vmax.f32 %v2141, 0.0
        %v2654 = vmax.f32 %v2142, 0.0
        %v2655 = vmax.f32 %v2143, 0.0
        %v2656 = vmax.f32 %v2144, 0.0
        %v2657 = vmax.f32 %v2145, 0.0
        %v2658 = vmax.f32 %v2146, 0.0
        %v2659 = vmax.f32 %v2147, 0.0
        %v2660 = vmax.f32 %v2148, 0.0
        %v2661 = vmax.f32 %v2149, 0.0
        %v2662 = vmax.f32 %v2150, 0.0
        %v2663 = vmax.f32 %v2151, 0.0
        %v2664 = vmax.f32 %v2152, 0.0
        %v2665 = vmax.f32 %v2153, 0.0
        %v2666 = vmax.f32 %v2154, 0.0
        %v2667 = vmax.f32 %v2155, 0.0
        %v2668 = vmax.f32 %v2156, 0.0
        %v2669 = vmax.f32 %v2157, 0.0
        %v2670 = vmax.f32 %v2158, 0.0
        %v2671 = vmax.f32 %v2159, 0.0
        %v2672 = vmax.f32 %v2160, 0.0
        %v2673 = vmax.f32 %v2161, 0.0
        %v2674 = vmax.f32 %v2162, 0.0
        %v2675 = vmax.f32 %v2163, 0.0
        %v2676 = vmax.f32 %v2164, 0.0
        %v2677 = vmax.f32 %v2165, 0.0
        %v2678 = vmax.f32 %v2166, 0.0
        %v2679 = vmax.f32 %v2167, 0.0
        %v2680 = vmax.f32 %v2168, 0.0
        %v2681 = vmax.f32 %v2169, 0.0
        %v2682 = vmax.f32 %v2170, 0.0
        %v2683 = vmax.f32 %v2171, 0.0
        %v2684 = vmax.f32 %v2172, 0.0
        %v2685 = vmax.f32 %v2173, 0.0
        %v2686 = vmax.f32 %v2174, 0.0
        %v2687 = vmax.f32 %v2175, 0.0
        %v2688 = vmax.f32 %v2176, 0.0
        %v2689 = vmax.f32 %v2177, 0.0
        %v2690 = vmax.f32 %v2178, 0.0
        %v2691 = vmax.f32 %v2179, 0.0
        %v2692 = vmax.f32 %v2180, 0.0
        %v2693 = vmax.f32 %v2181, 0.0
        %v2694 = vmax.f32 %v2182, 0.0
        %v2695 = vmax.f32 %v2183, 0.0
        %v2696 = vmax.f32 %v2184, 0.0
        %v2697 = vmax.f32 %v2185, 0.0
        %v2698 = vmax.f32 %v2186, 0.0
        %v2699 = vmax.f32 %v2187, 0.0
        %v2700 = vmax.f32 %v2188, 0.0
        %v2701 = vmax.f32 %v2189, 0.0
        %v2702 = vmax.f32 %v2190, 0.0
        %v2703 = vmax.f32 %v2191, 0.0
        %v2704 = vmax.f32 %v2192, 0.0
        %v2705 = vmax.f32 %v2193, 0.0
        %v2706 = vmax.f32 %v2194, 0.0
        %v2707 = vmax.f32 %v2195, 0.0
        %v2708 = vmax.f32 %v2196, 0.0
        %v2709 = vmax.f32 %v2197, 0.0
        %v2710 = vmax.f32 %v2198, 0.0
        %v2711 = vmax.f32 %v2199, 0.0
        %v2712 = vmax.f32 %v2200, 0.0
        %v2713 = vmax.f32 %v2201, 0.0
        %v2714 = vmax.f32 %v2202, 0.0
        %v2715 = vmax.f32 %v2203, 0.0
        %v2716 = vmax.f32 %v2204, 0.0
        %v2717 = vmax.f32 %v2205, 0.0
        %v2718 = vmax.f32 %v2206, 0.0
        %v2719 = vmax.f32 %v2207, 0.0
        %v2720 = vmax.f32 %v2208, 0.0
        %v2721 = vmax.f32 %v2209, 0.0
        %v2722 = vmax.f32 %v2210, 0.0
        %v2723 = vmax.f32 %v2211, 0.0
        %v2724 = vmax.f32 %v2212, 0.0
        %v2725 = vmax.f32 %v2213, 0.0
        %v2726 = vmax.f32 %v2214, 0.0
        %v2727 = vmax.f32 %v2215, 0.0
        %v2728 = vmax.f32 %v2216, 0.0
        %v2729 = vmax.f32 %v2217, 0.0
        %v2730 = vmax.f32 %v2218, 0.0
        %v2731 = vmax.f32 %v2219, 0.0
        %v2732 = vmax.f32 %v2220, 0.0
        %v2733 = vmax.f32 %v2221, 0.0
        %v2734 = vmax.f32 %v2222, 0.0
        %v2735 = vmax.f32 %v2223, 0.0
        %v2736 = vmax.f32 %v2224, 0.0
        %v2737 = vmax.f32 %v2225, 0.0
        %v2738 = vmax.f32 %v2226, 0.0
        %v2739 = vmax.f32 %v2227, 0.0
        %v2740 = vmax.f32 %v2228, 0.0
        %v2741 = vmax.f32 %v2229, 0.0
        %v2742 = vmax.f32 %v2230, 0.0
        %v2743 = vmax.f32 %v2231, 0.0
        %v2744 = vmax.f32 %v2232, 0.0
        %v2745 = vmax.f32 %v2233, 0.0
        %v2746 = vmax.f32 %v2234, 0.0
        %v2747 = vmax.f32 %v2235, 0.0
        %v2748 = vmax.f32 %v2236, 0.0
        %v2749 = vmax.f32 %v2237, 0.0
        %v2750 = vmax.f32 %v2238, 0.0
        %v2751 = vmax.f32 %v2239, 0.0
        %v2752 = vmax.f32 %v2240, 0.0
        %v2753 = vmax.f32 %v2241, 0.0
        %v2754 = vmax.f32 %v2242, 0.0
        %v2755 = vmax.f32 %v2243, 0.0
        %v2756 = vmax.f32 %v2244, 0.0
        %v2757 = vmax.f32 %v2245, 0.0
        %v2758 = vmax.f32 %v2246, 0.0
        %v2759 = vmax.f32 %v2247, 0.0
        %v2760 = vmax.f32 %v2248, 0.0
        %v2761 = vmax.f32 %v2249, 0.0
        %v2762 = vmax.f32 %v2250, 0.0
        %v2763 = vmax.f32 %v2251, 0.0
        %v2764 = vmax.f32 %v2252, 0.0
        %v2765 = vmax.f32 %v2253, 0.0
        %v2766 = vmax.f32 %v2254, 0.0
        %v2767 = vmax.f32 %v2255, 0.0
        %v2768 = vmax.f32 %v2256, 0.0
        %v2769 = vmax.f32 %v2257, 0.0
        %v2770 = vmax.f32 %v2258, 0.0
        %v2771 = vmax.f32 %v2259, 0.0
        %v2772 = vmax.f32 %v2260, 0.0
        %v2773 = vmax.f32 %v2261, 0.0
        %v2774 = vmax.f32 %v2262, 0.0
        %v2775 = vmax.f32 %v2263, 0.0
        %v2776 = vmax.f32 %v2264, 0.0
        %v2777 = vmax.f32 %v2265, 0.0
        %v2778 = vmax.f32 %v2266, 0.0
        %v2779 = vmax.f32 %v2267, 0.0
        %v2780 = vmax.f32 %v2268, 0.0
        %v2781 = vmax.f32 %v2269, 0.0
        %v2782 = vmax.f32 %v2270, 0.0
        %v2783 = vmax.f32 %v2271, 0.0
        %v2784 = vmax.f32 %v2272, 0.0
        %v2785 = vmax.f32 %v2273, 0.0
        %v2786 = vmax.f32 %v2274, 0.0
        %v2787 = vmax.f32 %v2275, 0.0
        %v2788 = vmax.f32 %v2276, 0.0
        %v2789 = vmax.f32 %v2277, 0.0
        %v2790 = vmax.f32 %v2278, 0.0
        %v2791 = vmax.f32 %v2279, 0.0
        %v2792 = vmax.f32 %v2280, 0.0
        %v2793 = vmax.f32 %v2281, 0.0
        %v2794 = vmax.f32 %v2282, 0.0
        %v2795 = vmax.f32 %v2283, 0.0
        %v2796 = vmax.f32 %v2284, 0.0
        %v2797 = vmax.f32 %v2285, 0.0
        %v2798 = vmax.f32 %v2286, 0.0
        %v2799 = vmax.f32 %v2287, 0.0
        %v2800 = vmax.f32 %v2288, 0.0
        %v2801 = vmax.f32 %v2289, 0.0
        %v2802 = vmax.f32 %v2290, 0.0
        %v2803 = vmax.f32 %v2291, 0.0
        %v2804 = vmax.f32 %v2292, 0.0
        %v2805 = vmax.f32 %v2293, 0.0
        %2806 = vst [vmem:[%s241] sm:$0xff] %v2294
        %2807 = vst [vmem:[%s241 + $0x8] sm:$0xff] %v2295
        %2808 = vst [vmem:[%s241 + $0x10] sm:$0xff] %v2296
        %2809 = vst [vmem:[%s241 + $0x18] sm:$0xff] %v2297
        %2810 = vst [vmem:[%s241 + $0x20] sm:$0xff] %v2298
        %2811 = vst [vmem:[%s241 + $0x28] sm:$0xff] %v2299
        %2812 = vst [vmem:[%s241 + $0x30] sm:$0xff] %v2300
        %2813 = vst [vmem:[%s241 + $0x38] sm:$0xff] %v2301
        %2814 = vst [vmem:[%s241 + $0x40] sm:$0xff] %v2302
        %2815 = vst [vmem:[%s241 + $0x48] sm:$0xff] %v2303
        %2816 = vst [vmem:[%s241 + $0x50] sm:$0xff] %v2304
        %2817 = vst [vmem:[%s241 + $0x58] sm:$0xff] %v2305
        %2818 = vst [vmem:[%s241 + $0x60] sm:$0xff] %v2306
        %2819 = vst [vmem:[%s241 + $0x68] sm:$0xff] %v2307
        %2820 = vst [vmem:[%s241 + $0x70] sm:$0xff] %v2308
        %2821 = vst [vmem:[%s241 + $0x78] sm:$0xff] %v2309
        %2822 = vst [vmem:[%s241 + $0x80] sm:$0xff] %v2310
        %2823 = vst [vmem:[%s241 + $0x88] sm:$0xff] %v2311
        %2824 = vst [vmem:[%s241 + $0x90] sm:$0xff] %v2312
        %2825 = vst [vmem:[%s241 + $0x98] sm:$0xff] %v2313
        %2826 = vst [vmem:[%s241 + $0xa0] sm:$0xff] %v2314
        %2827 = vst [vmem:[%s241 + $0xa8] sm:$0xff] %v2315
        %2828 = vst [vmem:[%s241 + $0xb0] sm:$0xff] %v2316
        %2829 = vst [vmem:[%s241 + $0xb8] sm:$0xff] %v2317
        %2830 = vst [vmem:[%s241 + $0xc0] sm:$0xff] %v2318
        %2831 = vst [vmem:[%s241 + $0xc8] sm:$0xff] %v2319
        %2832 = vst [vmem:[%s241 + $0xd0] sm:$0xff] %v2320
        %2833 = vst [vmem:[%s241 + $0xd8] sm:$0xff] %v2321
        %2834 = vst [vmem:[%s241 + $0xe0] sm:$0xff] %v2322
        %2835 = vst [vmem:[%s241 + $0xe8] sm:$0xff] %v2323
        %2836 = vst [vmem:[%s241 + $0xf0] sm:$0xff] %v2324
        %2837 = vst [vmem:[%s241 + $0xf8] sm:$0xff] %v2325
        %2838 = vst [vmem:[%s241 + $0x100] sm:$0xff] %v2326
        %2839 = vst [vmem:[%s241 + $0x108] sm:$0xff] %v2327
        %2840 = vst [vmem:[%s241 + $0x110] sm:$0xff] %v2328
        %2841 = vst [vmem:[%s241 + $0x118] sm:$0xff] %v2329
        %2842 = vst [vmem:[%s241 + $0x120] sm:$0xff] %v2330
        %2843 = vst [vmem:[%s241 + $0x128] sm:$0xff] %v2331
        %2844 = vst [vmem:[%s241 + $0x130] sm:$0xff] %v2332
        %2845 = vst [vmem:[%s241 + $0x138] sm:$0xff] %v2333
        %2846 = vst [vmem:[%s241 + $0x140] sm:$0xff] %v2334
        %2847 = vst [vmem:[%s241 + $0x148] sm:$0xff] %v2335
        %2848 = vst [vmem:[%s241 + $0x150] sm:$0xff] %v2336
        %2849 = vst [vmem:[%s241 + $0x158] sm:$0xff] %v2337
        %2850 = vst [vmem:[%s241 + $0x160] sm:$0xff] %v2338
        %2851 = vst [vmem:[%s241 + $0x168] sm:$0xff] %v2339
        %2852 = vst [vmem:[%s241 + $0x170] sm:$0xff] %v2340
        %2853 = vst [vmem:[%s241 + $0x178] sm:$0xff] %v2341
        %2854 = vst [vmem:[%s241 + $0x180] sm:$0xff] %v2342
        %2855 = vst [vmem:[%s241 + $0x188] sm:$0xff] %v2343
        %2856 = vst [vmem:[%s241 + $0x190] sm:$0xff] %v2344
        %2857 = vst [vmem:[%s241 + $0x198] sm:$0xff] %v2345
        %2858 = vst [vmem:[%s241 + $0x1a0] sm:$0xff] %v2346
        %2859 = vst [vmem:[%s241 + $0x1a8] sm:$0xff] %v2347
        %2860 = vst [vmem:[%s241 + $0x1b0] sm:$0xff] %v2348
        %2861 = vst [vmem:[%s241 + $0x1b8] sm:$0xff] %v2349
        %2862 = vst [vmem:[%s241 + $0x1c0] sm:$0xff] %v2350
        %2863 = vst [vmem:[%s241 + $0x1c8] sm:$0xff] %v2351
        %2864 = vst [vmem:[%s241 + $0x1d0] sm:$0xff] %v2352
        %2865 = vst [vmem:[%s241 + $0x1d8] sm:$0xff] %v2353
        %2866 = vst [vmem:[%s241 + $0x1e0] sm:$0xff] %v2354
        %2867 = vst [vmem:[%s241 + $0x1e8] sm:$0xff] %v2355
        %2868 = vst [vmem:[%s241 + $0x1f0] sm:$0xff] %v2356
        %2869 = vst [vmem:[%s241 + $0x1f8] sm:$0xff] %v2357
        %2870 = vst [vmem:[%s241 + $0x200] sm:$0xff] %v2358
        %2871 = vst [vmem:[%s241 + $0x208] sm:$0xff] %v2359
        %2872 = vst [vmem:[%s241 + $0x210] sm:$0xff] %v2360
        %2873 = vst [vmem:[%s241 + $0x218] sm:$0xff] %v2361
        %2874 = vst [vmem:[%s241 + $0x220] sm:$0xff] %v2362
        %2875 = vst [vmem:[%s241 + $0x228] sm:$0xff] %v2363
        %2876 = vst [vmem:[%s241 + $0x230] sm:$0xff] %v2364
        %2877 = vst [vmem:[%s241 + $0x238] sm:$0xff] %v2365
        %2878 = vst [vmem:[%s241 + $0x240] sm:$0xff] %v2366
        %2879 = vst [vmem:[%s241 + $0x248] sm:$0xff] %v2367
        %2880 = vst [vmem:[%s241 + $0x250] sm:$0xff] %v2368
        %2881 = vst [vmem:[%s241 + $0x258] sm:$0xff] %v2369
        %2882 = vst [vmem:[%s241 + $0x260] sm:$0xff] %v2370
        %2883 = vst [vmem:[%s241 + $0x268] sm:$0xff] %v2371
        %2884 = vst [vmem:[%s241 + $0x270] sm:$0xff] %v2372
        %2885 = vst [vmem:[%s241 + $0x278] sm:$0xff] %v2373
        %2886 = vst [vmem:[%s241 + $0x280] sm:$0xff] %v2374
        %2887 = vst [vmem:[%s241 + $0x288] sm:$0xff] %v2375
        %2888 = vst [vmem:[%s241 + $0x290] sm:$0xff] %v2376
        %2889 = vst [vmem:[%s241 + $0x298] sm:$0xff] %v2377
        %2890 = vst [vmem:[%s241 + $0x2a0] sm:$0xff] %v2378
        %2891 = vst [vmem:[%s241 + $0x2a8] sm:$0xff] %v2379
        %2892 = vst [vmem:[%s241 + $0x2b0] sm:$0xff] %v2380
        %2893 = vst [vmem:[%s241 + $0x2b8] sm:$0xff] %v2381
        %2894 = vst [vmem:[%s241 + $0x2c0] sm:$0xff] %v2382
        %2895 = vst [vmem:[%s241 + $0x2c8] sm:$0xff] %v2383
        %2896 = vst [vmem:[%s241 + $0x2d0] sm:$0xff] %v2384
        %2897 = vst [vmem:[%s241 + $0x2d8] sm:$0xff] %v2385
        %2898 = vst [vmem:[%s241 + $0x2e0] sm:$0xff] %v2386
        %2899 = vst [vmem:[%s241 + $0x2e8] sm:$0xff] %v2387
        %2900 = vst [vmem:[%s241 + $0x2f0] sm:$0xff] %v2388
        %2901 = vst [vmem:[%s241 + $0x2f8] sm:$0xff] %v2389
        %2902 = vst [vmem:[%s241 + $0x300] sm:$0xff] %v2390
        %2903 = vst [vmem:[%s241 + $0x308] sm:$0xff] %v2391
        %2904 = vst [vmem:[%s241 + $0x310] sm:$0xff] %v2392
        %2905 = vst [vmem:[%s241 + $0x318] sm:$0xff] %v2393
        %2906 = vst [vmem:[%s241 + $0x320] sm:$0xff] %v2394
        %2907 = vst [vmem:[%s241 + $0x328] sm:$0xff] %v2395
        %2908 = vst [vmem:[%s241 + $0x330] sm:$0xff] %v2396
        %2909 = vst [vmem:[%s241 + $0x338] sm:$0xff] %v2397
        %2910 = vst [vmem:[%s241 + $0x340] sm:$0xff] %v2398
        %2911 = vst [vmem:[%s241 + $0x348] sm:$0xff] %v2399
        %2912 = vst [vmem:[%s241 + $0x350] sm:$0xff] %v2400
        %2913 = vst [vmem:[%s241 + $0x358] sm:$0xff] %v2401
        %2914 = vst [vmem:[%s241 + $0x360] sm:$0xff] %v2402
        %2915 = vst [vmem:[%s241 + $0x368] sm:$0xff] %v2403
        %2916 = vst [vmem:[%s241 + $0x370] sm:$0xff] %v2404
        %2917 = vst [vmem:[%s241 + $0x378] sm:$0xff] %v2405
        %2918 = vst [vmem:[%s241 + $0x380] sm:$0xff] %v2406
        %2919 = vst [vmem:[%s241 + $0x388] sm:$0xff] %v2407
        %2920 = vst [vmem:[%s241 + $0x390] sm:$0xff] %v2408
        %2921 = vst [vmem:[%s241 + $0x398] sm:$0xff] %v2409
        %2922 = vst [vmem:[%s241 + $0x3a0] sm:$0xff] %v2410
        %2923 = vst [vmem:[%s241 + $0x3a8] sm:$0xff] %v2411
        %2924 = vst [vmem:[%s241 + $0x3b0] sm:$0xff] %v2412
        %2925 = vst [vmem:[%s241 + $0x3b8] sm:$0xff] %v2413
        %2926 = vst [vmem:[%s241 + $0x3c0] sm:$0xff] %v2414
        %2927 = vst [vmem:[%s241 + $0x3c8] sm:$0xff] %v2415
        %2928 = vst [vmem:[%s241 + $0x3d0] sm:$0xff] %v2416
        %2929 = vst [vmem:[%s241 + $0x3d8] sm:$0xff] %v2417
        %2930 = vst [vmem:[%s241 + $0x3e0] sm:$0xff] %v2418
        %2931 = vst [vmem:[%s241 + $0x3e8] sm:$0xff] %v2419
        %2932 = vst [vmem:[%s241 + $0x3f0] sm:$0xff] %v2420
        %2933 = vst [vmem:[%s241 + $0x3f8] sm:$0xff] %v2421
        %2934 = vst [vmem:[%s241 + $0x400] sm:$0xff] %v2422
        %2935 = vst [vmem:[%s241 + $0x408] sm:$0xff] %v2423
        %2936 = vst [vmem:[%s241 + $0x410] sm:$0xff] %v2424
        %2937 = vst [vmem:[%s241 + $0x418] sm:$0xff] %v2425
        %2938 = vst [vmem:[%s241 + $0x420] sm:$0xff] %v2426
        %2939 = vst [vmem:[%s241 + $0x428] sm:$0xff] %v2427
        %2940 = vst [vmem:[%s241 + $0x430] sm:$0xff] %v2428
        %2941 = vst [vmem:[%s241 + $0x438] sm:$0xff] %v2429
        %2942 = vst [vmem:[%s241 + $0x440] sm:$0xff] %v2430
        %2943 = vst [vmem:[%s241 + $0x448] sm:$0xff] %v2431
        %2944 = vst [vmem:[%s241 + $0x450] sm:$0xff] %v2432
        %2945 = vst [vmem:[%s241 + $0x458] sm:$0xff] %v2433
        %2946 = vst [vmem:[%s241 + $0x460] sm:$0xff] %v2434
        %2947 = vst [vmem:[%s241 + $0x468] sm:$0xff] %v2435
        %2948 = vst [vmem:[%s241 + $0x470] sm:$0xff] %v2436
        %2949 = vst [vmem:[%s241 + $0x478] sm:$0xff] %v2437
        %2950 = vst [vmem:[%s241 + $0x480] sm:$0xff] %v2438
        %2951 = vst [vmem:[%s241 + $0x488] sm:$0xff] %v2439
        %2952 = vst [vmem:[%s241 + $0x490] sm:$0xff] %v2440
        %2953 = vst [vmem:[%s241 + $0x498] sm:$0xff] %v2441
        %2954 = vst [vmem:[%s241 + $0x4a0] sm:$0xff] %v2442
        %2955 = vst [vmem:[%s241 + $0x4a8] sm:$0xff] %v2443
        %2956 = vst [vmem:[%s241 + $0x4b0] sm:$0xff] %v2444
        %2957 = vst [vmem:[%s241 + $0x4b8] sm:$0xff] %v2445
        %2958 = vst [vmem:[%s241 + $0x4c0] sm:$0xff] %v2446
        %2959 = vst [vmem:[%s241 + $0x4c8] sm:$0xff] %v2447
        %2960 = vst [vmem:[%s241 + $0x4d0] sm:$0xff] %v2448
        %2961 = vst [vmem:[%s241 + $0x4d8] sm:$0xff] %v2449
        %2962 = vst [vmem:[%s241 + $0x4e0] sm:$0xff] %v2450
        %2963 = vst [vmem:[%s241 + $0x4e8] sm:$0xff] %v2451
        %2964 = vst [vmem:[%s241 + $0x4f0] sm:$0xff] %v2452
        %2965 = vst [vmem:[%s241 + $0x4f8] sm:$0xff] %v2453
        %2966 = vst [vmem:[%s241 + $0x500] sm:$0xff] %v2454
        %2967 = vst [vmem:[%s241 + $0x508] sm:$0xff] %v2455
        %2968 = vst [vmem:[%s241 + $0x510] sm:$0xff] %v2456
        %2969 = vst [vmem:[%s241 + $0x518] sm:$0xff] %v2457
        %2970 = vst [vmem:[%s241 + $0x520] sm:$0xff] %v2458
        %2971 = vst [vmem:[%s241 + $0x528] sm:$0xff] %v2459
        %2972 = vst [vmem:[%s241 + $0x530] sm:$0xff] %v2460
        %2973 = vst [vmem:[%s241 + $0x538] sm:$0xff] %v2461
        %2974 = vst [vmem:[%s241 + $0x540] sm:$0xff] %v2462
        %2975 = vst [vmem:[%s241 + $0x548] sm:$0xff] %v2463
        %2976 = vst [vmem:[%s241 + $0x550] sm:$0xff] %v2464
        %2977 = vst [vmem:[%s241 + $0x558] sm:$0xff] %v2465
        %2978 = vst [vmem:[%s241 + $0x560] sm:$0xff] %v2466
        %2979 = vst [vmem:[%s241 + $0x568] sm:$0xff] %v2467
        %2980 = vst [vmem:[%s241 + $0x570] sm:$0xff] %v2468
        %2981 = vst [vmem:[%s241 + $0x578] sm:$0xff] %v2469
        %2982 = vst [vmem:[%s241 + $0x580] sm:$0xff] %v2470
        %2983 = vst [vmem:[%s241 + $0x588] sm:$0xff] %v2471
        %2984 = vst [vmem:[%s241 + $0x590] sm:$0xff] %v2472
        %2985 = vst [vmem:[%s241 + $0x598] sm:$0xff] %v2473
        %2986 = vst [vmem:[%s241 + $0x5a0] sm:$0xff] %v2474
        %2987 = vst [vmem:[%s241 + $0x5a8] sm:$0xff] %v2475
        %2988 = vst [vmem:[%s241 + $0x5b0] sm:$0xff] %v2476
        %2989 = vst [vmem:[%s241 + $0x5b8] sm:$0xff] %v2477
        %2990 = vst [vmem:[%s241 + $0x5c0] sm:$0xff] %v2478
        %2991 = vst [vmem:[%s241 + $0x5c8] sm:$0xff] %v2479
        %2992 = vst [vmem:[%s241 + $0x5d0] sm:$0xff] %v2480
        %2993 = vst [vmem:[%s241 + $0x5d8] sm:$0xff] %v2481
        %2994 = vst [vmem:[%s241 + $0x5e0] sm:$0xff] %v2482
        %2995 = vst [vmem:[%s241 + $0x5e8] sm:$0xff] %v2483
        %2996 = vst [vmem:[%s241 + $0x5f0] sm:$0xff] %v2484
        %2997 = vst [vmem:[%s241 + $0x5f8] sm:$0xff] %v2485
        %2998 = vst [vmem:[%s241 + $0x600] sm:$0xff] %v2486
        %2999 = vst [vmem:[%s241 + $0x608] sm:$0xff] %v2487
        %3000 = vst [vmem:[%s241 + $0x610] sm:$0xff] %v2488
        %3001 = vst [vmem:[%s241 + $0x618] sm:$0xff] %v2489
        %3002 = vst [vmem:[%s241 + $0x620] sm:$0xff] %v2490
        %3003 = vst [vmem:[%s241 + $0x628] sm:$0xff] %v2491
        %3004 = vst [vmem:[%s241 + $0x630] sm:$0xff] %v2492
        %3005 = vst [vmem:[%s241 + $0x638] sm:$0xff] %v2493
        %3006 = vst [vmem:[%s241 + $0x640] sm:$0xff] %v2494
        %3007 = vst [vmem:[%s241 + $0x648] sm:$0xff] %v2495
        %3008 = vst [vmem:[%s241 + $0x650] sm:$0xff] %v2496
        %3009 = vst [vmem:[%s241 + $0x658] sm:$0xff] %v2497
        %3010 = vst [vmem:[%s241 + $0x660] sm:$0xff] %v2498
        %3011 = vst [vmem:[%s241 + $0x668] sm:$0xff] %v2499
        %3012 = vst [vmem:[%s241 + $0x670] sm:$0xff] %v2500
        %3013 = vst [vmem:[%s241 + $0x678] sm:$0xff] %v2501
        %3014 = vst [vmem:[%s241 + $0x680] sm:$0xff] %v2502
        %3015 = vst [vmem:[%s241 + $0x688] sm:$0xff] %v2503
        %3016 = vst [vmem:[%s241 + $0x690] sm:$0xff] %v2504
        %3017 = vst [vmem:[%s241 + $0x698] sm:$0xff] %v2505
        %3018 = vst [vmem:[%s241 + $0x6a0] sm:$0xff] %v2506
        %3019 = vst [vmem:[%s241 + $0x6a8] sm:$0xff] %v2507
        %3020 = vst [vmem:[%s241 + $0x6b0] sm:$0xff] %v2508
        %3021 = vst [vmem:[%s241 + $0x6b8] sm:$0xff] %v2509
        %3022 = vst [vmem:[%s241 + $0x6c0] sm:$0xff] %v2510
        %3023 = vst [vmem:[%s241 + $0x6c8] sm:$0xff] %v2511
        %3024 = vst [vmem:[%s241 + $0x6d0] sm:$0xff] %v2512
        %3025 = vst [vmem:[%s241 + $0x6d8] sm:$0xff] %v2513
        %3026 = vst [vmem:[%s241 + $0x6e0] sm:$0xff] %v2514
        %3027 = vst [vmem:[%s241 + $0x6e8] sm:$0xff] %v2515
        %3028 = vst [vmem:[%s241 + $0x6f0] sm:$0xff] %v2516
        %3029 = vst [vmem:[%s241 + $0x6f8] sm:$0xff] %v2517
        %3030 = vst [vmem:[%s241 + $0x700] sm:$0xff] %v2518
        %3031 = vst [vmem:[%s241 + $0x708] sm:$0xff] %v2519
        %3032 = vst [vmem:[%s241 + $0x710] sm:$0xff] %v2520
        %3033 = vst [vmem:[%s241 + $0x718] sm:$0xff] %v2521
        %3034 = vst [vmem:[%s241 + $0x720] sm:$0xff] %v2522
        %3035 = vst [vmem:[%s241 + $0x728] sm:$0xff] %v2523
        %3036 = vst [vmem:[%s241 + $0x730] sm:$0xff] %v2524
        %3037 = vst [vmem:[%s241 + $0x738] sm:$0xff] %v2525
        %3038 = vst [vmem:[%s241 + $0x740] sm:$0xff] %v2526
        %3039 = vst [vmem:[%s241 + $0x748] sm:$0xff] %v2527
        %3040 = vst [vmem:[%s241 + $0x750] sm:$0xff] %v2528
        %3041 = vst [vmem:[%s241 + $0x758] sm:$0xff] %v2529
        %3042 = vst [vmem:[%s241 + $0x760] sm:$0xff] %v2530
        %3043 = vst [vmem:[%s241 + $0x768] sm:$0xff] %v2531
        %3044 = vst [vmem:[%s241 + $0x770] sm:$0xff] %v2532
        %3045 = vst [vmem:[%s241 + $0x778] sm:$0xff] %v2533
        %3046 = vst [vmem:[%s241 + $0x780] sm:$0xff] %v2534
        %3047 = vst [vmem:[%s241 + $0x788] sm:$0xff] %v2535
        %3048 = vst [vmem:[%s241 + $0x790] sm:$0xff] %v2536
        %3049 = vst [vmem:[%s241 + $0x798] sm:$0xff] %v2537
        %3050 = vst [vmem:[%s241 + $0x7a0] sm:$0xff] %v2538
        %3051 = vst [vmem:[%s241 + $0x7a8] sm:$0xff] %v2539
        %3052 = vst [vmem:[%s241 + $0x7b0] sm:$0xff] %v2540
        %3053 = vst [vmem:[%s241 + $0x7b8] sm:$0xff] %v2541
        %3054 = vst [vmem:[%s241 + $0x7c0] sm:$0xff] %v2542
        %3055 = vst [vmem:[%s241 + $0x7c8] sm:$0xff] %v2543
        %3056 = vst [vmem:[%s241 + $0x7d0] sm:$0xff] %v2544
        %3057 = vst [vmem:[%s241 + $0x7d8] sm:$0xff] %v2545
        %3058 = vst [vmem:[%s241 + $0x7e0] sm:$0xff] %v2546
        %3059 = vst [vmem:[%s241 + $0x7e8] sm:$0xff] %v2547
        %3060 = vst [vmem:[%s241 + $0x7f0] sm:$0xff] %v2548
        %3061 = vst [vmem:[%s241 + $0x7f8] sm:$0xff] %v2549
        %3062 = vst [vmem:[%s241 + $0x800] sm:$0xff] %v2550
        %3063 = vst [vmem:[%s241 + $0x808] sm:$0xff] %v2551
        %3064 = vst [vmem:[%s241 + $0x810] sm:$0xff] %v2552
        %3065 = vst [vmem:[%s241 + $0x818] sm:$0xff] %v2553
        %3066 = vst [vmem:[%s241 + $0x820] sm:$0xff] %v2554
        %3067 = vst [vmem:[%s241 + $0x828] sm:$0xff] %v2555
        %3068 = vst [vmem:[%s241 + $0x830] sm:$0xff] %v2556
        %3069 = vst [vmem:[%s241 + $0x838] sm:$0xff] %v2557
        %3070 = vst [vmem:[%s241 + $0x840] sm:$0xff] %v2558
        %3071 = vst [vmem:[%s241 + $0x848] sm:$0xff] %v2559
        %3072 = vst [vmem:[%s241 + $0x850] sm:$0xff] %v2560
        %3073 = vst [vmem:[%s241 + $0x858] sm:$0xff] %v2561
        %3074 = vst [vmem:[%s241 + $0x860] sm:$0xff] %v2562
        %3075 = vst [vmem:[%s241 + $0x868] sm:$0xff] %v2563
        %3076 = vst [vmem:[%s241 + $0x870] sm:$0xff] %v2564
        %3077 = vst [vmem:[%s241 + $0x878] sm:$0xff] %v2565
        %3078 = vst [vmem:[%s241 + $0x880] sm:$0xff] %v2566
        %3079 = vst [vmem:[%s241 + $0x888] sm:$0xff] %v2567
        %3080 = vst [vmem:[%s241 + $0x890] sm:$0xff] %v2568
        %3081 = vst [vmem:[%s241 + $0x898] sm:$0xff] %v2569
        %3082 = vst [vmem:[%s241 + $0x8a0] sm:$0xff] %v2570
        %3083 = vst [vmem:[%s241 + $0x8a8] sm:$0xff] %v2571
        %3084 = vst [vmem:[%s241 + $0x8b0] sm:$0xff] %v2572
        %3085 = vst [vmem:[%s241 + $0x8b8] sm:$0xff] %v2573
        %3086 = vst [vmem:[%s241 + $0x8c0] sm:$0xff] %v2574
        %3087 = vst [vmem:[%s241 + $0x8c8] sm:$0xff] %v2575
        %3088 = vst [vmem:[%s241 + $0x8d0] sm:$0xff] %v2576
        %3089 = vst [vmem:[%s241 + $0x8d8] sm:$0xff] %v2577
        %3090 = vst [vmem:[%s241 + $0x8e0] sm:$0xff] %v2578
        %3091 = vst [vmem:[%s241 + $0x8e8] sm:$0xff] %v2579
        %3092 = vst [vmem:[%s241 + $0x8f0] sm:$0xff] %v2580
        %3093 = vst [vmem:[%s241 + $0x8f8] sm:$0xff] %v2581
        %3094 = vst [vmem:[%s241 + $0x900] sm:$0xff] %v2582
        %3095 = vst [vmem:[%s241 + $0x908] sm:$0xff] %v2583
        %3096 = vst [vmem:[%s241 + $0x910] sm:$0xff] %v2584
        %3097 = vst [vmem:[%s241 + $0x918] sm:$0xff] %v2585
        %3098 = vst [vmem:[%s241 + $0x920] sm:$0xff] %v2586
        %3099 = vst [vmem:[%s241 + $0x928] sm:$0xff] %v2587
        %3100 = vst [vmem:[%s241 + $0x930] sm:$0xff] %v2588
        %3101 = vst [vmem:[%s241 + $0x938] sm:$0xff] %v2589
        %3102 = vst [vmem:[%s241 + $0x940] sm:$0xff] %v2590
        %3103 = vst [vmem:[%s241 + $0x948] sm:$0xff] %v2591
        %3104 = vst [vmem:[%s241 + $0x950] sm:$0xff] %v2592
        %3105 = vst [vmem:[%s241 + $0x958] sm:$0xff] %v2593
        %3106 = vst [vmem:[%s241 + $0x960] sm:$0xff] %v2594
        %3107 = vst [vmem:[%s241 + $0x968] sm:$0xff] %v2595
        %3108 = vst [vmem:[%s241 + $0x970] sm:$0xff] %v2596
        %3109 = vst [vmem:[%s241 + $0x978] sm:$0xff] %v2597
        %3110 = vst [vmem:[%s241 + $0x980] sm:$0xff] %v2598
        %3111 = vst [vmem:[%s241 + $0x988] sm:$0xff] %v2599
        %3112 = vst [vmem:[%s241 + $0x990] sm:$0xff] %v2600
        %3113 = vst [vmem:[%s241 + $0x998] sm:$0xff] %v2601
        %3114 = vst [vmem:[%s241 + $0x9a0] sm:$0xff] %v2602
        %3115 = vst [vmem:[%s241 + $0x9a8] sm:$0xff] %v2603
        %3116 = vst [vmem:[%s241 + $0x9b0] sm:$0xff] %v2604
        %3117 = vst [vmem:[%s241 + $0x9b8] sm:$0xff] %v2605
        %3118 = vst [vmem:[%s241 + $0x9c0] sm:$0xff] %v2606
        %3119 = vst [vmem:[%s241 + $0x9c8] sm:$0xff] %v2607
        %3120 = vst [vmem:[%s241 + $0x9d0] sm:$0xff] %v2608
        %3121 = vst [vmem:[%s241 + $0x9d8] sm:$0xff] %v2609
        %3122 = vst [vmem:[%s241 + $0x9e0] sm:$0xff] %v2610
        %3123 = vst [vmem:[%s241 + $0x9e8] sm:$0xff] %v2611
        %3124 = vst [vmem:[%s241 + $0x9f0] sm:$0xff] %v2612
        %3125 = vst [vmem:[%s241 + $0x9f8] sm:$0xff] %v2613
        %3126 = vst [vmem:[%s241 + $0xa00] sm:$0xff] %v2614
        %3127 = vst [vmem:[%s241 + $0xa08] sm:$0xff] %v2615
        %3128 = vst [vmem:[%s241 + $0xa10] sm:$0xff] %v2616
        %3129 = vst [vmem:[%s241 + $0xa18] sm:$0xff] %v2617
        %3130 = vst [vmem:[%s241 + $0xa20] sm:$0xff] %v2618
        %3131 = vst [vmem:[%s241 + $0xa28] sm:$0xff] %v2619
        %3132 = vst [vmem:[%s241 + $0xa30] sm:$0xff] %v2620
        %3133 = vst [vmem:[%s241 + $0xa38] sm:$0xff] %v2621
        %3134 = vst [vmem:[%s241 + $0xa40] sm:$0xff] %v2622
        %3135 = vst [vmem:[%s241 + $0xa48] sm:$0xff] %v2623
        %3136 = vst [vmem:[%s241 + $0xa50] sm:$0xff] %v2624
        %3137 = vst [vmem:[%s241 + $0xa58] sm:$0xff] %v2625
        %3138 = vst [vmem:[%s241 + $0xa60] sm:$0xff] %v2626
        %3139 = vst [vmem:[%s241 + $0xa68] sm:$0xff] %v2627
        %3140 = vst [vmem:[%s241 + $0xa70] sm:$0xff] %v2628
        %3141 = vst [vmem:[%s241 + $0xa78] sm:$0xff] %v2629
        %3142 = vst [vmem:[%s241 + $0xa80] sm:$0xff] %v2630
        %3143 = vst [vmem:[%s241 + $0xa88] sm:$0xff] %v2631
        %3144 = vst [vmem:[%s241 + $0xa90] sm:$0xff] %v2632
        %3145 = vst [vmem:[%s241 + $0xa98] sm:$0xff] %v2633
        %3146 = vst [vmem:[%s241 + $0xaa0] sm:$0xff] %v2634
        %3147 = vst [vmem:[%s241 + $0xaa8] sm:$0xff] %v2635
        %3148 = vst [vmem:[%s241 + $0xab0] sm:$0xff] %v2636
        %3149 = vst [vmem:[%s241 + $0xab8] sm:$0xff] %v2637
        %3150 = vst [vmem:[%s241 + $0xac0] sm:$0xff] %v2638
        %3151 = vst [vmem:[%s241 + $0xac8] sm:$0xff] %v2639
        %3152 = vst [vmem:[%s241 + $0xad0] sm:$0xff] %v2640
        %3153 = vst [vmem:[%s241 + $0xad8] sm:$0xff] %v2641
        %3154 = vst [vmem:[%s241 + $0xae0] sm:$0xff] %v2642
        %3155 = vst [vmem:[%s241 + $0xae8] sm:$0xff] %v2643
        %3156 = vst [vmem:[%s241 + $0xaf0] sm:$0xff] %v2644
        %3157 = vst [vmem:[%s241 + $0xaf8] sm:$0xff] %v2645
        %3158 = vst [vmem:[%s241 + $0xb00] sm:$0xff] %v2646
        %3159 = vst [vmem:[%s241 + $0xb08] sm:$0xff] %v2647
        %3160 = vst [vmem:[%s241 + $0xb10] sm:$0xff] %v2648
        %3161 = vst [vmem:[%s241 + $0xb18] sm:$0xff] %v2649
        %3162 = vst [vmem:[%s241 + $0xb20] sm:$0xff] %v2650
        %3163 = vst [vmem:[%s241 + $0xb28] sm:$0xff] %v2651
        %3164 = vst [vmem:[%s241 + $0xb30] sm:$0xff] %v2652
        %3165 = vst [vmem:[%s241 + $0xb38] sm:$0xff] %v2653
        %3166 = vst [vmem:[%s241 + $0xb40] sm:$0xff] %v2654
        %3167 = vst [vmem:[%s241 + $0xb48] sm:$0xff] %v2655
        %3168 = vst [vmem:[%s241 + $0xb50] sm:$0xff] %v2656
        %3169 = vst [vmem:[%s241 + $0xb58] sm:$0xff] %v2657
        %3170 = vst [vmem:[%s241 + $0xb60] sm:$0xff] %v2658
        %3171 = vst [vmem:[%s241 + $0xb68] sm:$0xff] %v2659
        %3172 = vst [vmem:[%s241 + $0xb70] sm:$0xff] %v2660
        %3173 = vst [vmem:[%s241 + $0xb78] sm:$0xff] %v2661
        %3174 = vst [vmem:[%s241 + $0xb80] sm:$0xff] %v2662
        %3175 = vst [vmem:[%s241 + $0xb88] sm:$0xff] %v2663
        %3176 = vst [vmem:[%s241 + $0xb90] sm:$0xff] %v2664
        %3177 = vst [vmem:[%s241 + $0xb98] sm:$0xff] %v2665
        %3178 = vst [vmem:[%s241 + $0xba0] sm:$0xff] %v2666
        %3179 = vst [vmem:[%s241 + $0xba8] sm:$0xff] %v2667
        %3180 = vst [vmem:[%s241 + $0xbb0] sm:$0xff] %v2668
        %3181 = vst [vmem:[%s241 + $0xbb8] sm:$0xff] %v2669
        %3182 = vst [vmem:[%s241 + $0xbc0] sm:$0xff] %v2670
        %3183 = vst [vmem:[%s241 + $0xbc8] sm:$0xff] %v2671
        %3184 = vst [vmem:[%s241 + $0xbd0] sm:$0xff] %v2672
        %3185 = vst [vmem:[%s241 + $0xbd8] sm:$0xff] %v2673
        %3186 = vst [vmem:[%s241 + $0xbe0] sm:$0xff] %v2674
        %3187 = vst [vmem:[%s241 + $0xbe8] sm:$0xff] %v2675
        %3188 = vst [vmem:[%s241 + $0xbf0] sm:$0xff] %v2676
        %3189 = vst [vmem:[%s241 + $0xbf8] sm:$0xff] %v2677
        %3190 = vst [vmem:[%s241 + $0xc00] sm:$0xff] %v2678
        %3191 = vst [vmem:[%s241 + $0xc08] sm:$0xff] %v2679
        %3192 = vst [vmem:[%s241 + $0xc10] sm:$0xff] %v2680
        %3193 = vst [vmem:[%s241 + $0xc18] sm:$0xff] %v2681
        %3194 = vst [vmem:[%s241 + $0xc20] sm:$0xff] %v2682
        %3195 = vst [vmem:[%s241 + $0xc28] sm:$0xff] %v2683
        %3196 = vst [vmem:[%s241 + $0xc30] sm:$0xff] %v2684
        %3197 = vst [vmem:[%s241 + $0xc38] sm:$0xff] %v2685
        %3198 = vst [vmem:[%s241 + $0xc40] sm:$0xff] %v2686
        %3199 = vst [vmem:[%s241 + $0xc48] sm:$0xff] %v2687
        %3200 = vst [vmem:[%s241 + $0xc50] sm:$0xff] %v2688
        %3201 = vst [vmem:[%s241 + $0xc58] sm:$0xff] %v2689
        %3202 = vst [vmem:[%s241 + $0xc60] sm:$0xff] %v2690
        %3203 = vst [vmem:[%s241 + $0xc68] sm:$0xff] %v2691
        %3204 = vst [vmem:[%s241 + $0xc70] sm:$0xff] %v2692
        %3205 = vst [vmem:[%s241 + $0xc78] sm:$0xff] %v2693
        %3206 = vst [vmem:[%s241 + $0xc80] sm:$0xff] %v2694
        %3207 = vst [vmem:[%s241 + $0xc88] sm:$0xff] %v2695
        %3208 = vst [vmem:[%s241 + $0xc90] sm:$0xff] %v2696
        %3209 = vst [vmem:[%s241 + $0xc98] sm:$0xff] %v2697
        %3210 = vst [vmem:[%s241 + $0xca0] sm:$0xff] %v2698
        %3211 = vst [vmem:[%s241 + $0xca8] sm:$0xff] %v2699
        %3212 = vst [vmem:[%s241 + $0xcb0] sm:$0xff] %v2700
        %3213 = vst [vmem:[%s241 + $0xcb8] sm:$0xff] %v2701
        %3214 = vst [vmem:[%s241 + $0xcc0] sm:$0xff] %v2702
        %3215 = vst [vmem:[%s241 + $0xcc8] sm:$0xff] %v2703
        %3216 = vst [vmem:[%s241 + $0xcd0] sm:$0xff] %v2704
        %3217 = vst [vmem:[%s241 + $0xcd8] sm:$0xff] %v2705
        %3218 = vst [vmem:[%s241 + $0xce0] sm:$0xff] %v2706
        %3219 = vst [vmem:[%s241 + $0xce8] sm:$0xff] %v2707
        %3220 = vst [vmem:[%s241 + $0xcf0] sm:$0xff] %v2708
        %3221 = vst [vmem:[%s241 + $0xcf8] sm:$0xff] %v2709
        %3222 = vst [vmem:[%s241 + $0xd00] sm:$0xff] %v2710
        %3223 = vst [vmem:[%s241 + $0xd08] sm:$0xff] %v2711
        %3224 = vst [vmem:[%s241 + $0xd10] sm:$0xff] %v2712
        %3225 = vst [vmem:[%s241 + $0xd18] sm:$0xff] %v2713
        %3226 = vst [vmem:[%s241 + $0xd20] sm:$0xff] %v2714
        %3227 = vst [vmem:[%s241 + $0xd28] sm:$0xff] %v2715
        %3228 = vst [vmem:[%s241 + $0xd30] sm:$0xff] %v2716
        %3229 = vst [vmem:[%s241 + $0xd38] sm:$0xff] %v2717
        %3230 = vst [vmem:[%s241 + $0xd40] sm:$0xff] %v2718
        %3231 = vst [vmem:[%s241 + $0xd48] sm:$0xff] %v2719
        %3232 = vst [vmem:[%s241 + $0xd50] sm:$0xff] %v2720
        %3233 = vst [vmem:[%s241 + $0xd58] sm:$0xff] %v2721
        %3234 = vst [vmem:[%s241 + $0xd60] sm:$0xff] %v2722
        %3235 = vst [vmem:[%s241 + $0xd68] sm:$0xff] %v2723
        %3236 = vst [vmem:[%s241 + $0xd70] sm:$0xff] %v2724
        %3237 = vst [vmem:[%s241 + $0xd78] sm:$0xff] %v2725
        %3238 = vst [vmem:[%s241 + $0xd80] sm:$0xff] %v2726
        %3239 = vst [vmem:[%s241 + $0xd88] sm:$0xff] %v2727
        %3240 = vst [vmem:[%s241 + $0xd90] sm:$0xff] %v2728
        %3241 = vst [vmem:[%s241 + $0xd98] sm:$0xff] %v2729
        %3242 = vst [vmem:[%s241 + $0xda0] sm:$0xff] %v2730
        %3243 = vst [vmem:[%s241 + $0xda8] sm:$0xff] %v2731
        %3244 = vst [vmem:[%s241 + $0xdb0] sm:$0xff] %v2732
        %3245 = vst [vmem:[%s241 + $0xdb8] sm:$0xff] %v2733
        %3246 = vst [vmem:[%s241 + $0xdc0] sm:$0xff] %v2734
        %3247 = vst [vmem:[%s241 + $0xdc8] sm:$0xff] %v2735
        %3248 = vst [vmem:[%s241 + $0xdd0] sm:$0xff] %v2736
        %3249 = vst [vmem:[%s241 + $0xdd8] sm:$0xff] %v2737
        %3250 = vst [vmem:[%s241 + $0xde0] sm:$0xff] %v2738
        %3251 = vst [vmem:[%s241 + $0xde8] sm:$0xff] %v2739
        %3252 = vst [vmem:[%s241 + $0xdf0] sm:$0xff] %v2740
        %3253 = vst [vmem:[%s241 + $0xdf8] sm:$0xff] %v2741
        %3254 = vst [vmem:[%s241 + $0xe00] sm:$0xff] %v2742
        %3255 = vst [vmem:[%s241 + $0xe08] sm:$0xff] %v2743
        %3256 = vst [vmem:[%s241 + $0xe10] sm:$0xff] %v2744
        %3257 = vst [vmem:[%s241 + $0xe18] sm:$0xff] %v2745
        %3258 = vst [vmem:[%s241 + $0xe20] sm:$0xff] %v2746
        %3259 = vst [vmem:[%s241 + $0xe28] sm:$0xff] %v2747
        %3260 = vst [vmem:[%s241 + $0xe30] sm:$0xff] %v2748
        %3261 = vst [vmem:[%s241 + $0xe38] sm:$0xff] %v2749
        %3262 = vst [vmem:[%s241 + $0xe40] sm:$0xff] %v2750
        %3263 = vst [vmem:[%s241 + $0xe48] sm:$0xff] %v2751
        %3264 = vst [vmem:[%s241 + $0xe50] sm:$0xff] %v2752
        %3265 = vst [vmem:[%s241 + $0xe58] sm:$0xff] %v2753
        %3266 = vst [vmem:[%s241 + $0xe60] sm:$0xff] %v2754
        %3267 = vst [vmem:[%s241 + $0xe68] sm:$0xff] %v2755
        %3268 = vst [vmem:[%s241 + $0xe70] sm:$0xff] %v2756
        %3269 = vst [vmem:[%s241 + $0xe78] sm:$0xff] %v2757
        %3270 = vst [vmem:[%s241 + $0xe80] sm:$0xff] %v2758
        %3271 = vst [vmem:[%s241 + $0xe88] sm:$0xff] %v2759
        %3272 = vst [vmem:[%s241 + $0xe90] sm:$0xff] %v2760
        %3273 = vst [vmem:[%s241 + $0xe98] sm:$0xff] %v2761
        %3274 = vst [vmem:[%s241 + $0xea0] sm:$0xff] %v2762
        %3275 = vst [vmem:[%s241 + $0xea8] sm:$0xff] %v2763
        %3276 = vst [vmem:[%s241 + $0xeb0] sm:$0xff] %v2764
        %3277 = vst [vmem:[%s241 + $0xeb8] sm:$0xff] %v2765
        %3278 = vst [vmem:[%s241 + $0xec0] sm:$0xff] %v2766
        %3279 = vst [vmem:[%s241 + $0xec8] sm:$0xff] %v2767
        %3280 = vst [vmem:[%s241 + $0xed0] sm:$0xff] %v2768
        %3281 = vst [vmem:[%s241 + $0xed8] sm:$0xff] %v2769
        %3282 = vst [vmem:[%s241 + $0xee0] sm:$0xff] %v2770
        %3283 = vst [vmem:[%s241 + $0xee8] sm:$0xff] %v2771
        %3284 = vst [vmem:[%s241 + $0xef0] sm:$0xff] %v2772
        %3285 = vst [vmem:[%s241 + $0xef8] sm:$0xff] %v2773
        %3286 = vst [vmem:[%s241 + $0xf00] sm:$0xff] %v2774
        %3287 = vst [vmem:[%s241 + $0xf08] sm:$0xff] %v2775
        %3288 = vst [vmem:[%s241 + $0xf10] sm:$0xff] %v2776
        %3289 = vst [vmem:[%s241 + $0xf18] sm:$0xff] %v2777
        %3290 = vst [vmem:[%s241 + $0xf20] sm:$0xff] %v2778
        %3291 = vst [vmem:[%s241 + $0xf28] sm:$0xff] %v2779
        %3292 = vst [vmem:[%s241 + $0xf30] sm:$0xff] %v2780
        %3293 = vst [vmem:[%s241 + $0xf38] sm:$0xff] %v2781
        %3294 = vst [vmem:[%s241 + $0xf40] sm:$0xff] %v2782
        %3295 = vst [vmem:[%s241 + $0xf48] sm:$0xff] %v2783
        %3296 = vst [vmem:[%s241 + $0xf50] sm:$0xff] %v2784
        %3297 = vst [vmem:[%s241 + $0xf58] sm:$0xff] %v2785
        %3298 = vst [vmem:[%s241 + $0xf60] sm:$0xff] %v2786
        %3299 = vst [vmem:[%s241 + $0xf68] sm:$0xff] %v2787
        %3300 = vst [vmem:[%s241 + $0xf70] sm:$0xff] %v2788
        %3301 = vst [vmem:[%s241 + $0xf78] sm:$0xff] %v2789
        %3302 = vst [vmem:[%s241 + $0xf80] sm:$0xff] %v2790
        %3303 = vst [vmem:[%s241 + $0xf88] sm:$0xff] %v2791
        %3304 = vst [vmem:[%s241 + $0xf90] sm:$0xff] %v2792
        %3305 = vst [vmem:[%s241 + $0xf98] sm:$0xff] %v2793
        %3306 = vst [vmem:[%s241 + $0xfa0] sm:$0xff] %v2794
        %3307 = vst [vmem:[%s241 + $0xfa8] sm:$0xff] %v2795
        %3308 = vst [vmem:[%s241 + $0xfb0] sm:$0xff] %v2796
        %3309 = vst [vmem:[%s241 + $0xfb8] sm:$0xff] %v2797
        %3310 = vst [vmem:[%s241 + $0xfc0] sm:$0xff] %v2798
        %3311 = vst [vmem:[%s241 + $0xfc8] sm:$0xff] %v2799
        %3312 = vst [vmem:[%s241 + $0xfd0] sm:$0xff] %v2800
        %3313 = vst [vmem:[%s241 + $0xfd8] sm:$0xff] %v2801
        %3314 = vst [vmem:[%s241 + $0xfe0] sm:$0xff] %v2802
        %3315 = vst [vmem:[%s241 + $0xfe8] sm:$0xff] %v2803
        %3316 = vst [vmem:[%s241 + $0xff0] sm:$0xff] %v2804
        %3317 = vst [vmem:[%s241 + $0xff8] sm:$0xff] %v2805
        %s3318 = sand.u32 %s87, 1
        %s3319 = scalar_lea.sflag [#allocation4], %s3318
        %s3320 = sand.u32 %s87, 1
        %s3321 = smul.addr %s3320, 4096
        %s3322 = scalar_lea.vmem [#allocation7], %s3321
        %s3323 = sand.u32 %s113, 1
        %s3324 = scalar_lea.sflag [#allocation9], %s3323
        %s3325 = sand.u32 %s113, 1
        %s3326 = smul.addr %s3325, 4096
        %s3327 = scalar_lea.vmem [#allocation8], %s3326
        // Predicated region
        $region37: #{tpu_custom_call.1} parent=27 // pred_check
          %p3328 = pneg %p97
        $region38: #{tpu_custom_call.1} parent=27 // pred_check_branch
          %3330 = sbr.rel (%p3328) target = $region40
        $region39: #{tpu_custom_call.1} parent=27 // pred_region
          %s3331 = smul.u32 64, %s27
          %s3333 = ssub.s32 65536, 65536
          %3334 = vsyncadd %s3319, %s3333
          %s3335 = smul.addr %s3331, 8
          %s3336 = smul.addr %s3335, 128
          %s3337 = scalar_lea.hbm %s2, %s3336
          %s3338 = sshll.u32 %s3322, 4
          %s3339 = int_to_ptr.vmem [resolvable:$true] %s3338
          %3344 = dma.vmem_to_hbm [thread:$0]  %s3339, 65536, %s3337, %s3319, 1024, 1024, 64
        $region40: #{tpu_custom_call.1} parent=27 // pred_fallthru
          _
        // Predicated region
        $region41: #{tpu_custom_call.1} parent=27 // pred_check
          %p3345 = pneg %p123
        $region42: #{tpu_custom_call.1} parent=27 // pred_check_branch
          %3347 = sbr.rel (%p3345) target = $region44
        $region43: #{tpu_custom_call.1} parent=27 // pred_region
          %s3348 = smul.u32 64, %s27
          %s3350 = ssub.s32 65536, 65536
          %3351 = vsyncadd %s3324, %s3350
          %s3352 = smul.addr %s3348, 8
          %s3353 = smul.addr %s3352, 128
          %s3354 = scalar_lea.hbm %s3, %s3353
          %s3355 = sshll.u32 %s3327, 4
          %s3356 = int_to_ptr.vmem [resolvable:$true] %s3355
          %3361 = dma.vmem_to_hbm [thread:$0]  %s3356, 65536, %s3354, %s3324, 1024, 1024, 64
        $region44: #{tpu_custom_call.1} parent=27 // pred_fallthru
          _
      $region28: #{tpu_custom_call.1} parent=5 // pred_fallthru
        _
      %p3362 = scmp.le.s32.totalorder 2, %s22
      // Predicated region
      $region45: #{tpu_custom_call.1} parent=5 // pred_check
        %p3363 = pneg %p3362
      $region46: #{tpu_custom_call.1} parent=5 // pred_check_branch
        %3365 = sbr.rel (%p3363) target = $region48
      $region47: #{tpu_custom_call.1} parent=5 // pred_region
        %s3366 = ssub.s32 %s22, 2
        // Predicated region
        $region49: #{tpu_custom_call.1} parent=47 // pred_check
          %p3367 = pneg %p103
        $region50: #{tpu_custom_call.1} parent=47 // pred_check_branch
          %3369 = sbr.rel (%p3367) target = $region52
        $region51: #{tpu_custom_call.1} parent=47 // pred_region
          %s3370 = sand.u32 %s88, 1
          %s3371 = scalar_lea.sflag [#allocation4], %s3370
          %s3372 = sand.u32 %s88, 1
          %s3373 = smul.addr %s3372, 4096
          %s3374 = scalar_lea.vmem [#allocation7], %s3373
          %3375 = dma.done %s3371, 65536
        $region52: #{tpu_custom_call.1} parent=47 // pred_fallthru
          _
        // Predicated region
        $region53: #{tpu_custom_call.1} parent=47 // pred_check
          %p3376 = pneg %p129
        $region54: #{tpu_custom_call.1} parent=47 // pred_check_branch
          %3378 = sbr.rel (%p3376) target = $region56
        $region55: #{tpu_custom_call.1} parent=47 // pred_region
          %s3379 = sand.u32 %s114, 1
          %s3380 = scalar_lea.sflag [#allocation9], %s3379
          %s3381 = sand.u32 %s114, 1
          %s3382 = smul.addr %s3381, 4096
          %s3383 = scalar_lea.vmem [#allocation8], %s3382
          %3384 = dma.done %s3380, 65536
        $region56: #{tpu_custom_call.1} parent=47 // pred_fallthru
          _
      $region48: #{tpu_custom_call.1} parent=5 // pred_fallthru
        _
    $region6: #{tpu_custom_call.1} parent=1 // loop_footer
      %s26 = sadd.s32 1, %s22
    $region7: #{tpu_custom_call.1} parent=1 // loop_footer_branch
      %21 = sbr.rel target = $region3
    $region8: #{tpu_custom_call.1} parent=1 // loop_exit
      _
    %3385 = vsyncpa [#allocation3], 1
    %s3386 = scalar_lea.sflag [#allocation3], 1
    %3387 = vsyncpa %s3386, 1
    %3388 = vsyncpa [#allocation6], 1
    %s3389 = scalar_lea.sflag [#allocation6], 1
    %3390 = vsyncpa %s3389, 1
    %3391 = vsyncpa [#allocation4], 1
    %s3392 = scalar_lea.sflag [#allocation4], 1
    %3393 = vsyncpa %s3392, 1
    %3394 = vsyncpa [#allocation9], 1
    %s3395 = scalar_lea.sflag [#allocation9], 1
    %3396 = vsyncpa %s3395, 1

</llo_original>
